<compile_context>
chip_gen: v6e
topology: v6e:2x2x1
jax: 0.10.0
libtpu: 0.0.40
codegen_flags: <defaults>
</compile_context>

<pallas_src>
import functools

import jax
import jax.numpy as jnp
from jax import lax
from jax.experimental import pallas as pl
from jax.experimental.pallas import tpu as pltpu

C_IN, C_OUT, K, STRIDE, OUT_PAD = 2, 14, 3, 2, 1


def convt_tanh_kernel(x_ref, w_ref, b_ref, o_ref, *, h, w_in, ho, wo, hp, wp):
    """tanh(conv_transpose2d(x)) for one batch element, fully in-kernel.

    x_ref : (1, C_IN, h, w_in)   VMEM  raw input block
    w_ref : (C_IN*C_OUT*K*K,)    SMEM  raw PyTorch-layout ConvTranspose2d weight
    b_ref : (C_OUT,)             SMEM  bias
    o_ref : (1, C_OUT, ho, wo)   VMEM  final NCHW output block
    """
    f32 = jnp.float32

    # --- zero-dilation + padding as two tiny 0/1 selection matmuls (MXU) ------
    # xd[c] (hp, wp) holds x[c, i, j] at (K-1 + 2i, K-1 + 2j); zeros elsewhere.
    r = lax.broadcasted_iota(jnp.int32, (hp, h), 0)
    i = lax.broadcasted_iota(jnp.int32, (hp, h), 1)
    row_sel = (r == (K - 1) + STRIDE * i).astype(f32)            # (hp, h)
    j = lax.broadcasted_iota(jnp.int32, (w_in, wp), 0)
    s = lax.broadcasted_iota(jnp.int32, (w_in, wp), 1)
    col_sel = (s == (K - 1) + STRIDE * j).astype(f32)            # (w_in, wp)

    xd = []
    for c in range(C_IN):
        xc = x_ref[0, c]                                         # (h, w_in)
        xd.append(
            jnp.dot(row_sel,
                    jnp.dot(xc, col_sel, preferred_element_type=f32),
                    preferred_element_type=f32))                 # (hp, wp)

    # --- channel mixing + bias + tanh ----------------------------------------
    # y[o, oy, ox] = sum_{c,di,dj} xd[c, oy+di, ox+dj] * w[c, o, K-1-di, K-1-dj]
    # (transposed conv == correlation of the dilated input with the flipped
    #  kernel); bias is folded into the accumulator init.
    accs = [jnp.full((ho, wo), b_ref[o], dtype=f32) for o in range(C_OUT)]
    for c in range(C_IN):
        for di in range(K):
            rband = xd[c][di:di + ho, :]                         # (ho, wp)
            for dj in range(K):
                band = rband[:, dj:dj + wo]                      # (ho, wo)
                for o in range(C_OUT):
                    widx = ((c * C_OUT + o) * K + (K - 1 - di)) * K + (K - 1 - dj)
                    accs[o] = accs[o] + w_ref[widx] * band
    for o in range(C_OUT):
        o_ref[0, o] = jnp.tanh(accs[o])


@jax.jit
def conv_transpose_tanh(x, w, b):
    """x: (N, C_IN, H, W) f32; w: (C_IN, C_OUT, K, K) (PyTorch ConvTranspose2d
    layout); b: (C_OUT,).  Returns tanh(conv_transpose2d(x; stride=2,
    output_padding=(1,1))) in NCHW."""
    n, c_in, h, w_in = x.shape
    ho = (h - 1) * STRIDE + K + OUT_PAD
    wo = (w_in - 1) * STRIDE + K + OUT_PAD
    hp = ho + K - 1            # dilated + padded height (covers rows oy + di)
    wp = wo + K - 1            # dilated + padded width

    kernel = functools.partial(convt_tanh_kernel, h=h, w_in=w_in,
                               ho=ho, wo=wo, hp=hp, wp=wp)
    return pl.pallas_call(
        kernel,
        out_shape=jax.ShapeDtypeStruct((n, C_OUT, ho, wo), jnp.float32),
        grid=(n,),
        in_specs=[
            pl.BlockSpec((1, c_in, h, w_in), lambda i: (i, 0, 0, 0)),
            pl.BlockSpec(memory_space=pltpu.MemorySpace.SMEM),
            pl.BlockSpec(memory_space=pltpu.MemorySpace.SMEM),
        ],
        out_specs=pl.BlockSpec((1, C_OUT, ho, wo), lambda i: (i, 0, 0, 0)),
        compiler_params=pltpu.CompilerParams(
            dimension_semantics=("parallel",)),
    )(x, w.reshape(-1).astype(jnp.float32), b.astype(jnp.float32))


def _reference(x, w, b):
    # transposed conv via lhs-dilated regular conv (sanity check only)
    w_f = jnp.flip(jnp.transpose(w, (1, 0, 2, 3)), axis=(2, 3))  # OIHW, flipped
    y = lax.conv_general_dilated(
        x, w_f, window_strides=(1, 1),
        padding=[(K - 1, K - 1 + OUT_PAD), (K - 1, K - 1 + OUT_PAD)],
        lhs_dilation=(STRIDE, STRIDE),
        dimension_numbers=("NCHW", "OIHW", "NCHW"),
    )
    return jnp.tanh(y + b.reshape(1, C_OUT, 1, 1))


if __name__ == "__main__":
    key = jax.random.PRNGKey(0)
    kx, kw, kb = jax.random.split(key, 3)

    # input matching the module: x1 = torch.randn(1, 2, 11, 11)
    x1 = jax.random.normal(kx, (1, C_IN, 11, 11), dtype=jnp.float32)

    # deterministic ConvTranspose2d parameters (PyTorch weight layout I,O,K,K)
    w = 0.1 * jax.random.normal(kw, (C_IN, C_OUT, K, K), dtype=jnp.float32)
    b = 0.1 * jax.random.normal(kb, (C_OUT,), dtype=jnp.float32)

    out = jax.block_until_ready(conv_transpose_tanh(x1, w, b))
    ref = jax.block_until_ready(_reference(x1, w, b))

    assert out.shape == (1, C_OUT, 24, 24), out.shape
    assert jnp.allclose(out, ref, atol=1e-5, rtol=1e-5), "mismatch vs reference"

    print("KERNEL_OK")
</pallas_src>

<mosaic_0001>
module attributes {stable_mosaic.version = 11 : i64} {
  func.func @convt_tanh_kernel(%arg0: i32, %arg1: memref<1x2x11x11xf32, #tpu.memory_space<vmem>>, %arg2: memref<252xf32, #tpu.memory_space<smem>>, %arg3: memref<14xf32, #tpu.memory_space<smem>>, %arg4: memref<1x14x24x24xf32, #tpu.memory_space<vmem>>) attributes {dimension_semantics = [#tpu.dimension_semantics<parallel>], iteration_bounds = array<i64: 1>, scalar_prefetch = 0 : i64, scratch_operands = 0 : i64, tpu.core_type = #tpu.core_type<tc>, window_params = [{transform_indices = @transform_0, window_bounds = array<i64: 1, 2, 11, 11>}, {transform_indices = @transform_1, window_bounds = array<i64: 252>}, {transform_indices = @transform_2, window_bounds = array<i64: 14>}, {transform_indices = @transform_3, window_bounds = array<i64: 1, 14, 24, 24>}]} {
    %0 = tpu.iota {dimensions = array<i32: 0>} : vector<26x11xi32>
    %1 = tpu.iota {dimensions = array<i32: 1>} : vector<26x11xi32>
    %c2_i32 = arith.constant 2 : i32
    %2 = vector.broadcast %c2_i32 : i32 to vector<26x11xi32>
    %3 = arith.muli %2, %1 : vector<26x11xi32>
    %c2_i32_0 = arith.constant 2 : i32
    %4 = vector.broadcast %c2_i32_0 : i32 to vector<26x11xi32>
    %5 = arith.addi %4, %3 : vector<26x11xi32>
    %6 = arith.cmpi eq, %0, %5 : vector<26x11xi32>
    %7 = arith.extui %6 : vector<26x11xi1> to vector<26x11xi32>
    %8 = arith.sitofp %7 : vector<26x11xi32> to vector<26x11xf32>
    %9 = tpu.iota {dimensions = array<i32: 0>} : vector<11x26xi32>
    %10 = tpu.iota {dimensions = array<i32: 1>} : vector<11x26xi32>
    %c2_i32_1 = arith.constant 2 : i32
    %11 = vector.broadcast %c2_i32_1 : i32 to vector<11x26xi32>
    %12 = arith.muli %11, %9 : vector<11x26xi32>
    %c2_i32_2 = arith.constant 2 : i32
    %13 = vector.broadcast %c2_i32_2 : i32 to vector<11x26xi32>
    %14 = arith.addi %13, %12 : vector<11x26xi32>
    %15 = arith.cmpi eq, %10, %14 : vector<11x26xi32>
    %16 = arith.extui %15 : vector<11x26xi1> to vector<11x26xi32>
    %17 = arith.sitofp %16 : vector<11x26xi32> to vector<11x26xf32>
    %c0 = arith.constant 0 : index
    %c0_3 = arith.constant 0 : index
    %c0_4 = arith.constant 0 : index
    %c0_5 = arith.constant 0 : index
    %18 = vector.load %arg1[%c0, %c0_3, %c0_4, %c0_5] : memref<1x2x11x11xf32, #tpu.memory_space<vmem>>, vector<1x1x11x11xf32>
    %19 = vector.shape_cast %18 : vector<1x1x11x11xf32> to vector<11x11xf32>
    %cst = arith.constant dense<0.000000e+00> : vector<11x26xf32>
    %20 = tpu.matmul %19, %17, %cst {dimension_numbers = #tpu.dot_dimension_numbers<[1], [0], [0], [1], [0, 0, 1, 1], [], []>} : vector<11x11xf32>, vector<11x26xf32>, vector<11x26xf32> -> vector<11x26xf32>
    %cst_6 = arith.constant dense<0.000000e+00> : vector<26x26xf32>
    %21 = tpu.matmul %8, %20, %cst_6 {dimension_numbers = #tpu.dot_dimension_numbers<[1], [0], [0], [1], [0, 0, 1, 1], [], []>} : vector<26x11xf32>, vector<11x26xf32>, vector<26x26xf32> -> vector<26x26xf32>
    %c0_7 = arith.constant 0 : index
    %c1 = arith.constant 1 : index
    %c0_8 = arith.constant 0 : index
    %c0_9 = arith.constant 0 : index
    %22 = vector.load %arg1[%c0_7, %c1, %c0_8, %c0_9] : memref<1x2x11x11xf32, #tpu.memory_space<vmem>>, vector<1x1x11x11xf32>
    %23 = vector.shape_cast %22 : vector<1x1x11x11xf32> to vector<11x11xf32>
    %cst_10 = arith.constant dense<0.000000e+00> : vector<11x26xf32>
    %24 = tpu.matmul %23, %17, %cst_10 {dimension_numbers = #tpu.dot_dimension_numbers<[1], [0], [0], [1], [0, 0, 1, 1], [], []>} : vector<11x11xf32>, vector<11x26xf32>, vector<11x26xf32> -> vector<11x26xf32>
    %cst_11 = arith.constant dense<0.000000e+00> : vector<26x26xf32>
    %25 = tpu.matmul %8, %24, %cst_11 {dimension_numbers = #tpu.dot_dimension_numbers<[1], [0], [0], [1], [0, 0, 1, 1], [], []>} : vector<26x11xf32>, vector<11x26xf32>, vector<26x26xf32> -> vector<26x26xf32>
    %c0_12 = arith.constant 0 : index
    %26 = memref.load %arg3[%c0_12] : memref<14xf32, #tpu.memory_space<smem>>
    %27 = vector.broadcast %26 : f32 to vector<24x24xf32>
    %c1_13 = arith.constant 1 : index
    %28 = memref.load %arg3[%c1_13] : memref<14xf32, #tpu.memory_space<smem>>
    %29 = vector.broadcast %28 : f32 to vector<24x24xf32>
    %c2 = arith.constant 2 : index
    %30 = memref.load %arg3[%c2] : memref<14xf32, #tpu.memory_space<smem>>
    %31 = vector.broadcast %30 : f32 to vector<24x24xf32>
    %c3 = arith.constant 3 : index
    %32 = memref.load %arg3[%c3] : memref<14xf32, #tpu.memory_space<smem>>
    %33 = vector.broadcast %32 : f32 to vector<24x24xf32>
    %c4 = arith.constant 4 : index
    %34 = memref.load %arg3[%c4] : memref<14xf32, #tpu.memory_space<smem>>
    %35 = vector.broadcast %34 : f32 to vector<24x24xf32>
    %c5 = arith.constant 5 : index
    %36 = memref.load %arg3[%c5] : memref<14xf32, #tpu.memory_space<smem>>
    %37 = vector.broadcast %36 : f32 to vector<24x24xf32>
    %c6 = arith.constant 6 : index
    %38 = memref.load %arg3[%c6] : memref<14xf32, #tpu.memory_space<smem>>
    %39 = vector.broadcast %38 : f32 to vector<24x24xf32>
    %c7 = arith.constant 7 : index
    %40 = memref.load %arg3[%c7] : memref<14xf32, #tpu.memory_space<smem>>
    %41 = vector.broadcast %40 : f32 to vector<24x24xf32>
    %c8 = arith.constant 8 : index
    %42 = memref.load %arg3[%c8] : memref<14xf32, #tpu.memory_space<smem>>
    %43 = vector.broadcast %42 : f32 to vector<24x24xf32>
    %c9 = arith.constant 9 : index
    %44 = memref.load %arg3[%c9] : memref<14xf32, #tpu.memory_space<smem>>
    %45 = vector.broadcast %44 : f32 to vector<24x24xf32>
    %c10 = arith.constant 10 : index
    %46 = memref.load %arg3[%c10] : memref<14xf32, #tpu.memory_space<smem>>
    %47 = vector.broadcast %46 : f32 to vector<24x24xf32>
    %c11 = arith.constant 11 : index
    %48 = memref.load %arg3[%c11] : memref<14xf32, #tpu.memory_space<smem>>
    %49 = vector.broadcast %48 : f32 to vector<24x24xf32>
    %c12 = arith.constant 12 : index
    %50 = memref.load %arg3[%c12] : memref<14xf32, #tpu.memory_space<smem>>
    %51 = vector.broadcast %50 : f32 to vector<24x24xf32>
    %c13 = arith.constant 13 : index
    %52 = memref.load %arg3[%c13] : memref<14xf32, #tpu.memory_space<smem>>
    %53 = vector.broadcast %52 : f32 to vector<24x24xf32>
    %54 = vector.extract_strided_slice %21 {offsets = [0, 0], sizes = [24, 26], strides = [1, 1]} : vector<26x26xf32> to vector<24x26xf32>
    %55 = vector.extract_strided_slice %54 {offsets = [0, 0], sizes = [24, 24], strides = [1, 1]} : vector<24x26xf32> to vector<24x24xf32>
    %c8_14 = arith.constant 8 : index
    %56 = memref.load %arg2[%c8_14] : memref<252xf32, #tpu.memory_space<smem>>
    %57 = vector.broadcast %56 : f32 to vector<24x24xf32>
    %58 = arith.mulf %57, %55 : vector<24x24xf32>
    %59 = arith.addf %27, %58 : vector<24x24xf32>
    %c17 = arith.constant 17 : index
    %60 = memref.load %arg2[%c17] : memref<252xf32, #tpu.memory_space<smem>>
    %61 = vector.broadcast %60 : f32 to vector<24x24xf32>
    %62 = arith.mulf %61, %55 : vector<24x24xf32>
    %63 = arith.addf %29, %62 : vector<24x24xf32>
    %c26 = arith.constant 26 : index
    %64 = memref.load %arg2[%c26] : memref<252xf32, #tpu.memory_space<smem>>
    %65 = vector.broadcast %64 : f32 to vector<24x24xf32>
    %66 = arith.mulf %65, %55 : vector<24x24xf32>
    %67 = arith.addf %31, %66 : vector<24x24xf32>
    %c35 = arith.constant 35 : index
    %68 = memref.load %arg2[%c35] : memref<252xf32, #tpu.memory_space<smem>>
    %69 = vector.broadcast %68 : f32 to vector<24x24xf32>
    %70 = arith.mulf %69, %55 : vector<24x24xf32>
    %71 = arith.addf %33, %70 : vector<24x24xf32>
    %c44 = arith.constant 44 : index
    %72 = memref.load %arg2[%c44] : memref<252xf32, #tpu.memory_space<smem>>
    %73 = vector.broadcast %72 : f32 to vector<24x24xf32>
    %74 = arith.mulf %73, %55 : vector<24x24xf32>
    %75 = arith.addf %35, %74 : vector<24x24xf32>
    %c53 = arith.constant 53 : index
    %76 = memref.load %arg2[%c53] : memref<252xf32, #tpu.memory_space<smem>>
    %77 = vector.broadcast %76 : f32 to vector<24x24xf32>
    %78 = arith.mulf %77, %55 : vector<24x24xf32>
    %79 = arith.addf %37, %78 : vector<24x24xf32>
    %c62 = arith.constant 62 : index
    %80 = memref.load %arg2[%c62] : memref<252xf32, #tpu.memory_space<smem>>
    %81 = vector.broadcast %80 : f32 to vector<24x24xf32>
    %82 = arith.mulf %81, %55 : vector<24x24xf32>
    %83 = arith.addf %39, %82 : vector<24x24xf32>
    %c71 = arith.constant 71 : index
    %84 = memref.load %arg2[%c71] : memref<252xf32, #tpu.memory_space<smem>>
    %85 = vector.broadcast %84 : f32 to vector<24x24xf32>
    %86 = arith.mulf %85, %55 : vector<24x24xf32>
    %87 = arith.addf %41, %86 : vector<24x24xf32>
    %c80 = arith.constant 80 : index
    %88 = memref.load %arg2[%c80] : memref<252xf32, #tpu.memory_space<smem>>
    %89 = vector.broadcast %88 : f32 to vector<24x24xf32>
    %90 = arith.mulf %89, %55 : vector<24x24xf32>
    %91 = arith.addf %43, %90 : vector<24x24xf32>
    %c89 = arith.constant 89 : index
    %92 = memref.load %arg2[%c89] : memref<252xf32, #tpu.memory_space<smem>>
    %93 = vector.broadcast %92 : f32 to vector<24x24xf32>
    %94 = arith.mulf %93, %55 : vector<24x24xf32>
    %95 = arith.addf %45, %94 : vector<24x24xf32>
    %c98 = arith.constant 98 : index
    %96 = memref.load %arg2[%c98] : memref<252xf32, #tpu.memory_space<smem>>
    %97 = vector.broadcast %96 : f32 to vector<24x24xf32>
    %98 = arith.mulf %97, %55 : vector<24x24xf32>
    %99 = arith.addf %47, %98 : vector<24x24xf32>
    %c107 = arith.constant 107 : index
    %100 = memref.load %arg2[%c107] : memref<252xf32, #tpu.memory_space<smem>>
    %101 = vector.broadcast %100 : f32 to vector<24x24xf32>
    %102 = arith.mulf %101, %55 : vector<24x24xf32>
    %103 = arith.addf %49, %102 : vector<24x24xf32>
    %c116 = arith.constant 116 : index
    %104 = memref.load %arg2[%c116] : memref<252xf32, #tpu.memory_space<smem>>
    %105 = vector.broadcast %104 : f32 to vector<24x24xf32>
    %106 = arith.mulf %105, %55 : vector<24x24xf32>
    %107 = arith.addf %51, %106 : vector<24x24xf32>
    %c125 = arith.constant 125 : index
    %108 = memref.load %arg2[%c125] : memref<252xf32, #tpu.memory_space<smem>>
    %109 = vector.broadcast %108 : f32 to vector<24x24xf32>
    %110 = arith.mulf %109, %55 : vector<24x24xf32>
    %111 = arith.addf %53, %110 : vector<24x24xf32>
    %112 = vector.extract_strided_slice %54 {offsets = [0, 1], sizes = [24, 24], strides = [1, 1]} : vector<24x26xf32> to vector<24x24xf32>
    %c7_15 = arith.constant 7 : index
    %113 = memref.load %arg2[%c7_15] : memref<252xf32, #tpu.memory_space<smem>>
    %114 = vector.broadcast %113 : f32 to vector<24x24xf32>
    %115 = arith.mulf %114, %112 : vector<24x24xf32>
    %116 = arith.addf %59, %115 : vector<24x24xf32>
    %c16 = arith.constant 16 : index
    %117 = memref.load %arg2[%c16] : memref<252xf32, #tpu.memory_space<smem>>
    %118 = vector.broadcast %117 : f32 to vector<24x24xf32>
    %119 = arith.mulf %118, %112 : vector<24x24xf32>
    %120 = arith.addf %63, %119 : vector<24x24xf32>
    %c25 = arith.constant 25 : index
    %121 = memref.load %arg2[%c25] : memref<252xf32, #tpu.memory_space<smem>>
    %122 = vector.broadcast %121 : f32 to vector<24x24xf32>
    %123 = arith.mulf %122, %112 : vector<24x24xf32>
    %124 = arith.addf %67, %123 : vector<24x24xf32>
    %c34 = arith.constant 34 : index
    %125 = memref.load %arg2[%c34] : memref<252xf32, #tpu.memory_space<smem>>
    %126 = vector.broadcast %125 : f32 to vector<24x24xf32>
    %127 = arith.mulf %126, %112 : vector<24x24xf32>
    %128 = arith.addf %71, %127 : vector<24x24xf32>
    %c43 = arith.constant 43 : index
    %129 = memref.load %arg2[%c43] : memref<252xf32, #tpu.memory_space<smem>>
    %130 = vector.broadcast %129 : f32 to vector<24x24xf32>
    %131 = arith.mulf %130, %112 : vector<24x24xf32>
    %132 = arith.addf %75, %131 : vector<24x24xf32>
    %c52 = arith.constant 52 : index
    %133 = memref.load %arg2[%c52] : memref<252xf32, #tpu.memory_space<smem>>
    %134 = vector.broadcast %133 : f32 to vector<24x24xf32>
    %135 = arith.mulf %134, %112 : vector<24x24xf32>
    %136 = arith.addf %79, %135 : vector<24x24xf32>
    %c61 = arith.constant 61 : index
    %137 = memref.load %arg2[%c61] : memref<252xf32, #tpu.memory_space<smem>>
    %138 = vector.broadcast %137 : f32 to vector<24x24xf32>
    %139 = arith.mulf %138, %112 : vector<24x24xf32>
    %140 = arith.addf %83, %139 : vector<24x24xf32>
    %c70 = arith.constant 70 : index
    %141 = memref.load %arg2[%c70] : memref<252xf32, #tpu.memory_space<smem>>
    %142 = vector.broadcast %141 : f32 to vector<24x24xf32>
    %143 = arith.mulf %142, %112 : vector<24x24xf32>
    %144 = arith.addf %87, %143 : vector<24x24xf32>
    %c79 = arith.constant 79 : index
    %145 = memref.load %arg2[%c79] : memref<252xf32, #tpu.memory_space<smem>>
    %146 = vector.broadcast %145 : f32 to vector<24x24xf32>
    %147 = arith.mulf %146, %112 : vector<24x24xf32>
    %148 = arith.addf %91, %147 : vector<24x24xf32>
    %c88 = arith.constant 88 : index
    %149 = memref.load %arg2[%c88] : memref<252xf32, #tpu.memory_space<smem>>
    %150 = vector.broadcast %149 : f32 to vector<24x24xf32>
    %151 = arith.mulf %150, %112 : vector<24x24xf32>
    %152 = arith.addf %95, %151 : vector<24x24xf32>
    %c97 = arith.constant 97 : index
    %153 = memref.load %arg2[%c97] : memref<252xf32, #tpu.memory_space<smem>>
    %154 = vector.broadcast %153 : f32 to vector<24x24xf32>
    %155 = arith.mulf %154, %112 : vector<24x24xf32>
    %156 = arith.addf %99, %155 : vector<24x24xf32>
    %c106 = arith.constant 106 : index
    %157 = memref.load %arg2[%c106] : memref<252xf32, #tpu.memory_space<smem>>
    %158 = vector.broadcast %157 : f32 to vector<24x24xf32>
    %159 = arith.mulf %158, %112 : vector<24x24xf32>
    %160 = arith.addf %103, %159 : vector<24x24xf32>
    %c115 = arith.constant 115 : index
    %161 = memref.load %arg2[%c115] : memref<252xf32, #tpu.memory_space<smem>>
    %162 = vector.broadcast %161 : f32 to vector<24x24xf32>
    %163 = arith.mulf %162, %112 : vector<24x24xf32>
    %164 = arith.addf %107, %163 : vector<24x24xf32>
    %c124 = arith.constant 124 : index
    %165 = memref.load %arg2[%c124] : memref<252xf32, #tpu.memory_space<smem>>
    %166 = vector.broadcast %165 : f32 to vector<24x24xf32>
    %167 = arith.mulf %166, %112 : vector<24x24xf32>
    %168 = arith.addf %111, %167 : vector<24x24xf32>
    %169 = vector.extract_strided_slice %54 {offsets = [0, 2], sizes = [24, 24], strides = [1, 1]} : vector<24x26xf32> to vector<24x24xf32>
    %c6_16 = arith.constant 6 : index
    %170 = memref.load %arg2[%c6_16] : memref<252xf32, #tpu.memory_space<smem>>
    %171 = vector.broadcast %170 : f32 to vector<24x24xf32>
    %172 = arith.mulf %171, %169 : vector<24x24xf32>
    %173 = arith.addf %116, %172 : vector<24x24xf32>
    %c15 = arith.constant 15 : index
    %174 = memref.load %arg2[%c15] : memref<252xf32, #tpu.memory_space<smem>>
    %175 = vector.broadcast %174 : f32 to vector<24x24xf32>
    %176 = arith.mulf %175, %169 : vector<24x24xf32>
    %177 = arith.addf %120, %176 : vector<24x24xf32>
    %c24 = arith.constant 24 : index
    %178 = memref.load %arg2[%c24] : memref<252xf32, #tpu.memory_space<smem>>
    %179 = vector.broadcast %178 : f32 to vector<24x24xf32>
    %180 = arith.mulf %179, %169 : vector<24x24xf32>
    %181 = arith.addf %124, %180 : vector<24x24xf32>
    %c33 = arith.constant 33 : index
    %182 = memref.load %arg2[%c33] : memref<252xf32, #tpu.memory_space<smem>>
    %183 = vector.broadcast %182 : f32 to vector<24x24xf32>
    %184 = arith.mulf %183, %169 : vector<24x24xf32>
    %185 = arith.addf %128, %184 : vector<24x24xf32>
    %c42 = arith.constant 42 : index
    %186 = memref.load %arg2[%c42] : memref<252xf32, #tpu.memory_space<smem>>
    %187 = vector.broadcast %186 : f32 to vector<24x24xf32>
    %188 = arith.mulf %187, %169 : vector<24x24xf32>
    %189 = arith.addf %132, %188 : vector<24x24xf32>
    %c51 = arith.constant 51 : index
    %190 = memref.load %arg2[%c51] : memref<252xf32, #tpu.memory_space<smem>>
    %191 = vector.broadcast %190 : f32 to vector<24x24xf32>
    %192 = arith.mulf %191, %169 : vector<24x24xf32>
    %193 = arith.addf %136, %192 : vector<24x24xf32>
    %c60 = arith.constant 60 : index
    %194 = memref.load %arg2[%c60] : memref<252xf32, #tpu.memory_space<smem>>
    %195 = vector.broadcast %194 : f32 to vector<24x24xf32>
    %196 = arith.mulf %195, %169 : vector<24x24xf32>
    %197 = arith.addf %140, %196 : vector<24x24xf32>
    %c69 = arith.constant 69 : index
    %198 = memref.load %arg2[%c69] : memref<252xf32, #tpu.memory_space<smem>>
    %199 = vector.broadcast %198 : f32 to vector<24x24xf32>
    %200 = arith.mulf %199, %169 : vector<24x24xf32>
    %201 = arith.addf %144, %200 : vector<24x24xf32>
    %c78 = arith.constant 78 : index
    %202 = memref.load %arg2[%c78] : memref<252xf32, #tpu.memory_space<smem>>
    %203 = vector.broadcast %202 : f32 to vector<24x24xf32>
    %204 = arith.mulf %203, %169 : vector<24x24xf32>
    %205 = arith.addf %148, %204 : vector<24x24xf32>
    %c87 = arith.constant 87 : index
    %206 = memref.load %arg2[%c87] : memref<252xf32, #tpu.memory_space<smem>>
    %207 = vector.broadcast %206 : f32 to vector<24x24xf32>
    %208 = arith.mulf %207, %169 : vector<24x24xf32>
    %209 = arith.addf %152, %208 : vector<24x24xf32>
    %c96 = arith.constant 96 : index
    %210 = memref.load %arg2[%c96] : memref<252xf32, #tpu.memory_space<smem>>
    %211 = vector.broadcast %210 : f32 to vector<24x24xf32>
    %212 = arith.mulf %211, %169 : vector<24x24xf32>
    %213 = arith.addf %156, %212 : vector<24x24xf32>
    %c105 = arith.constant 105 : index
    %214 = memref.load %arg2[%c105] : memref<252xf32, #tpu.memory_space<smem>>
    %215 = vector.broadcast %214 : f32 to vector<24x24xf32>
    %216 = arith.mulf %215, %169 : vector<24x24xf32>
    %217 = arith.addf %160, %216 : vector<24x24xf32>
    %c114 = arith.constant 114 : index
    %218 = memref.load %arg2[%c114] : memref<252xf32, #tpu.memory_space<smem>>
    %219 = vector.broadcast %218 : f32 to vector<24x24xf32>
    %220 = arith.mulf %219, %169 : vector<24x24xf32>
    %221 = arith.addf %164, %220 : vector<24x24xf32>
    %c123 = arith.constant 123 : index
    %222 = memref.load %arg2[%c123] : memref<252xf32, #tpu.memory_space<smem>>
    %223 = vector.broadcast %222 : f32 to vector<24x24xf32>
    %224 = arith.mulf %223, %169 : vector<24x24xf32>
    %225 = arith.addf %168, %224 : vector<24x24xf32>
    %226 = vector.extract_strided_slice %21 {offsets = [1, 0], sizes = [24, 26], strides = [1, 1]} : vector<26x26xf32> to vector<24x26xf32>
    %227 = vector.extract_strided_slice %226 {offsets = [0, 0], sizes = [24, 24], strides = [1, 1]} : vector<24x26xf32> to vector<24x24xf32>
    %c5_17 = arith.constant 5 : index
    %228 = memref.load %arg2[%c5_17] : memref<252xf32, #tpu.memory_space<smem>>
    %229 = vector.broadcast %228 : f32 to vector<24x24xf32>
    %230 = arith.mulf %229, %227 : vector<24x24xf32>
    %231 = arith.addf %173, %230 : vector<24x24xf32>
    %c14 = arith.constant 14 : index
    %232 = memref.load %arg2[%c14] : memref<252xf32, #tpu.memory_space<smem>>
    %233 = vector.broadcast %232 : f32 to vector<24x24xf32>
    %234 = arith.mulf %233, %227 : vector<24x24xf32>
    %235 = arith.addf %177, %234 : vector<24x24xf32>
    %c23 = arith.constant 23 : index
    %236 = memref.load %arg2[%c23] : memref<252xf32, #tpu.memory_space<smem>>
    %237 = vector.broadcast %236 : f32 to vector<24x24xf32>
    %238 = arith.mulf %237, %227 : vector<24x24xf32>
    %239 = arith.addf %181, %238 : vector<24x24xf32>
    %c32 = arith.constant 32 : index
    %240 = memref.load %arg2[%c32] : memref<252xf32, #tpu.memory_space<smem>>
    %241 = vector.broadcast %240 : f32 to vector<24x24xf32>
    %242 = arith.mulf %241, %227 : vector<24x24xf32>
    %243 = arith.addf %185, %242 : vector<24x24xf32>
    %c41 = arith.constant 41 : index
    %244 = memref.load %arg2[%c41] : memref<252xf32, #tpu.memory_space<smem>>
    %245 = vector.broadcast %244 : f32 to vector<24x24xf32>
    %246 = arith.mulf %245, %227 : vector<24x24xf32>
    %247 = arith.addf %189, %246 : vector<24x24xf32>
    %c50 = arith.constant 50 : index
    %248 = memref.load %arg2[%c50] : memref<252xf32, #tpu.memory_space<smem>>
    %249 = vector.broadcast %248 : f32 to vector<24x24xf32>
    %250 = arith.mulf %249, %227 : vector<24x24xf32>
    %251 = arith.addf %193, %250 : vector<24x24xf32>
    %c59 = arith.constant 59 : index
    %252 = memref.load %arg2[%c59] : memref<252xf32, #tpu.memory_space<smem>>
    %253 = vector.broadcast %252 : f32 to vector<24x24xf32>
    %254 = arith.mulf %253, %227 : vector<24x24xf32>
    %255 = arith.addf %197, %254 : vector<24x24xf32>
    %c68 = arith.constant 68 : index
    %256 = memref.load %arg2[%c68] : memref<252xf32, #tpu.memory_space<smem>>
    %257 = vector.broadcast %256 : f32 to vector<24x24xf32>
    %258 = arith.mulf %257, %227 : vector<24x24xf32>
    %259 = arith.addf %201, %258 : vector<24x24xf32>
    %c77 = arith.constant 77 : index
    %260 = memref.load %arg2[%c77] : memref<252xf32, #tpu.memory_space<smem>>
    %261 = vector.broadcast %260 : f32 to vector<24x24xf32>
    %262 = arith.mulf %261, %227 : vector<24x24xf32>
    %263 = arith.addf %205, %262 : vector<24x24xf32>
    %c86 = arith.constant 86 : index
    %264 = memref.load %arg2[%c86] : memref<252xf32, #tpu.memory_space<smem>>
    %265 = vector.broadcast %264 : f32 to vector<24x24xf32>
    %266 = arith.mulf %265, %227 : vector<24x24xf32>
    %267 = arith.addf %209, %266 : vector<24x24xf32>
    %c95 = arith.constant 95 : index
    %268 = memref.load %arg2[%c95] : memref<252xf32, #tpu.memory_space<smem>>
    %269 = vector.broadcast %268 : f32 to vector<24x24xf32>
    %270 = arith.mulf %269, %227 : vector<24x24xf32>
    %271 = arith.addf %213, %270 : vector<24x24xf32>
    %c104 = arith.constant 104 : index
    %272 = memref.load %arg2[%c104] : memref<252xf32, #tpu.memory_space<smem>>
    %273 = vector.broadcast %272 : f32 to vector<24x24xf32>
    %274 = arith.mulf %273, %227 : vector<24x24xf32>
    %275 = arith.addf %217, %274 : vector<24x24xf32>
    %c113 = arith.constant 113 : index
    %276 = memref.load %arg2[%c113] : memref<252xf32, #tpu.memory_space<smem>>
    %277 = vector.broadcast %276 : f32 to vector<24x24xf32>
    %278 = arith.mulf %277, %227 : vector<24x24xf32>
    %279 = arith.addf %221, %278 : vector<24x24xf32>
    %c122 = arith.constant 122 : index
    %280 = memref.load %arg2[%c122] : memref<252xf32, #tpu.memory_space<smem>>
    %281 = vector.broadcast %280 : f32 to vector<24x24xf32>
    %282 = arith.mulf %281, %227 : vector<24x24xf32>
    %283 = arith.addf %225, %282 : vector<24x24xf32>
    %284 = vector.extract_strided_slice %226 {offsets = [0, 1], sizes = [24, 24], strides = [1, 1]} : vector<24x26xf32> to vector<24x24xf32>
    %c4_18 = arith.constant 4 : index
    %285 = memref.load %arg2[%c4_18] : memref<252xf32, #tpu.memory_space<smem>>
    %286 = vector.broadcast %285 : f32 to vector<24x24xf32>
    %287 = arith.mulf %286, %284 : vector<24x24xf32>
    %288 = arith.addf %231, %287 : vector<24x24xf32>
    %c13_19 = arith.constant 13 : index
    %289 = memref.load %arg2[%c13_19] : memref<252xf32, #tpu.memory_space<smem>>
    %290 = vector.broadcast %289 : f32 to vector<24x24xf32>
    %291 = arith.mulf %290, %284 : vector<24x24xf32>
    %292 = arith.addf %235, %291 : vector<24x24xf32>
    %c22 = arith.constant 22 : index
    %293 = memref.load %arg2[%c22] : memref<252xf32, #tpu.memory_space<smem>>
    %294 = vector.broadcast %293 : f32 to vector<24x24xf32>
    %295 = arith.mulf %294, %284 : vector<24x24xf32>
    %296 = arith.addf %239, %295 : vector<24x24xf32>
    %c31 = arith.constant 31 : index
    %297 = memref.load %arg2[%c31] : memref<252xf32, #tpu.memory_space<smem>>
    %298 = vector.broadcast %297 : f32 to vector<24x24xf32>
    %299 = arith.mulf %298, %284 : vector<24x24xf32>
    %300 = arith.addf %243, %299 : vector<24x24xf32>
    %c40 = arith.constant 40 : index
    %301 = memref.load %arg2[%c40] : memref<252xf32, #tpu.memory_space<smem>>
    %302 = vector.broadcast %301 : f32 to vector<24x24xf32>
    %303 = arith.mulf %302, %284 : vector<24x24xf32>
    %304 = arith.addf %247, %303 : vector<24x24xf32>
    %c49 = arith.constant 49 : index
    %305 = memref.load %arg2[%c49] : memref<252xf32, #tpu.memory_space<smem>>
    %306 = vector.broadcast %305 : f32 to vector<24x24xf32>
    %307 = arith.mulf %306, %284 : vector<24x24xf32>
    %308 = arith.addf %251, %307 : vector<24x24xf32>
    %c58 = arith.constant 58 : index
    %309 = memref.load %arg2[%c58] : memref<252xf32, #tpu.memory_space<smem>>
    %310 = vector.broadcast %309 : f32 to vector<24x24xf32>
    %311 = arith.mulf %310, %284 : vector<24x24xf32>
    %312 = arith.addf %255, %311 : vector<24x24xf32>
    %c67 = arith.constant 67 : index
    %313 = memref.load %arg2[%c67] : memref<252xf32, #tpu.memory_space<smem>>
    %314 = vector.broadcast %313 : f32 to vector<24x24xf32>
    %315 = arith.mulf %314, %284 : vector<24x24xf32>
    %316 = arith.addf %259, %315 : vector<24x24xf32>
    %c76 = arith.constant 76 : index
    %317 = memref.load %arg2[%c76] : memref<252xf32, #tpu.memory_space<smem>>
    %318 = vector.broadcast %317 : f32 to vector<24x24xf32>
    %319 = arith.mulf %318, %284 : vector<24x24xf32>
    %320 = arith.addf %263, %319 : vector<24x24xf32>
    %c85 = arith.constant 85 : index
    %321 = memref.load %arg2[%c85] : memref<252xf32, #tpu.memory_space<smem>>
    %322 = vector.broadcast %321 : f32 to vector<24x24xf32>
    %323 = arith.mulf %322, %284 : vector<24x24xf32>
    %324 = arith.addf %267, %323 : vector<24x24xf32>
    %c94 = arith.constant 94 : index
    %325 = memref.load %arg2[%c94] : memref<252xf32, #tpu.memory_space<smem>>
    %326 = vector.broadcast %325 : f32 to vector<24x24xf32>
    %327 = arith.mulf %326, %284 : vector<24x24xf32>
    %328 = arith.addf %271, %327 : vector<24x24xf32>
    %c103 = arith.constant 103 : index
    %329 = memref.load %arg2[%c103] : memref<252xf32, #tpu.memory_space<smem>>
    %330 = vector.broadcast %329 : f32 to vector<24x24xf32>
    %331 = arith.mulf %330, %284 : vector<24x24xf32>
    %332 = arith.addf %275, %331 : vector<24x24xf32>
    %c112 = arith.constant 112 : index
    %333 = memref.load %arg2[%c112] : memref<252xf32, #tpu.memory_space<smem>>
    %334 = vector.broadcast %333 : f32 to vector<24x24xf32>
    %335 = arith.mulf %334, %284 : vector<24x24xf32>
    %336 = arith.addf %279, %335 : vector<24x24xf32>
    %c121 = arith.constant 121 : index
    %337 = memref.load %arg2[%c121] : memref<252xf32, #tpu.memory_space<smem>>
    %338 = vector.broadcast %337 : f32 to vector<24x24xf32>
    %339 = arith.mulf %338, %284 : vector<24x24xf32>
    %340 = arith.addf %283, %339 : vector<24x24xf32>
    %341 = vector.extract_strided_slice %226 {offsets = [0, 2], sizes = [24, 24], strides = [1, 1]} : vector<24x26xf32> to vector<24x24xf32>
    %c3_20 = arith.constant 3 : index
    %342 = memref.load %arg2[%c3_20] : memref<252xf32, #tpu.memory_space<smem>>
    %343 = vector.broadcast %342 : f32 to vector<24x24xf32>
    %344 = arith.mulf %343, %341 : vector<24x24xf32>
    %345 = arith.addf %288, %344 : vector<24x24xf32>
    %c12_21 = arith.constant 12 : index
    %346 = memref.load %arg2[%c12_21] : memref<252xf32, #tpu.memory_space<smem>>
    %347 = vector.broadcast %346 : f32 to vector<24x24xf32>
    %348 = arith.mulf %347, %341 : vector<24x24xf32>
    %349 = arith.addf %292, %348 : vector<24x24xf32>
    %c21 = arith.constant 21 : index
    %350 = memref.load %arg2[%c21] : memref<252xf32, #tpu.memory_space<smem>>
    %351 = vector.broadcast %350 : f32 to vector<24x24xf32>
    %352 = arith.mulf %351, %341 : vector<24x24xf32>
    %353 = arith.addf %296, %352 : vector<24x24xf32>
    %c30 = arith.constant 30 : index
    %354 = memref.load %arg2[%c30] : memref<252xf32, #tpu.memory_space<smem>>
    %355 = vector.broadcast %354 : f32 to vector<24x24xf32>
    %356 = arith.mulf %355, %341 : vector<24x24xf32>
    %357 = arith.addf %300, %356 : vector<24x24xf32>
    %c39 = arith.constant 39 : index
    %358 = memref.load %arg2[%c39] : memref<252xf32, #tpu.memory_space<smem>>
    %359 = vector.broadcast %358 : f32 to vector<24x24xf32>
    %360 = arith.mulf %359, %341 : vector<24x24xf32>
    %361 = arith.addf %304, %360 : vector<24x24xf32>
    %c48 = arith.constant 48 : index
    %362 = memref.load %arg2[%c48] : memref<252xf32, #tpu.memory_space<smem>>
    %363 = vector.broadcast %362 : f32 to vector<24x24xf32>
    %364 = arith.mulf %363, %341 : vector<24x24xf32>
    %365 = arith.addf %308, %364 : vector<24x24xf32>
    %c57 = arith.constant 57 : index
    %366 = memref.load %arg2[%c57] : memref<252xf32, #tpu.memory_space<smem>>
    %367 = vector.broadcast %366 : f32 to vector<24x24xf32>
    %368 = arith.mulf %367, %341 : vector<24x24xf32>
    %369 = arith.addf %312, %368 : vector<24x24xf32>
    %c66 = arith.constant 66 : index
    %370 = memref.load %arg2[%c66] : memref<252xf32, #tpu.memory_space<smem>>
    %371 = vector.broadcast %370 : f32 to vector<24x24xf32>
    %372 = arith.mulf %371, %341 : vector<24x24xf32>
    %373 = arith.addf %316, %372 : vector<24x24xf32>
    %c75 = arith.constant 75 : index
    %374 = memref.load %arg2[%c75] : memref<252xf32, #tpu.memory_space<smem>>
    %375 = vector.broadcast %374 : f32 to vector<24x24xf32>
    %376 = arith.mulf %375, %341 : vector<24x24xf32>
    %377 = arith.addf %320, %376 : vector<24x24xf32>
    %c84 = arith.constant 84 : index
    %378 = memref.load %arg2[%c84] : memref<252xf32, #tpu.memory_space<smem>>
    %379 = vector.broadcast %378 : f32 to vector<24x24xf32>
    %380 = arith.mulf %379, %341 : vector<24x24xf32>
    %381 = arith.addf %324, %380 : vector<24x24xf32>
    %c93 = arith.constant 93 : index
    %382 = memref.load %arg2[%c93] : memref<252xf32, #tpu.memory_space<smem>>
    %383 = vector.broadcast %382 : f32 to vector<24x24xf32>
    %384 = arith.mulf %383, %341 : vector<24x24xf32>
    %385 = arith.addf %328, %384 : vector<24x24xf32>
    %c102 = arith.constant 102 : index
    %386 = memref.load %arg2[%c102] : memref<252xf32, #tpu.memory_space<smem>>
    %387 = vector.broadcast %386 : f32 to vector<24x24xf32>
    %388 = arith.mulf %387, %341 : vector<24x24xf32>
    %389 = arith.addf %332, %388 : vector<24x24xf32>
    %c111 = arith.constant 111 : index
    %390 = memref.load %arg2[%c111] : memref<252xf32, #tpu.memory_space<smem>>
    %391 = vector.broadcast %390 : f32 to vector<24x24xf32>
    %392 = arith.mulf %391, %341 : vector<24x24xf32>
    %393 = arith.addf %336, %392 : vector<24x24xf32>
    %c120 = arith.constant 120 : index
    %394 = memref.load %arg2[%c120] : memref<252xf32, #tpu.memory_space<smem>>
    %395 = vector.broadcast %394 : f32 to vector<24x24xf32>
    %396 = arith.mulf %395, %341 : vector<24x24xf32>
    %397 = arith.addf %340, %396 : vector<24x24xf32>
    %398 = vector.extract_strided_slice %21 {offsets = [2, 0], sizes = [24, 26], strides = [1, 1]} : vector<26x26xf32> to vector<24x26xf32>
    %399 = vector.extract_strided_slice %398 {offsets = [0, 0], sizes = [24, 24], strides = [1, 1]} : vector<24x26xf32> to vector<24x24xf32>
    %c2_22 = arith.constant 2 : index
    %400 = memref.load %arg2[%c2_22] : memref<252xf32, #tpu.memory_space<smem>>
    %401 = vector.broadcast %400 : f32 to vector<24x24xf32>
    %402 = arith.mulf %401, %399 : vector<24x24xf32>
    %403 = arith.addf %345, %402 : vector<24x24xf32>
    %c11_23 = arith.constant 11 : index
    %404 = memref.load %arg2[%c11_23] : memref<252xf32, #tpu.memory_space<smem>>
    %405 = vector.broadcast %404 : f32 to vector<24x24xf32>
    %406 = arith.mulf %405, %399 : vector<24x24xf32>
    %407 = arith.addf %349, %406 : vector<24x24xf32>
    %c20 = arith.constant 20 : index
    %408 = memref.load %arg2[%c20] : memref<252xf32, #tpu.memory_space<smem>>
    %409 = vector.broadcast %408 : f32 to vector<24x24xf32>
    %410 = arith.mulf %409, %399 : vector<24x24xf32>
    %411 = arith.addf %353, %410 : vector<24x24xf32>
    %c29 = arith.constant 29 : index
    %412 = memref.load %arg2[%c29] : memref<252xf32, #tpu.memory_space<smem>>
    %413 = vector.broadcast %412 : f32 to vector<24x24xf32>
    %414 = arith.mulf %413, %399 : vector<24x24xf32>
    %415 = arith.addf %357, %414 : vector<24x24xf32>
    %c38 = arith.constant 38 : index
    %416 = memref.load %arg2[%c38] : memref<252xf32, #tpu.memory_space<smem>>
    %417 = vector.broadcast %416 : f32 to vector<24x24xf32>
    %418 = arith.mulf %417, %399 : vector<24x24xf32>
    %419 = arith.addf %361, %418 : vector<24x24xf32>
    %c47 = arith.constant 47 : index
    %420 = memref.load %arg2[%c47] : memref<252xf32, #tpu.memory_space<smem>>
    %421 = vector.broadcast %420 : f32 to vector<24x24xf32>
    %422 = arith.mulf %421, %399 : vector<24x24xf32>
    %423 = arith.addf %365, %422 : vector<24x24xf32>
    %c56 = arith.constant 56 : index
    %424 = memref.load %arg2[%c56] : memref<252xf32, #tpu.memory_space<smem>>
    %425 = vector.broadcast %424 : f32 to vector<24x24xf32>
    %426 = arith.mulf %425, %399 : vector<24x24xf32>
    %427 = arith.addf %369, %426 : vector<24x24xf32>
    %c65 = arith.constant 65 : index
    %428 = memref.load %arg2[%c65] : memref<252xf32, #tpu.memory_space<smem>>
    %429 = vector.broadcast %428 : f32 to vector<24x24xf32>
    %430 = arith.mulf %429, %399 : vector<24x24xf32>
    %431 = arith.addf %373, %430 : vector<24x24xf32>
    %c74 = arith.constant 74 : index
    %432 = memref.load %arg2[%c74] : memref<252xf32, #tpu.memory_space<smem>>
    %433 = vector.broadcast %432 : f32 to vector<24x24xf32>
    %434 = arith.mulf %433, %399 : vector<24x24xf32>
    %435 = arith.addf %377, %434 : vector<24x24xf32>
    %c83 = arith.constant 83 : index
    %436 = memref.load %arg2[%c83] : memref<252xf32, #tpu.memory_space<smem>>
    %437 = vector.broadcast %436 : f32 to vector<24x24xf32>
    %438 = arith.mulf %437, %399 : vector<24x24xf32>
    %439 = arith.addf %381, %438 : vector<24x24xf32>
    %c92 = arith.constant 92 : index
    %440 = memref.load %arg2[%c92] : memref<252xf32, #tpu.memory_space<smem>>
    %441 = vector.broadcast %440 : f32 to vector<24x24xf32>
    %442 = arith.mulf %441, %399 : vector<24x24xf32>
    %443 = arith.addf %385, %442 : vector<24x24xf32>
    %c101 = arith.constant 101 : index
    %444 = memref.load %arg2[%c101] : memref<252xf32, #tpu.memory_space<smem>>
    %445 = vector.broadcast %444 : f32 to vector<24x24xf32>
    %446 = arith.mulf %445, %399 : vector<24x24xf32>
    %447 = arith.addf %389, %446 : vector<24x24xf32>
    %c110 = arith.constant 110 : index
    %448 = memref.load %arg2[%c110] : memref<252xf32, #tpu.memory_space<smem>>
    %449 = vector.broadcast %448 : f32 to vector<24x24xf32>
    %450 = arith.mulf %449, %399 : vector<24x24xf32>
    %451 = arith.addf %393, %450 : vector<24x24xf32>
    %c119 = arith.constant 119 : index
    %452 = memref.load %arg2[%c119] : memref<252xf32, #tpu.memory_space<smem>>
    %453 = vector.broadcast %452 : f32 to vector<24x24xf32>
    %454 = arith.mulf %453, %399 : vector<24x24xf32>
    %455 = arith.addf %397, %454 : vector<24x24xf32>
    %456 = vector.extract_strided_slice %398 {offsets = [0, 1], sizes = [24, 24], strides = [1, 1]} : vector<24x26xf32> to vector<24x24xf32>
    %c1_24 = arith.constant 1 : index
    %457 = memref.load %arg2[%c1_24] : memref<252xf32, #tpu.memory_space<smem>>
    %458 = vector.broadcast %457 : f32 to vector<24x24xf32>
    %459 = arith.mulf %458, %456 : vector<24x24xf32>
    %460 = arith.addf %403, %459 : vector<24x24xf32>
    %c10_25 = arith.constant 10 : index
    %461 = memref.load %arg2[%c10_25] : memref<252xf32, #tpu.memory_space<smem>>
    %462 = vector.broadcast %461 : f32 to vector<24x24xf32>
    %463 = arith.mulf %462, %456 : vector<24x24xf32>
    %464 = arith.addf %407, %463 : vector<24x24xf32>
    %c19 = arith.constant 19 : index
    %465 = memref.load %arg2[%c19] : memref<252xf32, #tpu.memory_space<smem>>
    %466 = vector.broadcast %465 : f32 to vector<24x24xf32>
    %467 = arith.mulf %466, %456 : vector<24x24xf32>
    %468 = arith.addf %411, %467 : vector<24x24xf32>
    %c28 = arith.constant 28 : index
    %469 = memref.load %arg2[%c28] : memref<252xf32, #tpu.memory_space<smem>>
    %470 = vector.broadcast %469 : f32 to vector<24x24xf32>
    %471 = arith.mulf %470, %456 : vector<24x24xf32>
    %472 = arith.addf %415, %471 : vector<24x24xf32>
    %c37 = arith.constant 37 : index
    %473 = memref.load %arg2[%c37] : memref<252xf32, #tpu.memory_space<smem>>
    %474 = vector.broadcast %473 : f32 to vector<24x24xf32>
    %475 = arith.mulf %474, %456 : vector<24x24xf32>
    %476 = arith.addf %419, %475 : vector<24x24xf32>
    %c46 = arith.constant 46 : index
    %477 = memref.load %arg2[%c46] : memref<252xf32, #tpu.memory_space<smem>>
    %478 = vector.broadcast %477 : f32 to vector<24x24xf32>
    %479 = arith.mulf %478, %456 : vector<24x24xf32>
    %480 = arith.addf %423, %479 : vector<24x24xf32>
    %c55 = arith.constant 55 : index
    %481 = memref.load %arg2[%c55] : memref<252xf32, #tpu.memory_space<smem>>
    %482 = vector.broadcast %481 : f32 to vector<24x24xf32>
    %483 = arith.mulf %482, %456 : vector<24x24xf32>
    %484 = arith.addf %427, %483 : vector<24x24xf32>
    %c64 = arith.constant 64 : index
    %485 = memref.load %arg2[%c64] : memref<252xf32, #tpu.memory_space<smem>>
    %486 = vector.broadcast %485 : f32 to vector<24x24xf32>
    %487 = arith.mulf %486, %456 : vector<24x24xf32>
    %488 = arith.addf %431, %487 : vector<24x24xf32>
    %c73 = arith.constant 73 : index
    %489 = memref.load %arg2[%c73] : memref<252xf32, #tpu.memory_space<smem>>
    %490 = vector.broadcast %489 : f32 to vector<24x24xf32>
    %491 = arith.mulf %490, %456 : vector<24x24xf32>
    %492 = arith.addf %435, %491 : vector<24x24xf32>
    %c82 = arith.constant 82 : index
    %493 = memref.load %arg2[%c82] : memref<252xf32, #tpu.memory_space<smem>>
    %494 = vector.broadcast %493 : f32 to vector<24x24xf32>
    %495 = arith.mulf %494, %456 : vector<24x24xf32>
    %496 = arith.addf %439, %495 : vector<24x24xf32>
    %c91 = arith.constant 91 : index
    %497 = memref.load %arg2[%c91] : memref<252xf32, #tpu.memory_space<smem>>
    %498 = vector.broadcast %497 : f32 to vector<24x24xf32>
    %499 = arith.mulf %498, %456 : vector<24x24xf32>
    %500 = arith.addf %443, %499 : vector<24x24xf32>
    %c100 = arith.constant 100 : index
    %501 = memref.load %arg2[%c100] : memref<252xf32, #tpu.memory_space<smem>>
    %502 = vector.broadcast %501 : f32 to vector<24x24xf32>
    %503 = arith.mulf %502, %456 : vector<24x24xf32>
    %504 = arith.addf %447, %503 : vector<24x24xf32>
    %c109 = arith.constant 109 : index
    %505 = memref.load %arg2[%c109] : memref<252xf32, #tpu.memory_space<smem>>
    %506 = vector.broadcast %505 : f32 to vector<24x24xf32>
    %507 = arith.mulf %506, %456 : vector<24x24xf32>
    %508 = arith.addf %451, %507 : vector<24x24xf32>
    %c118 = arith.constant 118 : index
    %509 = memref.load %arg2[%c118] : memref<252xf32, #tpu.memory_space<smem>>
    %510 = vector.broadcast %509 : f32 to vector<24x24xf32>
    %511 = arith.mulf %510, %456 : vector<24x24xf32>
    %512 = arith.addf %455, %511 : vector<24x24xf32>
    %513 = vector.extract_strided_slice %398 {offsets = [0, 2], sizes = [24, 24], strides = [1, 1]} : vector<24x26xf32> to vector<24x24xf32>
    %c0_26 = arith.constant 0 : index
    %514 = memref.load %arg2[%c0_26] : memref<252xf32, #tpu.memory_space<smem>>
    %515 = vector.broadcast %514 : f32 to vector<24x24xf32>
    %516 = arith.mulf %515, %513 : vector<24x24xf32>
    %517 = arith.addf %460, %516 : vector<24x24xf32>
    %c9_27 = arith.constant 9 : index
    %518 = memref.load %arg2[%c9_27] : memref<252xf32, #tpu.memory_space<smem>>
    %519 = vector.broadcast %518 : f32 to vector<24x24xf32>
    %520 = arith.mulf %519, %513 : vector<24x24xf32>
    %521 = arith.addf %464, %520 : vector<24x24xf32>
    %c18 = arith.constant 18 : index
    %522 = memref.load %arg2[%c18] : memref<252xf32, #tpu.memory_space<smem>>
    %523 = vector.broadcast %522 : f32 to vector<24x24xf32>
    %524 = arith.mulf %523, %513 : vector<24x24xf32>
    %525 = arith.addf %468, %524 : vector<24x24xf32>
    %c27 = arith.constant 27 : index
    %526 = memref.load %arg2[%c27] : memref<252xf32, #tpu.memory_space<smem>>
    %527 = vector.broadcast %526 : f32 to vector<24x24xf32>
    %528 = arith.mulf %527, %513 : vector<24x24xf32>
    %529 = arith.addf %472, %528 : vector<24x24xf32>
    %c36 = arith.constant 36 : index
    %530 = memref.load %arg2[%c36] : memref<252xf32, #tpu.memory_space<smem>>
    %531 = vector.broadcast %530 : f32 to vector<24x24xf32>
    %532 = arith.mulf %531, %513 : vector<24x24xf32>
    %533 = arith.addf %476, %532 : vector<24x24xf32>
    %c45 = arith.constant 45 : index
    %534 = memref.load %arg2[%c45] : memref<252xf32, #tpu.memory_space<smem>>
    %535 = vector.broadcast %534 : f32 to vector<24x24xf32>
    %536 = arith.mulf %535, %513 : vector<24x24xf32>
    %537 = arith.addf %480, %536 : vector<24x24xf32>
    %c54 = arith.constant 54 : index
    %538 = memref.load %arg2[%c54] : memref<252xf32, #tpu.memory_space<smem>>
    %539 = vector.broadcast %538 : f32 to vector<24x24xf32>
    %540 = arith.mulf %539, %513 : vector<24x24xf32>
    %541 = arith.addf %484, %540 : vector<24x24xf32>
    %c63 = arith.constant 63 : index
    %542 = memref.load %arg2[%c63] : memref<252xf32, #tpu.memory_space<smem>>
    %543 = vector.broadcast %542 : f32 to vector<24x24xf32>
    %544 = arith.mulf %543, %513 : vector<24x24xf32>
    %545 = arith.addf %488, %544 : vector<24x24xf32>
    %c72 = arith.constant 72 : index
    %546 = memref.load %arg2[%c72] : memref<252xf32, #tpu.memory_space<smem>>
    %547 = vector.broadcast %546 : f32 to vector<24x24xf32>
    %548 = arith.mulf %547, %513 : vector<24x24xf32>
    %549 = arith.addf %492, %548 : vector<24x24xf32>
    %c81 = arith.constant 81 : index
    %550 = memref.load %arg2[%c81] : memref<252xf32, #tpu.memory_space<smem>>
    %551 = vector.broadcast %550 : f32 to vector<24x24xf32>
    %552 = arith.mulf %551, %513 : vector<24x24xf32>
    %553 = arith.addf %496, %552 : vector<24x24xf32>
    %c90 = arith.constant 90 : index
    %554 = memref.load %arg2[%c90] : memref<252xf32, #tpu.memory_space<smem>>
    %555 = vector.broadcast %554 : f32 to vector<24x24xf32>
    %556 = arith.mulf %555, %513 : vector<24x24xf32>
    %557 = arith.addf %500, %556 : vector<24x24xf32>
    %c99 = arith.constant 99 : index
    %558 = memref.load %arg2[%c99] : memref<252xf32, #tpu.memory_space<smem>>
    %559 = vector.broadcast %558 : f32 to vector<24x24xf32>
    %560 = arith.mulf %559, %513 : vector<24x24xf32>
    %561 = arith.addf %504, %560 : vector<24x24xf32>
    %c108 = arith.constant 108 : index
    %562 = memref.load %arg2[%c108] : memref<252xf32, #tpu.memory_space<smem>>
    %563 = vector.broadcast %562 : f32 to vector<24x24xf32>
    %564 = arith.mulf %563, %513 : vector<24x24xf32>
    %565 = arith.addf %508, %564 : vector<24x24xf32>
    %c117 = arith.constant 117 : index
    %566 = memref.load %arg2[%c117] : memref<252xf32, #tpu.memory_space<smem>>
    %567 = vector.broadcast %566 : f32 to vector<24x24xf32>
    %568 = arith.mulf %567, %513 : vector<24x24xf32>
    %569 = arith.addf %512, %568 : vector<24x24xf32>
    %570 = vector.extract_strided_slice %25 {offsets = [0, 0], sizes = [24, 26], strides = [1, 1]} : vector<26x26xf32> to vector<24x26xf32>
    %571 = vector.extract_strided_slice %570 {offsets = [0, 0], sizes = [24, 24], strides = [1, 1]} : vector<24x26xf32> to vector<24x24xf32>
    %c134 = arith.constant 134 : index
    %572 = memref.load %arg2[%c134] : memref<252xf32, #tpu.memory_space<smem>>
    %573 = vector.broadcast %572 : f32 to vector<24x24xf32>
    %574 = arith.mulf %573, %571 : vector<24x24xf32>
    %575 = arith.addf %517, %574 : vector<24x24xf32>
    %c143 = arith.constant 143 : index
    %576 = memref.load %arg2[%c143] : memref<252xf32, #tpu.memory_space<smem>>
    %577 = vector.broadcast %576 : f32 to vector<24x24xf32>
    %578 = arith.mulf %577, %571 : vector<24x24xf32>
    %579 = arith.addf %521, %578 : vector<24x24xf32>
    %c152 = arith.constant 152 : index
    %580 = memref.load %arg2[%c152] : memref<252xf32, #tpu.memory_space<smem>>
    %581 = vector.broadcast %580 : f32 to vector<24x24xf32>
    %582 = arith.mulf %581, %571 : vector<24x24xf32>
    %583 = arith.addf %525, %582 : vector<24x24xf32>
    %c161 = arith.constant 161 : index
    %584 = memref.load %arg2[%c161] : memref<252xf32, #tpu.memory_space<smem>>
    %585 = vector.broadcast %584 : f32 to vector<24x24xf32>
    %586 = arith.mulf %585, %571 : vector<24x24xf32>
    %587 = arith.addf %529, %586 : vector<24x24xf32>
    %c170 = arith.constant 170 : index
    %588 = memref.load %arg2[%c170] : memref<252xf32, #tpu.memory_space<smem>>
    %589 = vector.broadcast %588 : f32 to vector<24x24xf32>
    %590 = arith.mulf %589, %571 : vector<24x24xf32>
    %591 = arith.addf %533, %590 : vector<24x24xf32>
    %c179 = arith.constant 179 : index
    %592 = memref.load %arg2[%c179] : memref<252xf32, #tpu.memory_space<smem>>
    %593 = vector.broadcast %592 : f32 to vector<24x24xf32>
    %594 = arith.mulf %593, %571 : vector<24x24xf32>
    %595 = arith.addf %537, %594 : vector<24x24xf32>
    %c188 = arith.constant 188 : index
    %596 = memref.load %arg2[%c188] : memref<252xf32, #tpu.memory_space<smem>>
    %597 = vector.broadcast %596 : f32 to vector<24x24xf32>
    %598 = arith.mulf %597, %571 : vector<24x24xf32>
    %599 = arith.addf %541, %598 : vector<24x24xf32>
    %c197 = arith.constant 197 : index
    %600 = memref.load %arg2[%c197] : memref<252xf32, #tpu.memory_space<smem>>
    %601 = vector.broadcast %600 : f32 to vector<24x24xf32>
    %602 = arith.mulf %601, %571 : vector<24x24xf32>
    %603 = arith.addf %545, %602 : vector<24x24xf32>
    %c206 = arith.constant 206 : index
    %604 = memref.load %arg2[%c206] : memref<252xf32, #tpu.memory_space<smem>>
    %605 = vector.broadcast %604 : f32 to vector<24x24xf32>
    %606 = arith.mulf %605, %571 : vector<24x24xf32>
    %607 = arith.addf %549, %606 : vector<24x24xf32>
    %c215 = arith.constant 215 : index
    %608 = memref.load %arg2[%c215] : memref<252xf32, #tpu.memory_space<smem>>
    %609 = vector.broadcast %608 : f32 to vector<24x24xf32>
    %610 = arith.mulf %609, %571 : vector<24x24xf32>
    %611 = arith.addf %553, %610 : vector<24x24xf32>
    %c224 = arith.constant 224 : index
    %612 = memref.load %arg2[%c224] : memref<252xf32, #tpu.memory_space<smem>>
    %613 = vector.broadcast %612 : f32 to vector<24x24xf32>
    %614 = arith.mulf %613, %571 : vector<24x24xf32>
    %615 = arith.addf %557, %614 : vector<24x24xf32>
    %c233 = arith.constant 233 : index
    %616 = memref.load %arg2[%c233] : memref<252xf32, #tpu.memory_space<smem>>
    %617 = vector.broadcast %616 : f32 to vector<24x24xf32>
    %618 = arith.mulf %617, %571 : vector<24x24xf32>
    %619 = arith.addf %561, %618 : vector<24x24xf32>
    %c242 = arith.constant 242 : index
    %620 = memref.load %arg2[%c242] : memref<252xf32, #tpu.memory_space<smem>>
    %621 = vector.broadcast %620 : f32 to vector<24x24xf32>
    %622 = arith.mulf %621, %571 : vector<24x24xf32>
    %623 = arith.addf %565, %622 : vector<24x24xf32>
    %c251 = arith.constant 251 : index
    %624 = memref.load %arg2[%c251] : memref<252xf32, #tpu.memory_space<smem>>
    %625 = vector.broadcast %624 : f32 to vector<24x24xf32>
    %626 = arith.mulf %625, %571 : vector<24x24xf32>
    %627 = arith.addf %569, %626 : vector<24x24xf32>
    %628 = vector.extract_strided_slice %570 {offsets = [0, 1], sizes = [24, 24], strides = [1, 1]} : vector<24x26xf32> to vector<24x24xf32>
    %c133 = arith.constant 133 : index
    %629 = memref.load %arg2[%c133] : memref<252xf32, #tpu.memory_space<smem>>
    %630 = vector.broadcast %629 : f32 to vector<24x24xf32>
    %631 = arith.mulf %630, %628 : vector<24x24xf32>
    %632 = arith.addf %575, %631 : vector<24x24xf32>
    %c142 = arith.constant 142 : index
    %633 = memref.load %arg2[%c142] : memref<252xf32, #tpu.memory_space<smem>>
    %634 = vector.broadcast %633 : f32 to vector<24x24xf32>
    %635 = arith.mulf %634, %628 : vector<24x24xf32>
    %636 = arith.addf %579, %635 : vector<24x24xf32>
    %c151 = arith.constant 151 : index
    %637 = memref.load %arg2[%c151] : memref<252xf32, #tpu.memory_space<smem>>
    %638 = vector.broadcast %637 : f32 to vector<24x24xf32>
    %639 = arith.mulf %638, %628 : vector<24x24xf32>
    %640 = arith.addf %583, %639 : vector<24x24xf32>
    %c160 = arith.constant 160 : index
    %641 = memref.load %arg2[%c160] : memref<252xf32, #tpu.memory_space<smem>>
    %642 = vector.broadcast %641 : f32 to vector<24x24xf32>
    %643 = arith.mulf %642, %628 : vector<24x24xf32>
    %644 = arith.addf %587, %643 : vector<24x24xf32>
    %c169 = arith.constant 169 : index
    %645 = memref.load %arg2[%c169] : memref<252xf32, #tpu.memory_space<smem>>
    %646 = vector.broadcast %645 : f32 to vector<24x24xf32>
    %647 = arith.mulf %646, %628 : vector<24x24xf32>
    %648 = arith.addf %591, %647 : vector<24x24xf32>
    %c178 = arith.constant 178 : index
    %649 = memref.load %arg2[%c178] : memref<252xf32, #tpu.memory_space<smem>>
    %650 = vector.broadcast %649 : f32 to vector<24x24xf32>
    %651 = arith.mulf %650, %628 : vector<24x24xf32>
    %652 = arith.addf %595, %651 : vector<24x24xf32>
    %c187 = arith.constant 187 : index
    %653 = memref.load %arg2[%c187] : memref<252xf32, #tpu.memory_space<smem>>
    %654 = vector.broadcast %653 : f32 to vector<24x24xf32>
    %655 = arith.mulf %654, %628 : vector<24x24xf32>
    %656 = arith.addf %599, %655 : vector<24x24xf32>
    %c196 = arith.constant 196 : index
    %657 = memref.load %arg2[%c196] : memref<252xf32, #tpu.memory_space<smem>>
    %658 = vector.broadcast %657 : f32 to vector<24x24xf32>
    %659 = arith.mulf %658, %628 : vector<24x24xf32>
    %660 = arith.addf %603, %659 : vector<24x24xf32>
    %c205 = arith.constant 205 : index
    %661 = memref.load %arg2[%c205] : memref<252xf32, #tpu.memory_space<smem>>
    %662 = vector.broadcast %661 : f32 to vector<24x24xf32>
    %663 = arith.mulf %662, %628 : vector<24x24xf32>
    %664 = arith.addf %607, %663 : vector<24x24xf32>
    %c214 = arith.constant 214 : index
    %665 = memref.load %arg2[%c214] : memref<252xf32, #tpu.memory_space<smem>>
    %666 = vector.broadcast %665 : f32 to vector<24x24xf32>
    %667 = arith.mulf %666, %628 : vector<24x24xf32>
    %668 = arith.addf %611, %667 : vector<24x24xf32>
    %c223 = arith.constant 223 : index
    %669 = memref.load %arg2[%c223] : memref<252xf32, #tpu.memory_space<smem>>
    %670 = vector.broadcast %669 : f32 to vector<24x24xf32>
    %671 = arith.mulf %670, %628 : vector<24x24xf32>
    %672 = arith.addf %615, %671 : vector<24x24xf32>
    %c232 = arith.constant 232 : index
    %673 = memref.load %arg2[%c232] : memref<252xf32, #tpu.memory_space<smem>>
    %674 = vector.broadcast %673 : f32 to vector<24x24xf32>
    %675 = arith.mulf %674, %628 : vector<24x24xf32>
    %676 = arith.addf %619, %675 : vector<24x24xf32>
    %c241 = arith.constant 241 : index
    %677 = memref.load %arg2[%c241] : memref<252xf32, #tpu.memory_space<smem>>
    %678 = vector.broadcast %677 : f32 to vector<24x24xf32>
    %679 = arith.mulf %678, %628 : vector<24x24xf32>
    %680 = arith.addf %623, %679 : vector<24x24xf32>
    %c250 = arith.constant 250 : index
    %681 = memref.load %arg2[%c250] : memref<252xf32, #tpu.memory_space<smem>>
    %682 = vector.broadcast %681 : f32 to vector<24x24xf32>
    %683 = arith.mulf %682, %628 : vector<24x24xf32>
    %684 = arith.addf %627, %683 : vector<24x24xf32>
    %685 = vector.extract_strided_slice %570 {offsets = [0, 2], sizes = [24, 24], strides = [1, 1]} : vector<24x26xf32> to vector<24x24xf32>
    %c132 = arith.constant 132 : index
    %686 = memref.load %arg2[%c132] : memref<252xf32, #tpu.memory_space<smem>>
    %687 = vector.broadcast %686 : f32 to vector<24x24xf32>
    %688 = arith.mulf %687, %685 : vector<24x24xf32>
    %689 = arith.addf %632, %688 : vector<24x24xf32>
    %c141 = arith.constant 141 : index
    %690 = memref.load %arg2[%c141] : memref<252xf32, #tpu.memory_space<smem>>
    %691 = vector.broadcast %690 : f32 to vector<24x24xf32>
    %692 = arith.mulf %691, %685 : vector<24x24xf32>
    %693 = arith.addf %636, %692 : vector<24x24xf32>
    %c150 = arith.constant 150 : index
    %694 = memref.load %arg2[%c150] : memref<252xf32, #tpu.memory_space<smem>>
    %695 = vector.broadcast %694 : f32 to vector<24x24xf32>
    %696 = arith.mulf %695, %685 : vector<24x24xf32>
    %697 = arith.addf %640, %696 : vector<24x24xf32>
    %c159 = arith.constant 159 : index
    %698 = memref.load %arg2[%c159] : memref<252xf32, #tpu.memory_space<smem>>
    %699 = vector.broadcast %698 : f32 to vector<24x24xf32>
    %700 = arith.mulf %699, %685 : vector<24x24xf32>
    %701 = arith.addf %644, %700 : vector<24x24xf32>
    %c168 = arith.constant 168 : index
    %702 = memref.load %arg2[%c168] : memref<252xf32, #tpu.memory_space<smem>>
    %703 = vector.broadcast %702 : f32 to vector<24x24xf32>
    %704 = arith.mulf %703, %685 : vector<24x24xf32>
    %705 = arith.addf %648, %704 : vector<24x24xf32>
    %c177 = arith.constant 177 : index
    %706 = memref.load %arg2[%c177] : memref<252xf32, #tpu.memory_space<smem>>
    %707 = vector.broadcast %706 : f32 to vector<24x24xf32>
    %708 = arith.mulf %707, %685 : vector<24x24xf32>
    %709 = arith.addf %652, %708 : vector<24x24xf32>
    %c186 = arith.constant 186 : index
    %710 = memref.load %arg2[%c186] : memref<252xf32, #tpu.memory_space<smem>>
    %711 = vector.broadcast %710 : f32 to vector<24x24xf32>
    %712 = arith.mulf %711, %685 : vector<24x24xf32>
    %713 = arith.addf %656, %712 : vector<24x24xf32>
    %c195 = arith.constant 195 : index
    %714 = memref.load %arg2[%c195] : memref<252xf32, #tpu.memory_space<smem>>
    %715 = vector.broadcast %714 : f32 to vector<24x24xf32>
    %716 = arith.mulf %715, %685 : vector<24x24xf32>
    %717 = arith.addf %660, %716 : vector<24x24xf32>
    %c204 = arith.constant 204 : index
    %718 = memref.load %arg2[%c204] : memref<252xf32, #tpu.memory_space<smem>>
    %719 = vector.broadcast %718 : f32 to vector<24x24xf32>
    %720 = arith.mulf %719, %685 : vector<24x24xf32>
    %721 = arith.addf %664, %720 : vector<24x24xf32>
    %c213 = arith.constant 213 : index
    %722 = memref.load %arg2[%c213] : memref<252xf32, #tpu.memory_space<smem>>
    %723 = vector.broadcast %722 : f32 to vector<24x24xf32>
    %724 = arith.mulf %723, %685 : vector<24x24xf32>
    %725 = arith.addf %668, %724 : vector<24x24xf32>
    %c222 = arith.constant 222 : index
    %726 = memref.load %arg2[%c222] : memref<252xf32, #tpu.memory_space<smem>>
    %727 = vector.broadcast %726 : f32 to vector<24x24xf32>
    %728 = arith.mulf %727, %685 : vector<24x24xf32>
    %729 = arith.addf %672, %728 : vector<24x24xf32>
    %c231 = arith.constant 231 : index
    %730 = memref.load %arg2[%c231] : memref<252xf32, #tpu.memory_space<smem>>
    %731 = vector.broadcast %730 : f32 to vector<24x24xf32>
    %732 = arith.mulf %731, %685 : vector<24x24xf32>
    %733 = arith.addf %676, %732 : vector<24x24xf32>
    %c240 = arith.constant 240 : index
    %734 = memref.load %arg2[%c240] : memref<252xf32, #tpu.memory_space<smem>>
    %735 = vector.broadcast %734 : f32 to vector<24x24xf32>
    %736 = arith.mulf %735, %685 : vector<24x24xf32>
    %737 = arith.addf %680, %736 : vector<24x24xf32>
    %c249 = arith.constant 249 : index
    %738 = memref.load %arg2[%c249] : memref<252xf32, #tpu.memory_space<smem>>
    %739 = vector.broadcast %738 : f32 to vector<24x24xf32>
    %740 = arith.mulf %739, %685 : vector<24x24xf32>
    %741 = arith.addf %684, %740 : vector<24x24xf32>
    %742 = vector.extract_strided_slice %25 {offsets = [1, 0], sizes = [24, 26], strides = [1, 1]} : vector<26x26xf32> to vector<24x26xf32>
    %743 = vector.extract_strided_slice %742 {offsets = [0, 0], sizes = [24, 24], strides = [1, 1]} : vector<24x26xf32> to vector<24x24xf32>
    %c131 = arith.constant 131 : index
    %744 = memref.load %arg2[%c131] : memref<252xf32, #tpu.memory_space<smem>>
    %745 = vector.broadcast %744 : f32 to vector<24x24xf32>
    %746 = arith.mulf %745, %743 : vector<24x24xf32>
    %747 = arith.addf %689, %746 : vector<24x24xf32>
    %c140 = arith.constant 140 : index
    %748 = memref.load %arg2[%c140] : memref<252xf32, #tpu.memory_space<smem>>
    %749 = vector.broadcast %748 : f32 to vector<24x24xf32>
    %750 = arith.mulf %749, %743 : vector<24x24xf32>
    %751 = arith.addf %693, %750 : vector<24x24xf32>
    %c149 = arith.constant 149 : index
    %752 = memref.load %arg2[%c149] : memref<252xf32, #tpu.memory_space<smem>>
    %753 = vector.broadcast %752 : f32 to vector<24x24xf32>
    %754 = arith.mulf %753, %743 : vector<24x24xf32>
    %755 = arith.addf %697, %754 : vector<24x24xf32>
    %c158 = arith.constant 158 : index
    %756 = memref.load %arg2[%c158] : memref<252xf32, #tpu.memory_space<smem>>
    %757 = vector.broadcast %756 : f32 to vector<24x24xf32>
    %758 = arith.mulf %757, %743 : vector<24x24xf32>
    %759 = arith.addf %701, %758 : vector<24x24xf32>
    %c167 = arith.constant 167 : index
    %760 = memref.load %arg2[%c167] : memref<252xf32, #tpu.memory_space<smem>>
    %761 = vector.broadcast %760 : f32 to vector<24x24xf32>
    %762 = arith.mulf %761, %743 : vector<24x24xf32>
    %763 = arith.addf %705, %762 : vector<24x24xf32>
    %c176 = arith.constant 176 : index
    %764 = memref.load %arg2[%c176] : memref<252xf32, #tpu.memory_space<smem>>
    %765 = vector.broadcast %764 : f32 to vector<24x24xf32>
    %766 = arith.mulf %765, %743 : vector<24x24xf32>
    %767 = arith.addf %709, %766 : vector<24x24xf32>
    %c185 = arith.constant 185 : index
    %768 = memref.load %arg2[%c185] : memref<252xf32, #tpu.memory_space<smem>>
    %769 = vector.broadcast %768 : f32 to vector<24x24xf32>
    %770 = arith.mulf %769, %743 : vector<24x24xf32>
    %771 = arith.addf %713, %770 : vector<24x24xf32>
    %c194 = arith.constant 194 : index
    %772 = memref.load %arg2[%c194] : memref<252xf32, #tpu.memory_space<smem>>
    %773 = vector.broadcast %772 : f32 to vector<24x24xf32>
    %774 = arith.mulf %773, %743 : vector<24x24xf32>
    %775 = arith.addf %717, %774 : vector<24x24xf32>
    %c203 = arith.constant 203 : index
    %776 = memref.load %arg2[%c203] : memref<252xf32, #tpu.memory_space<smem>>
    %777 = vector.broadcast %776 : f32 to vector<24x24xf32>
    %778 = arith.mulf %777, %743 : vector<24x24xf32>
    %779 = arith.addf %721, %778 : vector<24x24xf32>
    %c212 = arith.constant 212 : index
    %780 = memref.load %arg2[%c212] : memref<252xf32, #tpu.memory_space<smem>>
    %781 = vector.broadcast %780 : f32 to vector<24x24xf32>
    %782 = arith.mulf %781, %743 : vector<24x24xf32>
    %783 = arith.addf %725, %782 : vector<24x24xf32>
    %c221 = arith.constant 221 : index
    %784 = memref.load %arg2[%c221] : memref<252xf32, #tpu.memory_space<smem>>
    %785 = vector.broadcast %784 : f32 to vector<24x24xf32>
    %786 = arith.mulf %785, %743 : vector<24x24xf32>
    %787 = arith.addf %729, %786 : vector<24x24xf32>
    %c230 = arith.constant 230 : index
    %788 = memref.load %arg2[%c230] : memref<252xf32, #tpu.memory_space<smem>>
    %789 = vector.broadcast %788 : f32 to vector<24x24xf32>
    %790 = arith.mulf %789, %743 : vector<24x24xf32>
    %791 = arith.addf %733, %790 : vector<24x24xf32>
    %c239 = arith.constant 239 : index
    %792 = memref.load %arg2[%c239] : memref<252xf32, #tpu.memory_space<smem>>
    %793 = vector.broadcast %792 : f32 to vector<24x24xf32>
    %794 = arith.mulf %793, %743 : vector<24x24xf32>
    %795 = arith.addf %737, %794 : vector<24x24xf32>
    %c248 = arith.constant 248 : index
    %796 = memref.load %arg2[%c248] : memref<252xf32, #tpu.memory_space<smem>>
    %797 = vector.broadcast %796 : f32 to vector<24x24xf32>
    %798 = arith.mulf %797, %743 : vector<24x24xf32>
    %799 = arith.addf %741, %798 : vector<24x24xf32>
    %800 = vector.extract_strided_slice %742 {offsets = [0, 1], sizes = [24, 24], strides = [1, 1]} : vector<24x26xf32> to vector<24x24xf32>
    %c130 = arith.constant 130 : index
    %801 = memref.load %arg2[%c130] : memref<252xf32, #tpu.memory_space<smem>>
    %802 = vector.broadcast %801 : f32 to vector<24x24xf32>
    %803 = arith.mulf %802, %800 : vector<24x24xf32>
    %804 = arith.addf %747, %803 : vector<24x24xf32>
    %c139 = arith.constant 139 : index
    %805 = memref.load %arg2[%c139] : memref<252xf32, #tpu.memory_space<smem>>
    %806 = vector.broadcast %805 : f32 to vector<24x24xf32>
    %807 = arith.mulf %806, %800 : vector<24x24xf32>
    %808 = arith.addf %751, %807 : vector<24x24xf32>
    %c148 = arith.constant 148 : index
    %809 = memref.load %arg2[%c148] : memref<252xf32, #tpu.memory_space<smem>>
    %810 = vector.broadcast %809 : f32 to vector<24x24xf32>
    %811 = arith.mulf %810, %800 : vector<24x24xf32>
    %812 = arith.addf %755, %811 : vector<24x24xf32>
    %c157 = arith.constant 157 : index
    %813 = memref.load %arg2[%c157] : memref<252xf32, #tpu.memory_space<smem>>
    %814 = vector.broadcast %813 : f32 to vector<24x24xf32>
    %815 = arith.mulf %814, %800 : vector<24x24xf32>
    %816 = arith.addf %759, %815 : vector<24x24xf32>
    %c166 = arith.constant 166 : index
    %817 = memref.load %arg2[%c166] : memref<252xf32, #tpu.memory_space<smem>>
    %818 = vector.broadcast %817 : f32 to vector<24x24xf32>
    %819 = arith.mulf %818, %800 : vector<24x24xf32>
    %820 = arith.addf %763, %819 : vector<24x24xf32>
    %c175 = arith.constant 175 : index
    %821 = memref.load %arg2[%c175] : memref<252xf32, #tpu.memory_space<smem>>
    %822 = vector.broadcast %821 : f32 to vector<24x24xf32>
    %823 = arith.mulf %822, %800 : vector<24x24xf32>
    %824 = arith.addf %767, %823 : vector<24x24xf32>
    %c184 = arith.constant 184 : index
    %825 = memref.load %arg2[%c184] : memref<252xf32, #tpu.memory_space<smem>>
    %826 = vector.broadcast %825 : f32 to vector<24x24xf32>
    %827 = arith.mulf %826, %800 : vector<24x24xf32>
    %828 = arith.addf %771, %827 : vector<24x24xf32>
    %c193 = arith.constant 193 : index
    %829 = memref.load %arg2[%c193] : memref<252xf32, #tpu.memory_space<smem>>
    %830 = vector.broadcast %829 : f32 to vector<24x24xf32>
    %831 = arith.mulf %830, %800 : vector<24x24xf32>
    %832 = arith.addf %775, %831 : vector<24x24xf32>
    %c202 = arith.constant 202 : index
    %833 = memref.load %arg2[%c202] : memref<252xf32, #tpu.memory_space<smem>>
    %834 = vector.broadcast %833 : f32 to vector<24x24xf32>
    %835 = arith.mulf %834, %800 : vector<24x24xf32>
    %836 = arith.addf %779, %835 : vector<24x24xf32>
    %c211 = arith.constant 211 : index
    %837 = memref.load %arg2[%c211] : memref<252xf32, #tpu.memory_space<smem>>
    %838 = vector.broadcast %837 : f32 to vector<24x24xf32>
    %839 = arith.mulf %838, %800 : vector<24x24xf32>
    %840 = arith.addf %783, %839 : vector<24x24xf32>
    %c220 = arith.constant 220 : index
    %841 = memref.load %arg2[%c220] : memref<252xf32, #tpu.memory_space<smem>>
    %842 = vector.broadcast %841 : f32 to vector<24x24xf32>
    %843 = arith.mulf %842, %800 : vector<24x24xf32>
    %844 = arith.addf %787, %843 : vector<24x24xf32>
    %c229 = arith.constant 229 : index
    %845 = memref.load %arg2[%c229] : memref<252xf32, #tpu.memory_space<smem>>
    %846 = vector.broadcast %845 : f32 to vector<24x24xf32>
    %847 = arith.mulf %846, %800 : vector<24x24xf32>
    %848 = arith.addf %791, %847 : vector<24x24xf32>
    %c238 = arith.constant 238 : index
    %849 = memref.load %arg2[%c238] : memref<252xf32, #tpu.memory_space<smem>>
    %850 = vector.broadcast %849 : f32 to vector<24x24xf32>
    %851 = arith.mulf %850, %800 : vector<24x24xf32>
    %852 = arith.addf %795, %851 : vector<24x24xf32>
    %c247 = arith.constant 247 : index
    %853 = memref.load %arg2[%c247] : memref<252xf32, #tpu.memory_space<smem>>
    %854 = vector.broadcast %853 : f32 to vector<24x24xf32>
    %855 = arith.mulf %854, %800 : vector<24x24xf32>
    %856 = arith.addf %799, %855 : vector<24x24xf32>
    %857 = vector.extract_strided_slice %742 {offsets = [0, 2], sizes = [24, 24], strides = [1, 1]} : vector<24x26xf32> to vector<24x24xf32>
    %c129 = arith.constant 129 : index
    %858 = memref.load %arg2[%c129] : memref<252xf32, #tpu.memory_space<smem>>
    %859 = vector.broadcast %858 : f32 to vector<24x24xf32>
    %860 = arith.mulf %859, %857 : vector<24x24xf32>
    %861 = arith.addf %804, %860 : vector<24x24xf32>
    %c138 = arith.constant 138 : index
    %862 = memref.load %arg2[%c138] : memref<252xf32, #tpu.memory_space<smem>>
    %863 = vector.broadcast %862 : f32 to vector<24x24xf32>
    %864 = arith.mulf %863, %857 : vector<24x24xf32>
    %865 = arith.addf %808, %864 : vector<24x24xf32>
    %c147 = arith.constant 147 : index
    %866 = memref.load %arg2[%c147] : memref<252xf32, #tpu.memory_space<smem>>
    %867 = vector.broadcast %866 : f32 to vector<24x24xf32>
    %868 = arith.mulf %867, %857 : vector<24x24xf32>
    %869 = arith.addf %812, %868 : vector<24x24xf32>
    %c156 = arith.constant 156 : index
    %870 = memref.load %arg2[%c156] : memref<252xf32, #tpu.memory_space<smem>>
    %871 = vector.broadcast %870 : f32 to vector<24x24xf32>
    %872 = arith.mulf %871, %857 : vector<24x24xf32>
    %873 = arith.addf %816, %872 : vector<24x24xf32>
    %c165 = arith.constant 165 : index
    %874 = memref.load %arg2[%c165] : memref<252xf32, #tpu.memory_space<smem>>
    %875 = vector.broadcast %874 : f32 to vector<24x24xf32>
    %876 = arith.mulf %875, %857 : vector<24x24xf32>
    %877 = arith.addf %820, %876 : vector<24x24xf32>
    %c174 = arith.constant 174 : index
    %878 = memref.load %arg2[%c174] : memref<252xf32, #tpu.memory_space<smem>>
    %879 = vector.broadcast %878 : f32 to vector<24x24xf32>
    %880 = arith.mulf %879, %857 : vector<24x24xf32>
    %881 = arith.addf %824, %880 : vector<24x24xf32>
    %c183 = arith.constant 183 : index
    %882 = memref.load %arg2[%c183] : memref<252xf32, #tpu.memory_space<smem>>
    %883 = vector.broadcast %882 : f32 to vector<24x24xf32>
    %884 = arith.mulf %883, %857 : vector<24x24xf32>
    %885 = arith.addf %828, %884 : vector<24x24xf32>
    %c192 = arith.constant 192 : index
    %886 = memref.load %arg2[%c192] : memref<252xf32, #tpu.memory_space<smem>>
    %887 = vector.broadcast %886 : f32 to vector<24x24xf32>
    %888 = arith.mulf %887, %857 : vector<24x24xf32>
    %889 = arith.addf %832, %888 : vector<24x24xf32>
    %c201 = arith.constant 201 : index
    %890 = memref.load %arg2[%c201] : memref<252xf32, #tpu.memory_space<smem>>
    %891 = vector.broadcast %890 : f32 to vector<24x24xf32>
    %892 = arith.mulf %891, %857 : vector<24x24xf32>
    %893 = arith.addf %836, %892 : vector<24x24xf32>
    %c210 = arith.constant 210 : index
    %894 = memref.load %arg2[%c210] : memref<252xf32, #tpu.memory_space<smem>>
    %895 = vector.broadcast %894 : f32 to vector<24x24xf32>
    %896 = arith.mulf %895, %857 : vector<24x24xf32>
    %897 = arith.addf %840, %896 : vector<24x24xf32>
    %c219 = arith.constant 219 : index
    %898 = memref.load %arg2[%c219] : memref<252xf32, #tpu.memory_space<smem>>
    %899 = vector.broadcast %898 : f32 to vector<24x24xf32>
    %900 = arith.mulf %899, %857 : vector<24x24xf32>
    %901 = arith.addf %844, %900 : vector<24x24xf32>
    %c228 = arith.constant 228 : index
    %902 = memref.load %arg2[%c228] : memref<252xf32, #tpu.memory_space<smem>>
    %903 = vector.broadcast %902 : f32 to vector<24x24xf32>
    %904 = arith.mulf %903, %857 : vector<24x24xf32>
    %905 = arith.addf %848, %904 : vector<24x24xf32>
    %c237 = arith.constant 237 : index
    %906 = memref.load %arg2[%c237] : memref<252xf32, #tpu.memory_space<smem>>
    %907 = vector.broadcast %906 : f32 to vector<24x24xf32>
    %908 = arith.mulf %907, %857 : vector<24x24xf32>
    %909 = arith.addf %852, %908 : vector<24x24xf32>
    %c246 = arith.constant 246 : index
    %910 = memref.load %arg2[%c246] : memref<252xf32, #tpu.memory_space<smem>>
    %911 = vector.broadcast %910 : f32 to vector<24x24xf32>
    %912 = arith.mulf %911, %857 : vector<24x24xf32>
    %913 = arith.addf %856, %912 : vector<24x24xf32>
    %914 = vector.extract_strided_slice %25 {offsets = [2, 0], sizes = [24, 26], strides = [1, 1]} : vector<26x26xf32> to vector<24x26xf32>
    %915 = vector.extract_strided_slice %914 {offsets = [0, 0], sizes = [24, 24], strides = [1, 1]} : vector<24x26xf32> to vector<24x24xf32>
    %c128 = arith.constant 128 : index
    %916 = memref.load %arg2[%c128] : memref<252xf32, #tpu.memory_space<smem>>
    %917 = vector.broadcast %916 : f32 to vector<24x24xf32>
    %918 = arith.mulf %917, %915 : vector<24x24xf32>
    %919 = arith.addf %861, %918 : vector<24x24xf32>
    %c137 = arith.constant 137 : index
    %920 = memref.load %arg2[%c137] : memref<252xf32, #tpu.memory_space<smem>>
    %921 = vector.broadcast %920 : f32 to vector<24x24xf32>
    %922 = arith.mulf %921, %915 : vector<24x24xf32>
    %923 = arith.addf %865, %922 : vector<24x24xf32>
    %c146 = arith.constant 146 : index
    %924 = memref.load %arg2[%c146] : memref<252xf32, #tpu.memory_space<smem>>
    %925 = vector.broadcast %924 : f32 to vector<24x24xf32>
    %926 = arith.mulf %925, %915 : vector<24x24xf32>
    %927 = arith.addf %869, %926 : vector<24x24xf32>
    %c155 = arith.constant 155 : index
    %928 = memref.load %arg2[%c155] : memref<252xf32, #tpu.memory_space<smem>>
    %929 = vector.broadcast %928 : f32 to vector<24x24xf32>
    %930 = arith.mulf %929, %915 : vector<24x24xf32>
    %931 = arith.addf %873, %930 : vector<24x24xf32>
    %c164 = arith.constant 164 : index
    %932 = memref.load %arg2[%c164] : memref<252xf32, #tpu.memory_space<smem>>
    %933 = vector.broadcast %932 : f32 to vector<24x24xf32>
    %934 = arith.mulf %933, %915 : vector<24x24xf32>
    %935 = arith.addf %877, %934 : vector<24x24xf32>
    %c173 = arith.constant 173 : index
    %936 = memref.load %arg2[%c173] : memref<252xf32, #tpu.memory_space<smem>>
    %937 = vector.broadcast %936 : f32 to vector<24x24xf32>
    %938 = arith.mulf %937, %915 : vector<24x24xf32>
    %939 = arith.addf %881, %938 : vector<24x24xf32>
    %c182 = arith.constant 182 : index
    %940 = memref.load %arg2[%c182] : memref<252xf32, #tpu.memory_space<smem>>
    %941 = vector.broadcast %940 : f32 to vector<24x24xf32>
    %942 = arith.mulf %941, %915 : vector<24x24xf32>
    %943 = arith.addf %885, %942 : vector<24x24xf32>
    %c191 = arith.constant 191 : index
    %944 = memref.load %arg2[%c191] : memref<252xf32, #tpu.memory_space<smem>>
    %945 = vector.broadcast %944 : f32 to vector<24x24xf32>
    %946 = arith.mulf %945, %915 : vector<24x24xf32>
    %947 = arith.addf %889, %946 : vector<24x24xf32>
    %c200 = arith.constant 200 : index
    %948 = memref.load %arg2[%c200] : memref<252xf32, #tpu.memory_space<smem>>
    %949 = vector.broadcast %948 : f32 to vector<24x24xf32>
    %950 = arith.mulf %949, %915 : vector<24x24xf32>
    %951 = arith.addf %893, %950 : vector<24x24xf32>
    %c209 = arith.constant 209 : index
    %952 = memref.load %arg2[%c209] : memref<252xf32, #tpu.memory_space<smem>>
    %953 = vector.broadcast %952 : f32 to vector<24x24xf32>
    %954 = arith.mulf %953, %915 : vector<24x24xf32>
    %955 = arith.addf %897, %954 : vector<24x24xf32>
    %c218 = arith.constant 218 : index
    %956 = memref.load %arg2[%c218] : memref<252xf32, #tpu.memory_space<smem>>
    %957 = vector.broadcast %956 : f32 to vector<24x24xf32>
    %958 = arith.mulf %957, %915 : vector<24x24xf32>
    %959 = arith.addf %901, %958 : vector<24x24xf32>
    %c227 = arith.constant 227 : index
    %960 = memref.load %arg2[%c227] : memref<252xf32, #tpu.memory_space<smem>>
    %961 = vector.broadcast %960 : f32 to vector<24x24xf32>
    %962 = arith.mulf %961, %915 : vector<24x24xf32>
    %963 = arith.addf %905, %962 : vector<24x24xf32>
    %c236 = arith.constant 236 : index
    %964 = memref.load %arg2[%c236] : memref<252xf32, #tpu.memory_space<smem>>
    %965 = vector.broadcast %964 : f32 to vector<24x24xf32>
    %966 = arith.mulf %965, %915 : vector<24x24xf32>
    %967 = arith.addf %909, %966 : vector<24x24xf32>
    %c245 = arith.constant 245 : index
    %968 = memref.load %arg2[%c245] : memref<252xf32, #tpu.memory_space<smem>>
    %969 = vector.broadcast %968 : f32 to vector<24x24xf32>
    %970 = arith.mulf %969, %915 : vector<24x24xf32>
    %971 = arith.addf %913, %970 : vector<24x24xf32>
    %972 = vector.extract_strided_slice %914 {offsets = [0, 1], sizes = [24, 24], strides = [1, 1]} : vector<24x26xf32> to vector<24x24xf32>
    %c127 = arith.constant 127 : index
    %973 = memref.load %arg2[%c127] : memref<252xf32, #tpu.memory_space<smem>>
    %974 = vector.broadcast %973 : f32 to vector<24x24xf32>
    %975 = arith.mulf %974, %972 : vector<24x24xf32>
    %976 = arith.addf %919, %975 : vector<24x24xf32>
    %c136 = arith.constant 136 : index
    %977 = memref.load %arg2[%c136] : memref<252xf32, #tpu.memory_space<smem>>
    %978 = vector.broadcast %977 : f32 to vector<24x24xf32>
    %979 = arith.mulf %978, %972 : vector<24x24xf32>
    %980 = arith.addf %923, %979 : vector<24x24xf32>
    %c145 = arith.constant 145 : index
    %981 = memref.load %arg2[%c145] : memref<252xf32, #tpu.memory_space<smem>>
    %982 = vector.broadcast %981 : f32 to vector<24x24xf32>
    %983 = arith.mulf %982, %972 : vector<24x24xf32>
    %984 = arith.addf %927, %983 : vector<24x24xf32>
    %c154 = arith.constant 154 : index
    %985 = memref.load %arg2[%c154] : memref<252xf32, #tpu.memory_space<smem>>
    %986 = vector.broadcast %985 : f32 to vector<24x24xf32>
    %987 = arith.mulf %986, %972 : vector<24x24xf32>
    %988 = arith.addf %931, %987 : vector<24x24xf32>
    %c163 = arith.constant 163 : index
    %989 = memref.load %arg2[%c163] : memref<252xf32, #tpu.memory_space<smem>>
    %990 = vector.broadcast %989 : f32 to vector<24x24xf32>
    %991 = arith.mulf %990, %972 : vector<24x24xf32>
    %992 = arith.addf %935, %991 : vector<24x24xf32>
    %c172 = arith.constant 172 : index
    %993 = memref.load %arg2[%c172] : memref<252xf32, #tpu.memory_space<smem>>
    %994 = vector.broadcast %993 : f32 to vector<24x24xf32>
    %995 = arith.mulf %994, %972 : vector<24x24xf32>
    %996 = arith.addf %939, %995 : vector<24x24xf32>
    %c181 = arith.constant 181 : index
    %997 = memref.load %arg2[%c181] : memref<252xf32, #tpu.memory_space<smem>>
    %998 = vector.broadcast %997 : f32 to vector<24x24xf32>
    %999 = arith.mulf %998, %972 : vector<24x24xf32>
    %1000 = arith.addf %943, %999 : vector<24x24xf32>
    %c190 = arith.constant 190 : index
    %1001 = memref.load %arg2[%c190] : memref<252xf32, #tpu.memory_space<smem>>
    %1002 = vector.broadcast %1001 : f32 to vector<24x24xf32>
    %1003 = arith.mulf %1002, %972 : vector<24x24xf32>
    %1004 = arith.addf %947, %1003 : vector<24x24xf32>
    %c199 = arith.constant 199 : index
    %1005 = memref.load %arg2[%c199] : memref<252xf32, #tpu.memory_space<smem>>
    %1006 = vector.broadcast %1005 : f32 to vector<24x24xf32>
    %1007 = arith.mulf %1006, %972 : vector<24x24xf32>
    %1008 = arith.addf %951, %1007 : vector<24x24xf32>
    %c208 = arith.constant 208 : index
    %1009 = memref.load %arg2[%c208] : memref<252xf32, #tpu.memory_space<smem>>
    %1010 = vector.broadcast %1009 : f32 to vector<24x24xf32>
    %1011 = arith.mulf %1010, %972 : vector<24x24xf32>
    %1012 = arith.addf %955, %1011 : vector<24x24xf32>
    %c217 = arith.constant 217 : index
    %1013 = memref.load %arg2[%c217] : memref<252xf32, #tpu.memory_space<smem>>
    %1014 = vector.broadcast %1013 : f32 to vector<24x24xf32>
    %1015 = arith.mulf %1014, %972 : vector<24x24xf32>
    %1016 = arith.addf %959, %1015 : vector<24x24xf32>
    %c226 = arith.constant 226 : index
    %1017 = memref.load %arg2[%c226] : memref<252xf32, #tpu.memory_space<smem>>
    %1018 = vector.broadcast %1017 : f32 to vector<24x24xf32>
    %1019 = arith.mulf %1018, %972 : vector<24x24xf32>
    %1020 = arith.addf %963, %1019 : vector<24x24xf32>
    %c235 = arith.constant 235 : index
    %1021 = memref.load %arg2[%c235] : memref<252xf32, #tpu.memory_space<smem>>
    %1022 = vector.broadcast %1021 : f32 to vector<24x24xf32>
    %1023 = arith.mulf %1022, %972 : vector<24x24xf32>
    %1024 = arith.addf %967, %1023 : vector<24x24xf32>
    %c244 = arith.constant 244 : index
    %1025 = memref.load %arg2[%c244] : memref<252xf32, #tpu.memory_space<smem>>
    %1026 = vector.broadcast %1025 : f32 to vector<24x24xf32>
    %1027 = arith.mulf %1026, %972 : vector<24x24xf32>
    %1028 = arith.addf %971, %1027 : vector<24x24xf32>
    %1029 = vector.extract_strided_slice %914 {offsets = [0, 2], sizes = [24, 24], strides = [1, 1]} : vector<24x26xf32> to vector<24x24xf32>
    %c126 = arith.constant 126 : index
    %1030 = memref.load %arg2[%c126] : memref<252xf32, #tpu.memory_space<smem>>
    %1031 = vector.broadcast %1030 : f32 to vector<24x24xf32>
    %1032 = arith.mulf %1031, %1029 : vector<24x24xf32>
    %1033 = arith.addf %976, %1032 : vector<24x24xf32>
    %c135 = arith.constant 135 : index
    %1034 = memref.load %arg2[%c135] : memref<252xf32, #tpu.memory_space<smem>>
    %1035 = vector.broadcast %1034 : f32 to vector<24x24xf32>
    %1036 = arith.mulf %1035, %1029 : vector<24x24xf32>
    %1037 = arith.addf %980, %1036 : vector<24x24xf32>
    %c144 = arith.constant 144 : index
    %1038 = memref.load %arg2[%c144] : memref<252xf32, #tpu.memory_space<smem>>
    %1039 = vector.broadcast %1038 : f32 to vector<24x24xf32>
    %1040 = arith.mulf %1039, %1029 : vector<24x24xf32>
    %1041 = arith.addf %984, %1040 : vector<24x24xf32>
    %c153 = arith.constant 153 : index
    %1042 = memref.load %arg2[%c153] : memref<252xf32, #tpu.memory_space<smem>>
    %1043 = vector.broadcast %1042 : f32 to vector<24x24xf32>
    %1044 = arith.mulf %1043, %1029 : vector<24x24xf32>
    %1045 = arith.addf %988, %1044 : vector<24x24xf32>
    %c162 = arith.constant 162 : index
    %1046 = memref.load %arg2[%c162] : memref<252xf32, #tpu.memory_space<smem>>
    %1047 = vector.broadcast %1046 : f32 to vector<24x24xf32>
    %1048 = arith.mulf %1047, %1029 : vector<24x24xf32>
    %1049 = arith.addf %992, %1048 : vector<24x24xf32>
    %c171 = arith.constant 171 : index
    %1050 = memref.load %arg2[%c171] : memref<252xf32, #tpu.memory_space<smem>>
    %1051 = vector.broadcast %1050 : f32 to vector<24x24xf32>
    %1052 = arith.mulf %1051, %1029 : vector<24x24xf32>
    %1053 = arith.addf %996, %1052 : vector<24x24xf32>
    %c180 = arith.constant 180 : index
    %1054 = memref.load %arg2[%c180] : memref<252xf32, #tpu.memory_space<smem>>
    %1055 = vector.broadcast %1054 : f32 to vector<24x24xf32>
    %1056 = arith.mulf %1055, %1029 : vector<24x24xf32>
    %1057 = arith.addf %1000, %1056 : vector<24x24xf32>
    %c189 = arith.constant 189 : index
    %1058 = memref.load %arg2[%c189] : memref<252xf32, #tpu.memory_space<smem>>
    %1059 = vector.broadcast %1058 : f32 to vector<24x24xf32>
    %1060 = arith.mulf %1059, %1029 : vector<24x24xf32>
    %1061 = arith.addf %1004, %1060 : vector<24x24xf32>
    %c198 = arith.constant 198 : index
    %1062 = memref.load %arg2[%c198] : memref<252xf32, #tpu.memory_space<smem>>
    %1063 = vector.broadcast %1062 : f32 to vector<24x24xf32>
    %1064 = arith.mulf %1063, %1029 : vector<24x24xf32>
    %1065 = arith.addf %1008, %1064 : vector<24x24xf32>
    %c207 = arith.constant 207 : index
    %1066 = memref.load %arg2[%c207] : memref<252xf32, #tpu.memory_space<smem>>
    %1067 = vector.broadcast %1066 : f32 to vector<24x24xf32>
    %1068 = arith.mulf %1067, %1029 : vector<24x24xf32>
    %1069 = arith.addf %1012, %1068 : vector<24x24xf32>
    %c216 = arith.constant 216 : index
    %1070 = memref.load %arg2[%c216] : memref<252xf32, #tpu.memory_space<smem>>
    %1071 = vector.broadcast %1070 : f32 to vector<24x24xf32>
    %1072 = arith.mulf %1071, %1029 : vector<24x24xf32>
    %1073 = arith.addf %1016, %1072 : vector<24x24xf32>
    %c225 = arith.constant 225 : index
    %1074 = memref.load %arg2[%c225] : memref<252xf32, #tpu.memory_space<smem>>
    %1075 = vector.broadcast %1074 : f32 to vector<24x24xf32>
    %1076 = arith.mulf %1075, %1029 : vector<24x24xf32>
    %1077 = arith.addf %1020, %1076 : vector<24x24xf32>
    %c234 = arith.constant 234 : index
    %1078 = memref.load %arg2[%c234] : memref<252xf32, #tpu.memory_space<smem>>
    %1079 = vector.broadcast %1078 : f32 to vector<24x24xf32>
    %1080 = arith.mulf %1079, %1029 : vector<24x24xf32>
    %1081 = arith.addf %1024, %1080 : vector<24x24xf32>
    %c243 = arith.constant 243 : index
    %1082 = memref.load %arg2[%c243] : memref<252xf32, #tpu.memory_space<smem>>
    %1083 = vector.broadcast %1082 : f32 to vector<24x24xf32>
    %1084 = arith.mulf %1083, %1029 : vector<24x24xf32>
    %1085 = arith.addf %1028, %1084 : vector<24x24xf32>
    %1086 = math.tanh %1033 : vector<24x24xf32>
    %c0_28 = arith.constant 0 : index
    %c0_29 = arith.constant 0 : index
    %c0_30 = arith.constant 0 : index
    %c0_31 = arith.constant 0 : index
    %1087 = vector.load %arg4[%c0_28, %c0_29, %c0_30, %c0_31] : memref<1x14x24x24xf32, #tpu.memory_space<vmem>>, vector<1x1x24x24xf32>
    %1088 = vector.shape_cast %1087 : vector<1x1x24x24xf32> to vector<24x24xf32>
    %1089 = vector.shape_cast %1086 : vector<24x24xf32> to vector<1x1x24x24xf32>
    tpu.vector_store %arg4[%c0_28, %c0_29, %c0_30, %c0_31], %1089 {strides = array<i32>} : memref<1x14x24x24xf32, #tpu.memory_space<vmem>>, vector<1x1x24x24xf32>,
    %1090 = math.tanh %1037 : vector<24x24xf32>
    %c0_32 = arith.constant 0 : index
    %c1_33 = arith.constant 1 : index
    %c0_34 = arith.constant 0 : index
    %c0_35 = arith.constant 0 : index
    %1091 = vector.load %arg4[%c0_32, %c1_33, %c0_34, %c0_35] : memref<1x14x24x24xf32, #tpu.memory_space<vmem>>, vector<1x1x24x24xf32>
    %1092 = vector.shape_cast %1091 : vector<1x1x24x24xf32> to vector<24x24xf32>
    %1093 = vector.shape_cast %1090 : vector<24x24xf32> to vector<1x1x24x24xf32>
    tpu.vector_store %arg4[%c0_32, %c1_33, %c0_34, %c0_35], %1093 {strides = array<i32>} : memref<1x14x24x24xf32, #tpu.memory_space<vmem>>, vector<1x1x24x24xf32>,
    %1094 = math.tanh %1041 : vector<24x24xf32>
    %c0_36 = arith.constant 0 : index
    %c2_37 = arith.constant 2 : index
    %c0_38 = arith.constant 0 : index
    %c0_39 = arith.constant 0 : index
    %1095 = vector.load %arg4[%c0_36, %c2_37, %c0_38, %c0_39] : memref<1x14x24x24xf32, #tpu.memory_space<vmem>>, vector<1x1x24x24xf32>
    %1096 = vector.shape_cast %1095 : vector<1x1x24x24xf32> to vector<24x24xf32>
    %1097 = vector.shape_cast %1094 : vector<24x24xf32> to vector<1x1x24x24xf32>
    tpu.vector_store %arg4[%c0_36, %c2_37, %c0_38, %c0_39], %1097 {strides = array<i32>} : memref<1x14x24x24xf32, #tpu.memory_space<vmem>>, vector<1x1x24x24xf32>,
    %1098 = math.tanh %1045 : vector<24x24xf32>
    %c0_40 = arith.constant 0 : index
    %c3_41 = arith.constant 3 : index
    %c0_42 = arith.constant 0 : index
    %c0_43 = arith.constant 0 : index
    %1099 = vector.load %arg4[%c0_40, %c3_41, %c0_42, %c0_43] : memref<1x14x24x24xf32, #tpu.memory_space<vmem>>, vector<1x1x24x24xf32>
    %1100 = vector.shape_cast %1099 : vector<1x1x24x24xf32> to vector<24x24xf32>
    %1101 = vector.shape_cast %1098 : vector<24x24xf32> to vector<1x1x24x24xf32>
    tpu.vector_store %arg4[%c0_40, %c3_41, %c0_42, %c0_43], %1101 {strides = array<i32>} : memref<1x14x24x24xf32, #tpu.memory_space<vmem>>, vector<1x1x24x24xf32>,
    %1102 = math.tanh %1049 : vector<24x24xf32>
    %c0_44 = arith.constant 0 : index
    %c4_45 = arith.constant 4 : index
    %c0_46 = arith.constant 0 : index
    %c0_47 = arith.constant 0 : index
    %1103 = vector.load %arg4[%c0_44, %c4_45, %c0_46, %c0_47] : memref<1x14x24x24xf32, #tpu.memory_space<vmem>>, vector<1x1x24x24xf32>
    %1104 = vector.shape_cast %1103 : vector<1x1x24x24xf32> to vector<24x24xf32>
    %1105 = vector.shape_cast %1102 : vector<24x24xf32> to vector<1x1x24x24xf32>
    tpu.vector_store %arg4[%c0_44, %c4_45, %c0_46, %c0_47], %1105 {strides = array<i32>} : memref<1x14x24x24xf32, #tpu.memory_space<vmem>>, vector<1x1x24x24xf32>,
    %1106 = math.tanh %1053 : vector<24x24xf32>
    %c0_48 = arith.constant 0 : index
    %c5_49 = arith.constant 5 : index
    %c0_50 = arith.constant 0 : index
    %c0_51 = arith.constant 0 : index
    %1107 = vector.load %arg4[%c0_48, %c5_49, %c0_50, %c0_51] : memref<1x14x24x24xf32, #tpu.memory_space<vmem>>, vector<1x1x24x24xf32>
    %1108 = vector.shape_cast %1107 : vector<1x1x24x24xf32> to vector<24x24xf32>
    %1109 = vector.shape_cast %1106 : vector<24x24xf32> to vector<1x1x24x24xf32>
    tpu.vector_store %arg4[%c0_48, %c5_49, %c0_50, %c0_51], %1109 {strides = array<i32>} : memref<1x14x24x24xf32, #tpu.memory_space<vmem>>, vector<1x1x24x24xf32>,
    %1110 = math.tanh %1057 : vector<24x24xf32>
    %c0_52 = arith.constant 0 : index
    %c6_53 = arith.constant 6 : index
    %c0_54 = arith.constant 0 : index
    %c0_55 = arith.constant 0 : index
    %1111 = vector.load %arg4[%c0_52, %c6_53, %c0_54, %c0_55] : memref<1x14x24x24xf32, #tpu.memory_space<vmem>>, vector<1x1x24x24xf32>
    %1112 = vector.shape_cast %1111 : vector<1x1x24x24xf32> to vector<24x24xf32>
    %1113 = vector.shape_cast %1110 : vector<24x24xf32> to vector<1x1x24x24xf32>
    tpu.vector_store %arg4[%c0_52, %c6_53, %c0_54, %c0_55], %1113 {strides = array<i32>} : memref<1x14x24x24xf32, #tpu.memory_space<vmem>>, vector<1x1x24x24xf32>,
    %1114 = math.tanh %1061 : vector<24x24xf32>
    %c0_56 = arith.constant 0 : index
    %c7_57 = arith.constant 7 : index
    %c0_58 = arith.constant 0 : index
    %c0_59 = arith.constant 0 : index
    %1115 = vector.load %arg4[%c0_56, %c7_57, %c0_58, %c0_59] : memref<1x14x24x24xf32, #tpu.memory_space<vmem>>, vector<1x1x24x24xf32>
    %1116 = vector.shape_cast %1115 : vector<1x1x24x24xf32> to vector<24x24xf32>
    %1117 = vector.shape_cast %1114 : vector<24x24xf32> to vector<1x1x24x24xf32>
    tpu.vector_store %arg4[%c0_56, %c7_57, %c0_58, %c0_59], %1117 {strides = array<i32>} : memref<1x14x24x24xf32, #tpu.memory_space<vmem>>, vector<1x1x24x24xf32>,
    %1118 = math.tanh %1065 : vector<24x24xf32>
    %c0_60 = arith.constant 0 : index
    %c8_61 = arith.constant 8 : index
    %c0_62 = arith.constant 0 : index
    %c0_63 = arith.constant 0 : index
    %1119 = vector.load %arg4[%c0_60, %c8_61, %c0_62, %c0_63] : memref<1x14x24x24xf32, #tpu.memory_space<vmem>>, vector<1x1x24x24xf32>
    %1120 = vector.shape_cast %1119 : vector<1x1x24x24xf32> to vector<24x24xf32>
    %1121 = vector.shape_cast %1118 : vector<24x24xf32> to vector<1x1x24x24xf32>
    tpu.vector_store %arg4[%c0_60, %c8_61, %c0_62, %c0_63], %1121 {strides = array<i32>} : memref<1x14x24x24xf32, #tpu.memory_space<vmem>>, vector<1x1x24x24xf32>,
    %1122 = math.tanh %1069 : vector<24x24xf32>
    %c0_64 = arith.constant 0 : index
    %c9_65 = arith.constant 9 : index
    %c0_66 = arith.constant 0 : index
    %c0_67 = arith.constant 0 : index
    %1123 = vector.load %arg4[%c0_64, %c9_65, %c0_66, %c0_67] : memref<1x14x24x24xf32, #tpu.memory_space<vmem>>, vector<1x1x24x24xf32>
    %1124 = vector.shape_cast %1123 : vector<1x1x24x24xf32> to vector<24x24xf32>
    %1125 = vector.shape_cast %1122 : vector<24x24xf32> to vector<1x1x24x24xf32>
    tpu.vector_store %arg4[%c0_64, %c9_65, %c0_66, %c0_67], %1125 {strides = array<i32>} : memref<1x14x24x24xf32, #tpu.memory_space<vmem>>, vector<1x1x24x24xf32>,
    %1126 = math.tanh %1073 : vector<24x24xf32>
    %c0_68 = arith.constant 0 : index
    %c10_69 = arith.constant 10 : index
    %c0_70 = arith.constant 0 : index
    %c0_71 = arith.constant 0 : index
    %1127 = vector.load %arg4[%c0_68, %c10_69, %c0_70, %c0_71] : memref<1x14x24x24xf32, #tpu.memory_space<vmem>>, vector<1x1x24x24xf32>
    %1128 = vector.shape_cast %1127 : vector<1x1x24x24xf32> to vector<24x24xf32>
    %1129 = vector.shape_cast %1126 : vector<24x24xf32> to vector<1x1x24x24xf32>
    tpu.vector_store %arg4[%c0_68, %c10_69, %c0_70, %c0_71], %1129 {strides = array<i32>} : memref<1x14x24x24xf32, #tpu.memory_space<vmem>>, vector<1x1x24x24xf32>,
    %1130 = math.tanh %1077 : vector<24x24xf32>
    %c0_72 = arith.constant 0 : index
    %c11_73 = arith.constant 11 : index
    %c0_74 = arith.constant 0 : index
    %c0_75 = arith.constant 0 : index
    %1131 = vector.load %arg4[%c0_72, %c11_73, %c0_74, %c0_75] : memref<1x14x24x24xf32, #tpu.memory_space<vmem>>, vector<1x1x24x24xf32>
    %1132 = vector.shape_cast %1131 : vector<1x1x24x24xf32> to vector<24x24xf32>
    %1133 = vector.shape_cast %1130 : vector<24x24xf32> to vector<1x1x24x24xf32>
    tpu.vector_store %arg4[%c0_72, %c11_73, %c0_74, %c0_75], %1133 {strides = array<i32>} : memref<1x14x24x24xf32, #tpu.memory_space<vmem>>, vector<1x1x24x24xf32>,
    %1134 = math.tanh %1081 : vector<24x24xf32>
    %c0_76 = arith.constant 0 : index
    %c12_77 = arith.constant 12 : index
    %c0_78 = arith.constant 0 : index
    %c0_79 = arith.constant 0 : index
    %1135 = vector.load %arg4[%c0_76, %c12_77, %c0_78, %c0_79] : memref<1x14x24x24xf32, #tpu.memory_space<vmem>>, vector<1x1x24x24xf32>
    %1136 = vector.shape_cast %1135 : vector<1x1x24x24xf32> to vector<24x24xf32>
    %1137 = vector.shape_cast %1134 : vector<24x24xf32> to vector<1x1x24x24xf32>
    tpu.vector_store %arg4[%c0_76, %c12_77, %c0_78, %c0_79], %1137 {strides = array<i32>} : memref<1x14x24x24xf32, #tpu.memory_space<vmem>>, vector<1x1x24x24xf32>,
    %1138 = math.tanh %1085 : vector<24x24xf32>
    %c0_80 = arith.constant 0 : index
    %c13_81 = arith.constant 13 : index
    %c0_82 = arith.constant 0 : index
    %c0_83 = arith.constant 0 : index
    %1139 = vector.load %arg4[%c0_80, %c13_81, %c0_82, %c0_83] : memref<1x14x24x24xf32, #tpu.memory_space<vmem>>, vector<1x1x24x24xf32>
    %1140 = vector.shape_cast %1139 : vector<1x1x24x24xf32> to vector<24x24xf32>
    %1141 = vector.shape_cast %1138 : vector<24x24xf32> to vector<1x1x24x24xf32>
    tpu.vector_store %arg4[%c0_80, %c13_81, %c0_82, %c0_83], %1141 {strides = array<i32>} : memref<1x14x24x24xf32, #tpu.memory_space<vmem>>, vector<1x1x24x24xf32>,
    return
  }
  func.func @transform_0(%arg0: i32) -> (i32, i32, i32, i32) {
    %c0_i32 = arith.constant 0 : i32
    %c0_i32_0 = arith.constant 0 : i32
    %c0_i32_1 = arith.constant 0 : i32
    %c0_i32_2 = arith.constant 0 : i32
    return %arg0, %c0_i32, %c0_i32_0, %c0_i32_1 : i32, i32, i32, i32
  }
  func.func @transform_1(%arg0: i32) -> i32 {
    %c0_i32 = arith.constant 0 : i32
    %c0_i32_0 = arith.constant 0 : i32
    return %c0_i32 : i32
  }
  func.func @transform_2(%arg0: i32) -> i32 {
    %c0_i32 = arith.constant 0 : i32
    %c0_i32_0 = arith.constant 0 : i32
    return %c0_i32 : i32
  }
  func.func @transform_3(%arg0: i32) -> (i32, i32, i32, i32) {
    %c0_i32 = arith.constant 0 : i32
    %c0_i32_0 = arith.constant 0 : i32
    %c0_i32_1 = arith.constant 0 : i32
    %c0_i32_2 = arith.constant 0 : i32
    return %arg0, %c0_i32, %c0_i32_0, %c0_i32_1 : i32, i32, i32, i32
  }
}

</mosaic_0001>

<llo_original>
// kernel: conv_transpose_tanh.1
$region0: #{conv_transpose_tanh.1}
  #allocation0 [shape = 'u32[]', space=smem, size = 0x4, offset = 0x4, fixed_abs, tag = 'smem constant byte address 0x4 - core index']
  #allocation1 [shape = 'u32[144,128]{1,0:T(1,128)}', space=vmem, size = 0x12000, scoped, tag = 'internal scratch']
  %s0 = inlined_call_operand.vmem [shape: f32[1,2,11,11], index: 0, kind: input, shape index: {}]
  %s1 = inlined_call_operand.vmem [shape: f32[252], index: 1, kind: input, shape index: {}]
  %s2 = inlined_call_operand.vmem [shape: f32[14], index: 2, kind: input, shape index: {}]
  %s3 = inlined_call_operand.hbm [shape: f32[1,14,24,24], index: 3, kind: output, shape index: {}]
  %s4 = sld [smem:[#allocation0]]
  $region30: #{conv_transpose_tanh.1} parent=0
    _
  %s6 = ssub.s32 1, %s4
  %s7 = scalar_select 0, %s6, %s4
  $region1: #{conv_transpose_tanh.1} parent=0
    #allocation2 [shape = 'u8[1024]{0}', space=smem, size = 0x400, scoped, tag = 'input window, operand 1, single buffered']
    #allocation3 [shape = 's32[1]{0}', space=sflag, size = 0x4, scoped, tag = 'scoped memory for conv_transpose_tanh.1']
    #allocation4 [shape = 's32[1]{0}', space=sflag, size = 0x4, scoped, tag = 'scoped memory for conv_transpose_tanh.1']
    #allocation5 [shape = 'u8[512]{0}', space=smem, size = 0x200, scoped, tag = 'input window, operand 2, single buffered']
    #allocation6 [shape = 's32[1]{0}', space=sflag, size = 0x4, scoped, tag = 'scoped memory for conv_transpose_tanh.1']
    #allocation7 [shape = 'u8[172032]{0}', space=vmem, size = 0x2a000, scoped, tag = 'output window, operand 0, single buffered']
    %8 = vsyncpa [#allocation4], 0
    %9 = vsyncpa [#allocation6], 0
    %10 = vsyncpa [#allocation3], 0
    // Predicated region
    $region2: #{conv_transpose_tanh.1} parent=1 // pred_check
      _
    $region3: #{conv_transpose_tanh.1} parent=1 // pred_check_branch
      %12 = sbr.rel (0) target = $region5
    $region4: #{conv_transpose_tanh.1} parent=1 // pred_region
      _
    $region5: #{conv_transpose_tanh.1} parent=1 // pred_fallthru
      _
    // Predicated region
    $region6: #{conv_transpose_tanh.1} parent=1 // pred_check
      _
    $region7: #{conv_transpose_tanh.1} parent=1 // pred_check_branch
      %14 = sbr.rel (0) target = $region9
    $region8: #{conv_transpose_tanh.1} parent=1 // pred_region
      %s16 = ssub.s32 32, 32
      %17 = vsyncadd [#allocation4], %s16
      %s19 = sshll.u32 %s1, 4
      %s20 = int_to_ptr.vmem [resolvable:$true] %s19
      %22 = dma.vmem_to_smem %s20, 32, [#allocation2], [#allocation4]
    $region9: #{conv_transpose_tanh.1} parent=1 // pred_fallthru
      _
    // Predicated region
    $region10: #{conv_transpose_tanh.1} parent=1 // pred_check
      _
    $region11: #{conv_transpose_tanh.1} parent=1 // pred_check_branch
      %24 = sbr.rel (0) target = $region13
    $region12: #{conv_transpose_tanh.1} parent=1 // pred_region
      %s26 = ssub.s32 16, 16
      %27 = vsyncadd [#allocation6], %s26
      %s29 = sshll.u32 %s2, 4
      %s30 = int_to_ptr.vmem [resolvable:$true] %s29
      %32 = dma.vmem_to_smem %s30, 16, [#allocation5], [#allocation6]
    $region13: #{conv_transpose_tanh.1} parent=1 // pred_fallthru
      _
    // Predicated region
    $region14: #{conv_transpose_tanh.1} parent=1 // pred_check
      _
    $region15: #{conv_transpose_tanh.1} parent=1 // pred_check_branch
      %34 = sbr.rel (0) target = $region17
    $region16: #{conv_transpose_tanh.1} parent=1 // pred_region
      %35 = dma.done [#allocation4], 32
    $region17: #{conv_transpose_tanh.1} parent=1 // pred_fallthru
      _
    // Predicated region
    $region18: #{conv_transpose_tanh.1} parent=1 // pred_check
      _
    $region19: #{conv_transpose_tanh.1} parent=1 // pred_check_branch
      %37 = sbr.rel (0) target = $region21
    $region20: #{conv_transpose_tanh.1} parent=1 // pred_region
      %38 = dma.done [#allocation6], 16
    $region21: #{conv_transpose_tanh.1} parent=1 // pred_fallthru
      _
    %39 = sfence
    %v40 = vlaneseq
    %v41 = vshrl.u32 %v40, 7
    %v42 = vadd.s32 %v41, 8
    %v43 = vadd.s32 %v41, 16
    %v44 = vadd.s32 %v41, 24
    %v45 = vlaneseq
    %v46 = vand.u32 %v45, 127
    %v47 = vmul.u32 %v46, 2
    %v48 = vadd.s32 %v47, 2
    %vm49 = vcmp.eq.s32.totalorder %v41, %v48
    %vm50 = vcmp.eq.s32.totalorder %v42, %v48
    %vm51 = vcmp.eq.s32.totalorder %v43, %v48
    %vm52 = vcmp.eq.s32.totalorder %v44, %v48
    %v53 = vsel %vm49, 1, 0
    %v54 = vsel %vm50, 1, 0
    %v55 = vsel %vm51, 1, 0
    %v56 = vsel %vm52, 1, 0
    %v57 = vcvt.s32.f32 %v53
    %v58 = vcvt.s32.f32 %v54
    %v59 = vcvt.s32.f32 %v55
    %v60 = vcvt.s32.f32 %v56
    %v61 = vmul.u32 %v41, 2
    %v62 = vmul.u32 %v42, 2
    %v63 = vadd.s32 %v61, 2
    %v64 = vadd.s32 %v62, 2
    %vm65 = vcmp.eq.s32.totalorder %v46, %v63
    %vm66 = vcmp.eq.s32.totalorder %v46, %v64
    %v67 = vsel %vm65, 1, 0
    %v68 = vsel %vm66, 1, 0
    %v69 = vcvt.s32.f32 %v67
    %v70 = vcvt.s32.f32 %v68
    %v71 = vld [vmem:[%s0] sm:$0xff]
    %v72 = vld [vmem:[%s0 + $0x8] sm:$0x7]
    %vm73 = vcmask 89088
    %v75 = vsel %vm73, %v71, 0
    %v78 = vsel %vm73, %v72, 0
    %vm80 = vcmask 1042432
    %v82 = vsel %vm80, %v70, 0
    %84 = vmatprep.subr.mxu0 0.0
    %85 = vmatpush1.msra.mxu0 0.0
    %86 = vmatprep.subr.mxu0 0.0
    %87 = vmatpush1.msra.mxu0 0.0
    %88 = vmatprep.subr.mxu0 0.0
    %89 = vmatpush1.msra.mxu0 0.0
    %90 = vmatprep.subr.mxu0 0.0
    %91 = vmatpush1.msra.mxu0 0.0
    %92 = vmatprep.subr.mxu0 0.0
    %93 = vmatpush1.msra.mxu0 0.0
    %94 = vmatprep.subr.mxu0 0.0
    %95 = vmatpush1.msra.mxu0 0.0
    %96 = vmatprep.subr.mxu0 0.0
    %97 = vmatpush1.msra.mxu0 0.0
    %98 = vmatprep.subr.mxu0 0.0
    %99 = vmatpush1.msra.mxu0 0.0
    %100 = vmatprep.subr.mxu0 0.0
    %101 = vmatpush1.msra.mxu0 0.0
    %102 = vmatprep.subr.mxu0 0.0
    %103 = vmatpush1.msra.mxu0 0.0
    %104 = vmatprep.subr.mxu0 0.0
    %105 = vmatpush1.msra.mxu0 0.0
    %106 = vmatprep.subr.mxu0 0.0
    %107 = vmatpush1.msra.mxu0 0.0
    %108 = vmatprep.subr.mxu0 0.0
    %109 = vmatpush1.msra.mxu0 0.0
    %110 = vmatprep.subr.mxu0 0.0
    %111 = vmatpush1.msra.mxu0 0.0
    %112 = vmatprep.subr.mxu0 0.0
    %113 = vmatpush1.msra.mxu0 %v82
    %114 = vmatprep.subr.mxu0 0.0
    %115 = vmatpush1.msra.mxu0 %v69
    %116 = vmatprep.subr.mxu0 0.0
    %117 = vmatpush2.msra.mxu0 0.0
    %118 = vmatprep.subr.mxu0 0.0
    %119 = vmatpush2.msra.mxu0 0.0
    %120 = vmatprep.subr.mxu0 0.0
    %121 = vmatpush2.msra.mxu0 0.0
    %122 = vmatprep.subr.mxu0 0.0
    %123 = vmatpush2.msra.mxu0 0.0
    %124 = vmatprep.subr.mxu0 0.0
    %125 = vmatpush2.msra.mxu0 0.0
    %126 = vmatprep.subr.mxu0 0.0
    %127 = vmatpush2.msra.mxu0 0.0
    %128 = vmatprep.subr.mxu0 0.0
    %129 = vmatpush2.msra.mxu0 0.0
    %130 = vmatprep.subr.mxu0 0.0
    %131 = vmatpush2.msra.mxu0 0.0
    %132 = vmatprep.subr.mxu0 0.0
    %133 = vmatpush2.msra.mxu0 0.0
    %134 = vmatprep.subr.mxu0 0.0
    %135 = vmatpush2.msra.mxu0 0.0
    %136 = vmatprep.subr.mxu0 0.0
    %137 = vmatpush2.msra.mxu0 0.0
    %138 = vmatprep.subr.mxu0 0.0
    %139 = vmatpush2.msra.mxu0 0.0
    %140 = vmatprep.subr.mxu0 0.0
    %141 = vmatpush2.msra.mxu0 0.0
    %142 = vmatprep.subr.mxu0 0.0
    %143 = vmatpush2.msra.mxu0 0.0
    %144 = vmatprep.subr.mxu0 0.0
    %145 = vmatpush2.msra.mxu0 0.0
    %146 = vmatprep.subr.mxu0 0.0
    %147 = vmatpush2.msra.mxu0 0.0
    %148 = vmatprep.mubr.f32.mxu0 0.0
    %149 = vmatmul.mubr.f32.gmra.mxu0 %v75
    %v150 = vpop.f32.mrf.mxu0
    %v151 = vadd.f32 0.0, %v150
    %v152 = vpop.f32.mrf.mxu0
    %153 = vmatprep.mubr.f32.mxu0 0.0
    %154 = vmatmul.mubr.f32.gmra.mxu0 %v78
    %v155 = vpop.f32.mrf.mxu0
    %v156 = vadd.f32 0.0, %v155
    %v157 = vpop.f32.mrf.mxu0
    %158 = vdwg.mxu0
    %v160 = vsel %vm73, %v57, 0
    %v163 = vsel %vm73, %v58, 0
    %v166 = vsel %vm73, %v59, 0
    %v169 = vsel %vm73, %v60, 0
    %v172 = vsel %vm80, %v156, 0
    %174 = vmatprep.subr.mxu0 0.0
    %175 = vmatpush1.msra.mxu0 0.0
    %176 = vmatprep.subr.mxu0 0.0
    %177 = vmatpush1.msra.mxu0 0.0
    %178 = vmatprep.subr.mxu0 0.0
    %179 = vmatpush1.msra.mxu0 0.0
    %180 = vmatprep.subr.mxu0 0.0
    %181 = vmatpush1.msra.mxu0 0.0
    %182 = vmatprep.subr.mxu0 0.0
    %183 = vmatpush1.msra.mxu0 0.0
    %184 = vmatprep.subr.mxu0 0.0
    %185 = vmatpush1.msra.mxu0 0.0
    %186 = vmatprep.subr.mxu0 0.0
    %187 = vmatpush1.msra.mxu0 0.0
    %188 = vmatprep.subr.mxu0 0.0
    %189 = vmatpush1.msra.mxu0 0.0
    %190 = vmatprep.subr.mxu0 0.0
    %191 = vmatpush1.msra.mxu0 0.0
    %192 = vmatprep.subr.mxu0 0.0
    %193 = vmatpush1.msra.mxu0 0.0
    %194 = vmatprep.subr.mxu0 0.0
    %195 = vmatpush1.msra.mxu0 0.0
    %196 = vmatprep.subr.mxu0 0.0
    %197 = vmatpush1.msra.mxu0 0.0
    %198 = vmatprep.subr.mxu0 0.0
    %199 = vmatpush1.msra.mxu0 0.0
    %200 = vmatprep.subr.mxu0 0.0
    %201 = vmatpush1.msra.mxu0 0.0
    %202 = vmatprep.subr.mxu0 0.0
    %203 = vmatpush1.msra.mxu0 %v172
    %204 = vmatprep.subr.mxu0 0.0
    %205 = vmatpush1.msra.mxu0 %v151
    %206 = vmatprep.subr.mxu0 0.0
    %207 = vmatpush2.msra.mxu0 0.0
    %208 = vmatprep.subr.mxu0 0.0
    %209 = vmatpush2.msra.mxu0 0.0
    %210 = vmatprep.subr.mxu0 0.0
    %211 = vmatpush2.msra.mxu0 0.0
    %212 = vmatprep.subr.mxu0 0.0
    %213 = vmatpush2.msra.mxu0 0.0
    %214 = vmatprep.subr.mxu0 0.0
    %215 = vmatpush2.msra.mxu0 0.0
    %216 = vmatprep.subr.mxu0 0.0
    %217 = vmatpush2.msra.mxu0 0.0
    %218 = vmatprep.subr.mxu0 0.0
    %219 = vmatpush2.msra.mxu0 0.0
    %220 = vmatprep.subr.mxu0 0.0
    %221 = vmatpush2.msra.mxu0 0.0
    %222 = vmatprep.subr.mxu0 0.0
    %223 = vmatpush2.msra.mxu0 0.0
    %224 = vmatprep.subr.mxu0 0.0
    %225 = vmatpush2.msra.mxu0 0.0
    %226 = vmatprep.subr.mxu0 0.0
    %227 = vmatpush2.msra.mxu0 0.0
    %228 = vmatprep.subr.mxu0 0.0
    %229 = vmatpush2.msra.mxu0 0.0
    %230 = vmatprep.subr.mxu0 0.0
    %231 = vmatpush2.msra.mxu0 0.0
    %232 = vmatprep.subr.mxu0 0.0
    %233 = vmatpush2.msra.mxu0 0.0
    %234 = vmatprep.subr.mxu0 0.0
    %235 = vmatpush2.msra.mxu0 0.0
    %236 = vmatprep.subr.mxu0 0.0
    %237 = vmatpush2.msra.mxu0 0.0
    %238 = vmatprep.mubr.f32.mxu0 0.0
    %239 = vmatmul.mubr.f32.gmra.mxu0 %v160
    %v240 = vpop.f32.mrf.mxu0
    %v241 = vadd.f32 0.0, %v240
    %v242 = vpop.f32.mrf.mxu0
    %243 = vmatprep.mubr.f32.mxu0 0.0
    %244 = vmatmul.mubr.f32.gmra.mxu0 %v163
    %v245 = vpop.f32.mrf.mxu0
    %v246 = vadd.f32 0.0, %v245
    %v247 = vpop.f32.mrf.mxu0
    %248 = vmatprep.mubr.f32.mxu0 0.0
    %249 = vmatmul.mubr.f32.gmra.mxu0 %v166
    %v250 = vpop.f32.mrf.mxu0
    %v251 = vadd.f32 0.0, %v250
    %v252 = vpop.f32.mrf.mxu0
    %253 = vmatprep.mubr.f32.mxu0 0.0
    %254 = vmatmul.mubr.f32.gmra.mxu0 %v169
    %v255 = vpop.f32.mrf.mxu0
    %v256 = vadd.f32 0.0, %v255
    %v257 = vpop.f32.mrf.mxu0
    %258 = vdwg.mxu0
    %s259 = scalar_lea.vmem %s0, 16
    %v260 = vld [vmem:[%s259] sm:$0xff]
    %v261 = vld [vmem:[%s259 + $0x8] sm:$0x7]
    %v263 = vsel %vm73, %v260, 0
    %v266 = vsel %vm73, %v261, 0
    %268 = vmatprep.subr.mxu0 0.0
    %269 = vmatpush1.msra.mxu0 0.0
    %270 = vmatprep.subr.mxu0 0.0
    %271 = vmatpush1.msra.mxu0 0.0
    %272 = vmatprep.subr.mxu0 0.0
    %273 = vmatpush1.msra.mxu0 0.0
    %274 = vmatprep.subr.mxu0 0.0
    %275 = vmatpush1.msra.mxu0 0.0
    %276 = vmatprep.subr.mxu0 0.0
    %277 = vmatpush1.msra.mxu0 0.0
    %278 = vmatprep.subr.mxu0 0.0
    %279 = vmatpush1.msra.mxu0 0.0
    %280 = vmatprep.subr.mxu0 0.0
    %281 = vmatpush1.msra.mxu0 0.0
    %282 = vmatprep.subr.mxu0 0.0
    %283 = vmatpush1.msra.mxu0 0.0
    %284 = vmatprep.subr.mxu0 0.0
    %285 = vmatpush1.msra.mxu0 0.0
    %286 = vmatprep.subr.mxu0 0.0
    %287 = vmatpush1.msra.mxu0 0.0
    %288 = vmatprep.subr.mxu0 0.0
    %289 = vmatpush1.msra.mxu0 0.0
    %290 = vmatprep.subr.mxu0 0.0
    %291 = vmatpush1.msra.mxu0 0.0
    %292 = vmatprep.subr.mxu0 0.0
    %293 = vmatpush1.msra.mxu0 0.0
    %294 = vmatprep.subr.mxu0 0.0
    %295 = vmatpush1.msra.mxu0 0.0
    %296 = vmatprep.subr.mxu0 0.0
    %297 = vmatpush1.msra.mxu0 %v82
    %298 = vmatprep.subr.mxu0 0.0
    %299 = vmatpush1.msra.mxu0 %v69
    %300 = vmatprep.subr.mxu0 0.0
    %301 = vmatpush2.msra.mxu0 0.0
    %302 = vmatprep.subr.mxu0 0.0
    %303 = vmatpush2.msra.mxu0 0.0
    %304 = vmatprep.subr.mxu0 0.0
    %305 = vmatpush2.msra.mxu0 0.0
    %306 = vmatprep.subr.mxu0 0.0
    %307 = vmatpush2.msra.mxu0 0.0
    %308 = vmatprep.subr.mxu0 0.0
    %309 = vmatpush2.msra.mxu0 0.0
    %310 = vmatprep.subr.mxu0 0.0
    %311 = vmatpush2.msra.mxu0 0.0
    %312 = vmatprep.subr.mxu0 0.0
    %313 = vmatpush2.msra.mxu0 0.0
    %314 = vmatprep.subr.mxu0 0.0
    %315 = vmatpush2.msra.mxu0 0.0
    %316 = vmatprep.subr.mxu0 0.0
    %317 = vmatpush2.msra.mxu0 0.0
    %318 = vmatprep.subr.mxu0 0.0
    %319 = vmatpush2.msra.mxu0 0.0
    %320 = vmatprep.subr.mxu0 0.0
    %321 = vmatpush2.msra.mxu0 0.0
    %322 = vmatprep.subr.mxu0 0.0
    %323 = vmatpush2.msra.mxu0 0.0
    %324 = vmatprep.subr.mxu0 0.0
    %325 = vmatpush2.msra.mxu0 0.0
    %326 = vmatprep.subr.mxu0 0.0
    %327 = vmatpush2.msra.mxu0 0.0
    %328 = vmatprep.subr.mxu0 0.0
    %329 = vmatpush2.msra.mxu0 0.0
    %330 = vmatprep.subr.mxu0 0.0
    %331 = vmatpush2.msra.mxu0 0.0
    %332 = vmatprep.mubr.f32.mxu0 0.0
    %333 = vmatmul.mubr.f32.gmra.mxu0 %v263
    %v334 = vpop.f32.mrf.mxu0
    %v335 = vadd.f32 0.0, %v334
    %v336 = vpop.f32.mrf.mxu0
    %337 = vmatprep.mubr.f32.mxu0 0.0
    %338 = vmatmul.mubr.f32.gmra.mxu0 %v266
    %v339 = vpop.f32.mrf.mxu0
    %v340 = vadd.f32 0.0, %v339
    %v341 = vpop.f32.mrf.mxu0
    %342 = vdwg.mxu0
    %v344 = vsel %vm80, %v340, 0
    %346 = vmatprep.subr.mxu0 0.0
    %347 = vmatpush1.msra.mxu0 0.0
    %348 = vmatprep.subr.mxu0 0.0
    %349 = vmatpush1.msra.mxu0 0.0
    %350 = vmatprep.subr.mxu0 0.0
    %351 = vmatpush1.msra.mxu0 0.0
    %352 = vmatprep.subr.mxu0 0.0
    %353 = vmatpush1.msra.mxu0 0.0
    %354 = vmatprep.subr.mxu0 0.0
    %355 = vmatpush1.msra.mxu0 0.0
    %356 = vmatprep.subr.mxu0 0.0
    %357 = vmatpush1.msra.mxu0 0.0
    %358 = vmatprep.subr.mxu0 0.0
    %359 = vmatpush1.msra.mxu0 0.0
    %360 = vmatprep.subr.mxu0 0.0
    %361 = vmatpush1.msra.mxu0 0.0
    %362 = vmatprep.subr.mxu0 0.0
    %363 = vmatpush1.msra.mxu0 0.0
    %364 = vmatprep.subr.mxu0 0.0
    %365 = vmatpush1.msra.mxu0 0.0
    %366 = vmatprep.subr.mxu0 0.0
    %367 = vmatpush1.msra.mxu0 0.0
    %368 = vmatprep.subr.mxu0 0.0
    %369 = vmatpush1.msra.mxu0 0.0
    %370 = vmatprep.subr.mxu0 0.0
    %371 = vmatpush1.msra.mxu0 0.0
    %372 = vmatprep.subr.mxu0 0.0
    %373 = vmatpush1.msra.mxu0 0.0
    %374 = vmatprep.subr.mxu0 0.0
    %375 = vmatpush1.msra.mxu0 %v344
    %376 = vmatprep.subr.mxu0 0.0
    %377 = vmatpush1.msra.mxu0 %v335
    %378 = vmatprep.subr.mxu0 0.0
    %379 = vmatpush2.msra.mxu0 0.0
    %380 = vmatprep.subr.mxu0 0.0
    %381 = vmatpush2.msra.mxu0 0.0
    %382 = vmatprep.subr.mxu0 0.0
    %383 = vmatpush2.msra.mxu0 0.0
    %384 = vmatprep.subr.mxu0 0.0
    %385 = vmatpush2.msra.mxu0 0.0
    %386 = vmatprep.subr.mxu0 0.0
    %387 = vmatpush2.msra.mxu0 0.0
    %388 = vmatprep.subr.mxu0 0.0
    %389 = vmatpush2.msra.mxu0 0.0
    %390 = vmatprep.subr.mxu0 0.0
    %391 = vmatpush2.msra.mxu0 0.0
    %392 = vmatprep.subr.mxu0 0.0
    %393 = vmatpush2.msra.mxu0 0.0
    %394 = vmatprep.subr.mxu0 0.0
    %395 = vmatpush2.msra.mxu0 0.0
    %396 = vmatprep.subr.mxu0 0.0
    %397 = vmatpush2.msra.mxu0 0.0
    %398 = vmatprep.subr.mxu0 0.0
    %399 = vmatpush2.msra.mxu0 0.0
    %400 = vmatprep.subr.mxu0 0.0
    %401 = vmatpush2.msra.mxu0 0.0
    %402 = vmatprep.subr.mxu0 0.0
    %403 = vmatpush2.msra.mxu0 0.0
    %404 = vmatprep.subr.mxu0 0.0
    %405 = vmatpush2.msra.mxu0 0.0
    %406 = vmatprep.subr.mxu0 0.0
    %407 = vmatpush2.msra.mxu0 0.0
    %408 = vmatprep.subr.mxu0 0.0
    %409 = vmatpush2.msra.mxu0 0.0
    %410 = vmatprep.mubr.f32.mxu0 0.0
    %411 = vmatmul.mubr.f32.gmra.mxu0 %v160
    %v412 = vpop.f32.mrf.mxu0
    %v413 = vadd.f32 0.0, %v412
    %v414 = vpop.f32.mrf.mxu0
    %415 = vmatprep.mubr.f32.mxu0 0.0
    %416 = vmatmul.mubr.f32.gmra.mxu0 %v163
    %v417 = vpop.f32.mrf.mxu0
    %v418 = vadd.f32 0.0, %v417
    %v419 = vpop.f32.mrf.mxu0
    %420 = vmatprep.mubr.f32.mxu0 0.0
    %421 = vmatmul.mubr.f32.gmra.mxu0 %v166
    %v422 = vpop.f32.mrf.mxu0
    %v423 = vadd.f32 0.0, %v422
    %v424 = vpop.f32.mrf.mxu0
    %425 = vmatprep.mubr.f32.mxu0 0.0
    %426 = vmatmul.mubr.f32.gmra.mxu0 %v169
    %v427 = vpop.f32.mrf.mxu0
    %v428 = vadd.f32 0.0, %v427
    %v429 = vpop.f32.mrf.mxu0
    %430 = vdwg.mxu0
    %s431 = sld [smem:[#allocation5]]
    %v432 = vstv %s431
    %s433 = sld [smem:[#allocation5 + $0x1]]
    %v434 = vstv %s433
    %s435 = sld [smem:[#allocation5 + $0x2]]
    %v436 = vstv %s435
    %s437 = sld [smem:[#allocation5 + $0x3]]
    %v438 = vstv %s437
    %s439 = sld [smem:[#allocation5 + $0x4]]
    %v440 = vstv %s439
    %s441 = sld [smem:[#allocation5 + $0x5]]
    %v442 = vstv %s441
    %s443 = sld [smem:[#allocation5 + $0x6]]
    %v444 = vstv %s443
    %s445 = sld [smem:[#allocation5 + $0x7]]
    %v446 = vstv %s445
    %s447 = sld [smem:[#allocation5 + $0x8]]
    %v448 = vstv %s447
    %s449 = sld [smem:[#allocation5 + $0x9]]
    %v450 = vstv %s449
    %s451 = sld [smem:[#allocation5 + $0xa]]
    %v452 = vstv %s451
    %s453 = sld [smem:[#allocation5 + $0xb]]
    %v454 = vstv %s453
    %s455 = sld [smem:[#allocation5 + $0xc]]
    %v456 = vstv %s455
    %s457 = sld [smem:[#allocation5 + $0xd]]
    %v458 = vstv %s457
    %s459 = sld [smem:[#allocation2 + $0x8]]
    %v460 = vstv %s459
    %v461 = vmul.f32 %v460, %v241
    %v462 = vmul.f32 %v460, %v246
    %v463 = vmul.f32 %v460, %v251
    %v464 = vadd.f32 %v432, %v461
    %v465 = vadd.f32 %v432, %v462
    %v466 = vadd.f32 %v432, %v463
    %s467 = sld [smem:[#allocation2 + $0x11]]
    %v468 = vstv %s467
    %v469 = vmul.f32 %v468, %v241
    %v470 = vmul.f32 %v468, %v246
    %v471 = vmul.f32 %v468, %v251
    %v472 = vadd.f32 %v434, %v469
    %v473 = vadd.f32 %v434, %v470
    %v474 = vadd.f32 %v434, %v471
    %s475 = sld [smem:[#allocation2 + $0x1a]]
    %v476 = vstv %s475
    %v477 = vmul.f32 %v476, %v241
    %v478 = vmul.f32 %v476, %v246
    %v479 = vmul.f32 %v476, %v251
    %v480 = vadd.f32 %v436, %v477
    %v481 = vadd.f32 %v436, %v478
    %v482 = vadd.f32 %v436, %v479
    %s483 = sld [smem:[#allocation2 + $0x23]]
    %v484 = vstv %s483
    %v485 = vmul.f32 %v484, %v241
    %v486 = vmul.f32 %v484, %v246
    %v487 = vmul.f32 %v484, %v251
    %v488 = vadd.f32 %v438, %v485
    %v489 = vadd.f32 %v438, %v486
    %v490 = vadd.f32 %v438, %v487
    %s491 = sld [smem:[#allocation2 + $0x2c]]
    %v492 = vstv %s491
    %v493 = vmul.f32 %v492, %v241
    %v494 = vmul.f32 %v492, %v246
    %v495 = vmul.f32 %v492, %v251
    %v496 = vadd.f32 %v440, %v493
    %v497 = vadd.f32 %v440, %v494
    %v498 = vadd.f32 %v440, %v495
    %s499 = sld [smem:[#allocation2 + $0x35]]
    %v500 = vstv %s499
    %v501 = vmul.f32 %v500, %v241
    %v502 = vmul.f32 %v500, %v246
    %v503 = vmul.f32 %v500, %v251
    %v504 = vadd.f32 %v442, %v501
    %v505 = vadd.f32 %v442, %v502
    %v506 = vadd.f32 %v442, %v503
    %s507 = sld [smem:[#allocation2 + $0x3e]]
    %v508 = vstv %s507
    %v509 = vmul.f32 %v508, %v241
    %v510 = vmul.f32 %v508, %v246
    %v511 = vmul.f32 %v508, %v251
    %v512 = vadd.f32 %v444, %v509
    %v513 = vadd.f32 %v444, %v510
    %v514 = vadd.f32 %v444, %v511
    %s515 = sld [smem:[#allocation2 + $0x47]]
    %v516 = vstv %s515
    %v517 = vmul.f32 %v516, %v241
    %v518 = vmul.f32 %v516, %v246
    %v519 = vmul.f32 %v516, %v251
    %v520 = vadd.f32 %v446, %v517
    %v521 = vadd.f32 %v446, %v518
    %v522 = vadd.f32 %v446, %v519
    %s523 = sld [smem:[#allocation2 + $0x50]]
    %v524 = vstv %s523
    %v525 = vmul.f32 %v524, %v241
    %v526 = vmul.f32 %v524, %v246
    %v527 = vmul.f32 %v524, %v251
    %v528 = vadd.f32 %v448, %v525
    %v529 = vadd.f32 %v448, %v526
    %v530 = vadd.f32 %v448, %v527
    %s531 = sld [smem:[#allocation2 + $0x59]]
    %v532 = vstv %s531
    %v533 = vmul.f32 %v532, %v241
    %v534 = vmul.f32 %v532, %v246
    %v535 = vmul.f32 %v532, %v251
    %v536 = vadd.f32 %v450, %v533
    %v537 = vadd.f32 %v450, %v534
    %v538 = vadd.f32 %v450, %v535
    %s539 = sld [smem:[#allocation2 + $0x62]]
    %v540 = vstv %s539
    %v541 = vmul.f32 %v540, %v241
    %v542 = vmul.f32 %v540, %v246
    %v543 = vmul.f32 %v540, %v251
    %v544 = vadd.f32 %v452, %v541
    %v545 = vadd.f32 %v452, %v542
    %v546 = vadd.f32 %v452, %v543
    %s547 = sld [smem:[#allocation2 + $0x6b]]
    %v548 = vstv %s547
    %v549 = vmul.f32 %v548, %v241
    %v550 = vmul.f32 %v548, %v246
    %v551 = vmul.f32 %v548, %v251
    %v552 = vadd.f32 %v454, %v549
    %v553 = vadd.f32 %v454, %v550
    %v554 = vadd.f32 %v454, %v551
    %s555 = sld [smem:[#allocation2 + $0x74]]
    %v556 = vstv %s555
    %v557 = vmul.f32 %v556, %v241
    %v558 = vmul.f32 %v556, %v246
    %v559 = vmul.f32 %v556, %v251
    %v560 = vadd.f32 %v456, %v557
    %v561 = vadd.f32 %v456, %v558
    %v562 = vadd.f32 %v456, %v559
    %s563 = sld [smem:[#allocation2 + $0x7d]]
    %v564 = vstv %s563
    %v565 = vmul.f32 %v564, %v241
    %v566 = vmul.f32 %v564, %v246
    %v567 = vmul.f32 %v564, %v251
    %v568 = vadd.f32 %v458, %v565
    %v569 = vadd.f32 %v458, %v566
    %v570 = vadd.f32 %v458, %v567
    %s571 = sld [smem:[#allocation2 + $0x7]]
    %v572 = vstv %s571
    %v573 = vmul.f32 %v572, %v241
    %v574 = vmul.f32 %v572, %v246
    %v575 = vmul.f32 %v572, %v251
    %579 = vrot.lane.b32.xlu0 %v573, 127
    %v580 = vpop.permute.xlu0 %579
    %581 = vrot.lane.b32.xlu0 %v574, 127
    %v582 = vpop.permute.xlu0 %581
    %583 = vrot.lane.b32.xlu0 %v575, 127
    %v584 = vpop.permute.xlu0 %583
    %v588 = vadd.f32 %v464, %v580
    %v589 = vadd.f32 %v465, %v582
    %v590 = vadd.f32 %v466, %v584
    %s591 = sld [smem:[#allocation2 + $0x10]]
    %v592 = vstv %s591
    %v593 = vmul.f32 %v592, %v241
    %v594 = vmul.f32 %v592, %v246
    %v595 = vmul.f32 %v592, %v251
    %599 = vrot.lane.b32.xlu0 %v593, 127
    %v600 = vpop.permute.xlu0 %599
    %601 = vrot.lane.b32.xlu0 %v594, 127
    %v602 = vpop.permute.xlu0 %601
    %603 = vrot.lane.b32.xlu0 %v595, 127
    %v604 = vpop.permute.xlu0 %603
    %v608 = vadd.f32 %v472, %v600
    %v609 = vadd.f32 %v473, %v602
    %v610 = vadd.f32 %v474, %v604
    %s611 = sld [smem:[#allocation2 + $0x19]]
    %v612 = vstv %s611
    %v613 = vmul.f32 %v612, %v241
    %v614 = vmul.f32 %v612, %v246
    %v615 = vmul.f32 %v612, %v251
    %619 = vrot.lane.b32.xlu0 %v613, 127
    %v620 = vpop.permute.xlu0 %619
    %621 = vrot.lane.b32.xlu0 %v614, 127
    %v622 = vpop.permute.xlu0 %621
    %623 = vrot.lane.b32.xlu0 %v615, 127
    %v624 = vpop.permute.xlu0 %623
    %v628 = vadd.f32 %v480, %v620
    %v629 = vadd.f32 %v481, %v622
    %v630 = vadd.f32 %v482, %v624
    %s631 = sld [smem:[#allocation2 + $0x22]]
    %v632 = vstv %s631
    %v633 = vmul.f32 %v632, %v241
    %v634 = vmul.f32 %v632, %v246
    %v635 = vmul.f32 %v632, %v251
    %639 = vrot.lane.b32.xlu0 %v633, 127
    %v640 = vpop.permute.xlu0 %639
    %641 = vrot.lane.b32.xlu0 %v634, 127
    %v642 = vpop.permute.xlu0 %641
    %643 = vrot.lane.b32.xlu0 %v635, 127
    %v644 = vpop.permute.xlu0 %643
    %v648 = vadd.f32 %v488, %v640
    %v649 = vadd.f32 %v489, %v642
    %v650 = vadd.f32 %v490, %v644
    %s651 = sld [smem:[#allocation2 + $0x2b]]
    %v652 = vstv %s651
    %v653 = vmul.f32 %v652, %v241
    %v654 = vmul.f32 %v652, %v246
    %v655 = vmul.f32 %v652, %v251
    %659 = vrot.lane.b32.xlu0 %v653, 127
    %v660 = vpop.permute.xlu0 %659
    %661 = vrot.lane.b32.xlu0 %v654, 127
    %v662 = vpop.permute.xlu0 %661
    %663 = vrot.lane.b32.xlu0 %v655, 127
    %v664 = vpop.permute.xlu0 %663
    %v668 = vadd.f32 %v496, %v660
    %v669 = vadd.f32 %v497, %v662
    %v670 = vadd.f32 %v498, %v664
    %s671 = sld [smem:[#allocation2 + $0x34]]
    %v672 = vstv %s671
    %v673 = vmul.f32 %v672, %v241
    %v674 = vmul.f32 %v672, %v246
    %v675 = vmul.f32 %v672, %v251
    %679 = vrot.lane.b32.xlu0 %v673, 127
    %v680 = vpop.permute.xlu0 %679
    %681 = vrot.lane.b32.xlu0 %v674, 127
    %v682 = vpop.permute.xlu0 %681
    %683 = vrot.lane.b32.xlu0 %v675, 127
    %v684 = vpop.permute.xlu0 %683
    %v688 = vadd.f32 %v504, %v680
    %v689 = vadd.f32 %v505, %v682
    %v690 = vadd.f32 %v506, %v684
    %s691 = sld [smem:[#allocation2 + $0x3d]]
    %v692 = vstv %s691
    %v693 = vmul.f32 %v692, %v241
    %v694 = vmul.f32 %v692, %v246
    %v695 = vmul.f32 %v692, %v251
    %699 = vrot.lane.b32.xlu0 %v693, 127
    %v700 = vpop.permute.xlu0 %699
    %701 = vrot.lane.b32.xlu0 %v694, 127
    %v702 = vpop.permute.xlu0 %701
    %703 = vrot.lane.b32.xlu0 %v695, 127
    %v704 = vpop.permute.xlu0 %703
    %v708 = vadd.f32 %v512, %v700
    %v709 = vadd.f32 %v513, %v702
    %v710 = vadd.f32 %v514, %v704
    %s711 = sld [smem:[#allocation2 + $0x46]]
    %v712 = vstv %s711
    %v713 = vmul.f32 %v712, %v241
    %v714 = vmul.f32 %v712, %v246
    %v715 = vmul.f32 %v712, %v251
    %719 = vrot.lane.b32.xlu0 %v713, 127
    %v720 = vpop.permute.xlu0 %719
    %721 = vrot.lane.b32.xlu0 %v714, 127
    %v722 = vpop.permute.xlu0 %721
    %723 = vrot.lane.b32.xlu0 %v715, 127
    %v724 = vpop.permute.xlu0 %723
    %v728 = vadd.f32 %v520, %v720
    %v729 = vadd.f32 %v521, %v722
    %v730 = vadd.f32 %v522, %v724
    %s731 = sld [smem:[#allocation2 + $0x4f]]
    %v732 = vstv %s731
    %v733 = vmul.f32 %v732, %v241
    %v734 = vmul.f32 %v732, %v246
    %v735 = vmul.f32 %v732, %v251
    %739 = vrot.lane.b32.xlu0 %v733, 127
    %v740 = vpop.permute.xlu0 %739
    %741 = vrot.lane.b32.xlu0 %v734, 127
    %v742 = vpop.permute.xlu0 %741
    %743 = vrot.lane.b32.xlu0 %v735, 127
    %v744 = vpop.permute.xlu0 %743
    %v748 = vadd.f32 %v528, %v740
    %v749 = vadd.f32 %v529, %v742
    %v750 = vadd.f32 %v530, %v744
    %s751 = sld [smem:[#allocation2 + $0x58]]
    %v752 = vstv %s751
    %v753 = vmul.f32 %v752, %v241
    %v754 = vmul.f32 %v752, %v246
    %v755 = vmul.f32 %v752, %v251
    %759 = vrot.lane.b32.xlu0 %v753, 127
    %v760 = vpop.permute.xlu0 %759
    %761 = vrot.lane.b32.xlu0 %v754, 127
    %v762 = vpop.permute.xlu0 %761
    %763 = vrot.lane.b32.xlu0 %v755, 127
    %v764 = vpop.permute.xlu0 %763
    %v768 = vadd.f32 %v536, %v760
    %v769 = vadd.f32 %v537, %v762
    %v770 = vadd.f32 %v538, %v764
    %s771 = sld [smem:[#allocation2 + $0x61]]
    %v772 = vstv %s771
    %v773 = vmul.f32 %v772, %v241
    %v774 = vmul.f32 %v772, %v246
    %v775 = vmul.f32 %v772, %v251
    %779 = vrot.lane.b32.xlu0 %v773, 127
    %v780 = vpop.permute.xlu0 %779
    %781 = vrot.lane.b32.xlu0 %v774, 127
    %v782 = vpop.permute.xlu0 %781
    %783 = vrot.lane.b32.xlu0 %v775, 127
    %v784 = vpop.permute.xlu0 %783
    %v788 = vadd.f32 %v544, %v780
    %v789 = vadd.f32 %v545, %v782
    %v790 = vadd.f32 %v546, %v784
    %s791 = sld [smem:[#allocation2 + $0x6a]]
    %v792 = vstv %s791
    %v793 = vmul.f32 %v792, %v241
    %v794 = vmul.f32 %v792, %v246
    %v795 = vmul.f32 %v792, %v251
    %799 = vrot.lane.b32.xlu0 %v793, 127
    %v800 = vpop.permute.xlu0 %799
    %801 = vrot.lane.b32.xlu0 %v794, 127
    %v802 = vpop.permute.xlu0 %801
    %803 = vrot.lane.b32.xlu0 %v795, 127
    %v804 = vpop.permute.xlu0 %803
    %v808 = vadd.f32 %v552, %v800
    %v809 = vadd.f32 %v553, %v802
    %v810 = vadd.f32 %v554, %v804
    %s811 = sld [smem:[#allocation2 + $0x73]]
    %v812 = vstv %s811
    %v813 = vmul.f32 %v812, %v241
    %v814 = vmul.f32 %v812, %v246
    %v815 = vmul.f32 %v812, %v251
    %819 = vrot.lane.b32.xlu0 %v813, 127
    %v820 = vpop.permute.xlu0 %819
    %821 = vrot.lane.b32.xlu0 %v814, 127
    %v822 = vpop.permute.xlu0 %821
    %823 = vrot.lane.b32.xlu0 %v815, 127
    %v824 = vpop.permute.xlu0 %823
    %v828 = vadd.f32 %v560, %v820
    %v829 = vadd.f32 %v561, %v822
    %v830 = vadd.f32 %v562, %v824
    %s831 = sld [smem:[#allocation2 + $0x7c]]
    %v832 = vstv %s831
    %v833 = vmul.f32 %v832, %v241
    %v834 = vmul.f32 %v832, %v246
    %v835 = vmul.f32 %v832, %v251
    %839 = vrot.lane.b32.xlu0 %v833, 127
    %v840 = vpop.permute.xlu0 %839
    %841 = vrot.lane.b32.xlu0 %v834, 127
    %v842 = vpop.permute.xlu0 %841
    %843 = vrot.lane.b32.xlu0 %v835, 127
    %v844 = vpop.permute.xlu0 %843
    %v848 = vadd.f32 %v568, %v840
    %v849 = vadd.f32 %v569, %v842
    %v850 = vadd.f32 %v570, %v844
    %s851 = sld [smem:[#allocation2 + $0x6]]
    %v852 = vstv %s851
    %v853 = vmul.f32 %v852, %v241
    %v854 = vmul.f32 %v852, %v246
    %v855 = vmul.f32 %v852, %v251
    %859 = vrot.lane.b32.xlu0 %v853, 126
    %v860 = vpop.permute.xlu0 %859
    %861 = vrot.lane.b32.xlu0 %v854, 126
    %v862 = vpop.permute.xlu0 %861
    %863 = vrot.lane.b32.xlu0 %v855, 126
    %v864 = vpop.permute.xlu0 %863
    %v868 = vadd.f32 %v588, %v860
    %v869 = vadd.f32 %v589, %v862
    %v870 = vadd.f32 %v590, %v864
    %s871 = sld [smem:[#allocation2 + $0xf]]
    %v872 = vstv %s871
    %v873 = vmul.f32 %v872, %v241
    %v874 = vmul.f32 %v872, %v246
    %v875 = vmul.f32 %v872, %v251
    %879 = vrot.lane.b32.xlu0 %v873, 126
    %v880 = vpop.permute.xlu0 %879
    %881 = vrot.lane.b32.xlu0 %v874, 126
    %v882 = vpop.permute.xlu0 %881
    %883 = vrot.lane.b32.xlu0 %v875, 126
    %v884 = vpop.permute.xlu0 %883
    %v888 = vadd.f32 %v608, %v880
    %v889 = vadd.f32 %v609, %v882
    %v890 = vadd.f32 %v610, %v884
    %s891 = sld [smem:[#allocation2 + $0x18]]
    %v892 = vstv %s891
    %v893 = vmul.f32 %v892, %v241
    %v894 = vmul.f32 %v892, %v246
    %v895 = vmul.f32 %v892, %v251
    %899 = vrot.lane.b32.xlu0 %v893, 126
    %v900 = vpop.permute.xlu0 %899
    %901 = vrot.lane.b32.xlu0 %v894, 126
    %v902 = vpop.permute.xlu0 %901
    %903 = vrot.lane.b32.xlu0 %v895, 126
    %v904 = vpop.permute.xlu0 %903
    %v908 = vadd.f32 %v628, %v900
    %v909 = vadd.f32 %v629, %v902
    %v910 = vadd.f32 %v630, %v904
    %s911 = sld [smem:[#allocation2 + $0x21]]
    %v912 = vstv %s911
    %v913 = vmul.f32 %v912, %v241
    %v914 = vmul.f32 %v912, %v246
    %v915 = vmul.f32 %v912, %v251
    %919 = vrot.lane.b32.xlu0 %v913, 126
    %v920 = vpop.permute.xlu0 %919
    %921 = vrot.lane.b32.xlu0 %v914, 126
    %v922 = vpop.permute.xlu0 %921
    %923 = vrot.lane.b32.xlu0 %v915, 126
    %v924 = vpop.permute.xlu0 %923
    %v928 = vadd.f32 %v648, %v920
    %v929 = vadd.f32 %v649, %v922
    %v930 = vadd.f32 %v650, %v924
    %s931 = sld [smem:[#allocation2 + $0x2a]]
    %v932 = vstv %s931
    %v933 = vmul.f32 %v932, %v241
    %v934 = vmul.f32 %v932, %v246
    %v935 = vmul.f32 %v932, %v251
    %939 = vrot.lane.b32.xlu0 %v933, 126
    %v940 = vpop.permute.xlu0 %939
    %941 = vrot.lane.b32.xlu0 %v934, 126
    %v942 = vpop.permute.xlu0 %941
    %943 = vrot.lane.b32.xlu0 %v935, 126
    %v944 = vpop.permute.xlu0 %943
    %v948 = vadd.f32 %v668, %v940
    %v949 = vadd.f32 %v669, %v942
    %v950 = vadd.f32 %v670, %v944
    %s951 = sld [smem:[#allocation2 + $0x33]]
    %v952 = vstv %s951
    %v953 = vmul.f32 %v952, %v241
    %v954 = vmul.f32 %v952, %v246
    %v955 = vmul.f32 %v952, %v251
    %959 = vrot.lane.b32.xlu0 %v953, 126
    %v960 = vpop.permute.xlu0 %959
    %961 = vrot.lane.b32.xlu0 %v954, 126
    %v962 = vpop.permute.xlu0 %961
    %963 = vrot.lane.b32.xlu0 %v955, 126
    %v964 = vpop.permute.xlu0 %963
    %v968 = vadd.f32 %v688, %v960
    %v969 = vadd.f32 %v689, %v962
    %v970 = vadd.f32 %v690, %v964
    %s971 = sld [smem:[#allocation2 + $0x3c]]
    %v972 = vstv %s971
    %v973 = vmul.f32 %v972, %v241
    %v974 = vmul.f32 %v972, %v246
    %v975 = vmul.f32 %v972, %v251
    %979 = vrot.lane.b32.xlu0 %v973, 126
    %v980 = vpop.permute.xlu0 %979
    %981 = vrot.lane.b32.xlu0 %v974, 126
    %v982 = vpop.permute.xlu0 %981
    %983 = vrot.lane.b32.xlu0 %v975, 126
    %v984 = vpop.permute.xlu0 %983
    %v988 = vadd.f32 %v708, %v980
    %v989 = vadd.f32 %v709, %v982
    %v990 = vadd.f32 %v710, %v984
    %s991 = sld [smem:[#allocation2 + $0x45]]
    %v992 = vstv %s991
    %v993 = vmul.f32 %v992, %v241
    %v994 = vmul.f32 %v992, %v246
    %v995 = vmul.f32 %v992, %v251
    %999 = vrot.lane.b32.xlu0 %v993, 126
    %v1000 = vpop.permute.xlu0 %999
    %1001 = vrot.lane.b32.xlu0 %v994, 126
    %v1002 = vpop.permute.xlu0 %1001
    %1003 = vrot.lane.b32.xlu0 %v995, 126
    %v1004 = vpop.permute.xlu0 %1003
    %v1008 = vadd.f32 %v728, %v1000
    %v1009 = vadd.f32 %v729, %v1002
    %v1010 = vadd.f32 %v730, %v1004
    %s1011 = sld [smem:[#allocation2 + $0x4e]]
    %v1012 = vstv %s1011
    %v1013 = vmul.f32 %v1012, %v241
    %v1014 = vmul.f32 %v1012, %v246
    %v1015 = vmul.f32 %v1012, %v251
    %1019 = vrot.lane.b32.xlu0 %v1013, 126
    %v1020 = vpop.permute.xlu0 %1019
    %1021 = vrot.lane.b32.xlu0 %v1014, 126
    %v1022 = vpop.permute.xlu0 %1021
    %1023 = vrot.lane.b32.xlu0 %v1015, 126
    %v1024 = vpop.permute.xlu0 %1023
    %v1028 = vadd.f32 %v748, %v1020
    %v1029 = vadd.f32 %v749, %v1022
    %v1030 = vadd.f32 %v750, %v1024
    %s1031 = sld [smem:[#allocation2 + $0x57]]
    %v1032 = vstv %s1031
    %v1033 = vmul.f32 %v1032, %v241
    %v1034 = vmul.f32 %v1032, %v246
    %v1035 = vmul.f32 %v1032, %v251
    %1039 = vrot.lane.b32.xlu0 %v1033, 126
    %v1040 = vpop.permute.xlu0 %1039
    %1041 = vrot.lane.b32.xlu0 %v1034, 126
    %v1042 = vpop.permute.xlu0 %1041
    %1043 = vrot.lane.b32.xlu0 %v1035, 126
    %v1044 = vpop.permute.xlu0 %1043
    %v1048 = vadd.f32 %v768, %v1040
    %v1049 = vadd.f32 %v769, %v1042
    %v1050 = vadd.f32 %v770, %v1044
    %s1051 = sld [smem:[#allocation2 + $0x60]]
    %v1052 = vstv %s1051
    %v1053 = vmul.f32 %v1052, %v241
    %v1054 = vmul.f32 %v1052, %v246
    %v1055 = vmul.f32 %v1052, %v251
    %1059 = vrot.lane.b32.xlu0 %v1053, 126
    %v1060 = vpop.permute.xlu0 %1059
    %1061 = vrot.lane.b32.xlu0 %v1054, 126
    %v1062 = vpop.permute.xlu0 %1061
    %1063 = vrot.lane.b32.xlu0 %v1055, 126
    %v1064 = vpop.permute.xlu0 %1063
    %v1068 = vadd.f32 %v788, %v1060
    %v1069 = vadd.f32 %v789, %v1062
    %v1070 = vadd.f32 %v790, %v1064
    %s1071 = sld [smem:[#allocation2 + $0x69]]
    %v1072 = vstv %s1071
    %v1073 = vmul.f32 %v1072, %v241
    %v1074 = vmul.f32 %v1072, %v246
    %v1075 = vmul.f32 %v1072, %v251
    %1079 = vrot.lane.b32.xlu0 %v1073, 126
    %v1080 = vpop.permute.xlu0 %1079
    %1081 = vrot.lane.b32.xlu0 %v1074, 126
    %v1082 = vpop.permute.xlu0 %1081
    %1083 = vrot.lane.b32.xlu0 %v1075, 126
    %v1084 = vpop.permute.xlu0 %1083
    %v1088 = vadd.f32 %v808, %v1080
    %v1089 = vadd.f32 %v809, %v1082
    %v1090 = vadd.f32 %v810, %v1084
    %s1091 = sld [smem:[#allocation2 + $0x72]]
    %v1092 = vstv %s1091
    %v1093 = vmul.f32 %v1092, %v241
    %v1094 = vmul.f32 %v1092, %v246
    %v1095 = vmul.f32 %v1092, %v251
    %1099 = vrot.lane.b32.xlu0 %v1093, 126
    %v1100 = vpop.permute.xlu0 %1099
    %1101 = vrot.lane.b32.xlu0 %v1094, 126
    %v1102 = vpop.permute.xlu0 %1101
    %1103 = vrot.lane.b32.xlu0 %v1095, 126
    %v1104 = vpop.permute.xlu0 %1103
    %v1108 = vadd.f32 %v828, %v1100
    %v1109 = vadd.f32 %v829, %v1102
    %v1110 = vadd.f32 %v830, %v1104
    %s1111 = sld [smem:[#allocation2 + $0x7b]]
    %v1112 = vstv %s1111
    %v1113 = vmul.f32 %v1112, %v241
    %v1114 = vmul.f32 %v1112, %v246
    %v1115 = vmul.f32 %v1112, %v251
    %1119 = vrot.lane.b32.xlu0 %v1113, 126
    %v1120 = vpop.permute.xlu0 %1119
    %1121 = vrot.lane.b32.xlu0 %v1114, 126
    %v1122 = vpop.permute.xlu0 %1121
    %1123 = vrot.lane.b32.xlu0 %v1115, 126
    %v1124 = vpop.permute.xlu0 %1123
    %v1128 = vadd.f32 %v848, %v1120
    %v1129 = vadd.f32 %v849, %v1122
    %v1130 = vadd.f32 %v850, %v1124
    %s1131 = sld [smem:[#allocation2 + $0x5]]
    %v1132 = vstv %s1131
    %v1133 = vmul.f32 %v1132, %v241
    %v1134 = vmul.f32 %v1132, %v246
    %v1135 = vmul.f32 %v1132, %v251
    %v1136 = vmul.f32 %v1132, %v256
    %vm1141 = vcmask 1046528
    %v1142 = vrot.slane %v1133, 1
    %v1143 = vrot.slane %v1134, 1
    %v1144 = vsel %vm1141, %v1142, %v1143
    %v1145 = vrot.slane %v1135, 1
    %v1146 = vsel %vm1141, %v1143, %v1145
    %v1147 = vrot.slane %v1136, 1
    %v1148 = vsel %vm1141, %v1145, %v1147
    %v1152 = vadd.f32 %v868, %v1144
    %v1153 = vadd.f32 %v869, %v1146
    %v1154 = vadd.f32 %v870, %v1148
    %s1155 = sld [smem:[#allocation2 + $0xe]]
    %v1156 = vstv %s1155
    %v1157 = vmul.f32 %v1156, %v241
    %v1158 = vmul.f32 %v1156, %v246
    %v1159 = vmul.f32 %v1156, %v251
    %v1160 = vmul.f32 %v1156, %v256
    %v1165 = vrot.slane %v1157, 1
    %v1166 = vrot.slane %v1158, 1
    %v1167 = vsel %vm1141, %v1165, %v1166
    %v1168 = vrot.slane %v1159, 1
    %v1169 = vsel %vm1141, %v1166, %v1168
    %v1170 = vrot.slane %v1160, 1
    %v1171 = vsel %vm1141, %v1168, %v1170
    %v1175 = vadd.f32 %v888, %v1167
    %v1176 = vadd.f32 %v889, %v1169
    %v1177 = vadd.f32 %v890, %v1171
    %s1178 = sld [smem:[#allocation2 + $0x17]]
    %v1179 = vstv %s1178
    %v1180 = vmul.f32 %v1179, %v241
    %v1181 = vmul.f32 %v1179, %v246
    %v1182 = vmul.f32 %v1179, %v251
    %v1183 = vmul.f32 %v1179, %v256
    %v1188 = vrot.slane %v1180, 1
    %v1189 = vrot.slane %v1181, 1
    %v1190 = vsel %vm1141, %v1188, %v1189
    %v1191 = vrot.slane %v1182, 1
    %v1192 = vsel %vm1141, %v1189, %v1191
    %v1193 = vrot.slane %v1183, 1
    %v1194 = vsel %vm1141, %v1191, %v1193
    %v1198 = vadd.f32 %v908, %v1190
    %v1199 = vadd.f32 %v909, %v1192
    %v1200 = vadd.f32 %v910, %v1194
    %s1201 = sld [smem:[#allocation2 + $0x20]]
    %v1202 = vstv %s1201
    %v1203 = vmul.f32 %v1202, %v241
    %v1204 = vmul.f32 %v1202, %v246
    %v1205 = vmul.f32 %v1202, %v251
    %v1206 = vmul.f32 %v1202, %v256
    %v1211 = vrot.slane %v1203, 1
    %v1212 = vrot.slane %v1204, 1
    %v1213 = vsel %vm1141, %v1211, %v1212
    %v1214 = vrot.slane %v1205, 1
    %v1215 = vsel %vm1141, %v1212, %v1214
    %v1216 = vrot.slane %v1206, 1
    %v1217 = vsel %vm1141, %v1214, %v1216
    %v1221 = vadd.f32 %v928, %v1213
    %v1222 = vadd.f32 %v929, %v1215
    %v1223 = vadd.f32 %v930, %v1217
    %s1224 = sld [smem:[#allocation2 + $0x29]]
    %v1225 = vstv %s1224
    %v1226 = vmul.f32 %v1225, %v241
    %v1227 = vmul.f32 %v1225, %v246
    %v1228 = vmul.f32 %v1225, %v251
    %v1229 = vmul.f32 %v1225, %v256
    %v1234 = vrot.slane %v1226, 1
    %v1235 = vrot.slane %v1227, 1
    %v1236 = vsel %vm1141, %v1234, %v1235
    %v1237 = vrot.slane %v1228, 1
    %v1238 = vsel %vm1141, %v1235, %v1237
    %v1239 = vrot.slane %v1229, 1
    %v1240 = vsel %vm1141, %v1237, %v1239
    %v1244 = vadd.f32 %v948, %v1236
    %v1245 = vadd.f32 %v949, %v1238
    %v1246 = vadd.f32 %v950, %v1240
    %s1247 = sld [smem:[#allocation2 + $0x32]]
    %v1248 = vstv %s1247
    %v1249 = vmul.f32 %v1248, %v241
    %v1250 = vmul.f32 %v1248, %v246
    %v1251 = vmul.f32 %v1248, %v251
    %v1252 = vmul.f32 %v1248, %v256
    %v1257 = vrot.slane %v1249, 1
    %v1258 = vrot.slane %v1250, 1
    %v1259 = vsel %vm1141, %v1257, %v1258
    %v1260 = vrot.slane %v1251, 1
    %v1261 = vsel %vm1141, %v1258, %v1260
    %v1262 = vrot.slane %v1252, 1
    %v1263 = vsel %vm1141, %v1260, %v1262
    %v1267 = vadd.f32 %v968, %v1259
    %v1268 = vadd.f32 %v969, %v1261
    %v1269 = vadd.f32 %v970, %v1263
    %s1270 = sld [smem:[#allocation2 + $0x3b]]
    %v1271 = vstv %s1270
    %v1272 = vmul.f32 %v1271, %v241
    %v1273 = vmul.f32 %v1271, %v246
    %v1274 = vmul.f32 %v1271, %v251
    %v1275 = vmul.f32 %v1271, %v256
    %v1280 = vrot.slane %v1272, 1
    %v1281 = vrot.slane %v1273, 1
    %v1282 = vsel %vm1141, %v1280, %v1281
    %v1283 = vrot.slane %v1274, 1
    %v1284 = vsel %vm1141, %v1281, %v1283
    %v1285 = vrot.slane %v1275, 1
    %v1286 = vsel %vm1141, %v1283, %v1285
    %v1290 = vadd.f32 %v988, %v1282
    %v1291 = vadd.f32 %v989, %v1284
    %v1292 = vadd.f32 %v990, %v1286
    %s1293 = sld [smem:[#allocation2 + $0x44]]
    %v1294 = vstv %s1293
    %v1295 = vmul.f32 %v1294, %v241
    %v1296 = vmul.f32 %v1294, %v246
    %v1297 = vmul.f32 %v1294, %v251
    %v1298 = vmul.f32 %v1294, %v256
    %v1303 = vrot.slane %v1295, 1
    %v1304 = vrot.slane %v1296, 1
    %v1305 = vsel %vm1141, %v1303, %v1304
    %v1306 = vrot.slane %v1297, 1
    %v1307 = vsel %vm1141, %v1304, %v1306
    %v1308 = vrot.slane %v1298, 1
    %v1309 = vsel %vm1141, %v1306, %v1308
    %v1313 = vadd.f32 %v1008, %v1305
    %v1314 = vadd.f32 %v1009, %v1307
    %v1315 = vadd.f32 %v1010, %v1309
    %s1316 = sld [smem:[#allocation2 + $0x4d]]
    %v1317 = vstv %s1316
    %v1318 = vmul.f32 %v1317, %v241
    %v1319 = vmul.f32 %v1317, %v246
    %v1320 = vmul.f32 %v1317, %v251
    %v1321 = vmul.f32 %v1317, %v256
    %v1326 = vrot.slane %v1318, 1
    %v1327 = vrot.slane %v1319, 1
    %v1328 = vsel %vm1141, %v1326, %v1327
    %v1329 = vrot.slane %v1320, 1
    %v1330 = vsel %vm1141, %v1327, %v1329
    %v1331 = vrot.slane %v1321, 1
    %v1332 = vsel %vm1141, %v1329, %v1331
    %v1336 = vadd.f32 %v1028, %v1328
    %v1337 = vadd.f32 %v1029, %v1330
    %v1338 = vadd.f32 %v1030, %v1332
    %s1339 = sld [smem:[#allocation2 + $0x56]]
    %v1340 = vstv %s1339
    %v1341 = vmul.f32 %v1340, %v241
    %v1342 = vmul.f32 %v1340, %v246
    %v1343 = vmul.f32 %v1340, %v251
    %v1344 = vmul.f32 %v1340, %v256
    %v1349 = vrot.slane %v1341, 1
    %v1350 = vrot.slane %v1342, 1
    %v1351 = vsel %vm1141, %v1349, %v1350
    %v1352 = vrot.slane %v1343, 1
    %v1353 = vsel %vm1141, %v1350, %v1352
    %v1354 = vrot.slane %v1344, 1
    %v1355 = vsel %vm1141, %v1352, %v1354
    %v1359 = vadd.f32 %v1048, %v1351
    %v1360 = vadd.f32 %v1049, %v1353
    %v1361 = vadd.f32 %v1050, %v1355
    %s1362 = sld [smem:[#allocation2 + $0x5f]]
    %v1363 = vstv %s1362
    %v1364 = vmul.f32 %v1363, %v241
    %v1365 = vmul.f32 %v1363, %v246
    %v1366 = vmul.f32 %v1363, %v251
    %v1367 = vmul.f32 %v1363, %v256
    %v1372 = vrot.slane %v1364, 1
    %v1373 = vrot.slane %v1365, 1
    %v1374 = vsel %vm1141, %v1372, %v1373
    %v1375 = vrot.slane %v1366, 1
    %v1376 = vsel %vm1141, %v1373, %v1375
    %v1377 = vrot.slane %v1367, 1
    %v1378 = vsel %vm1141, %v1375, %v1377
    %v1382 = vadd.f32 %v1068, %v1374
    %v1383 = vadd.f32 %v1069, %v1376
    %v1384 = vadd.f32 %v1070, %v1378
    %s1385 = sld [smem:[#allocation2 + $0x68]]
    %v1386 = vstv %s1385
    %v1387 = vmul.f32 %v1386, %v241
    %v1388 = vmul.f32 %v1386, %v246
    %v1389 = vmul.f32 %v1386, %v251
    %v1390 = vmul.f32 %v1386, %v256
    %v1395 = vrot.slane %v1387, 1
    %v1396 = vrot.slane %v1388, 1
    %v1397 = vsel %vm1141, %v1395, %v1396
    %v1398 = vrot.slane %v1389, 1
    %v1399 = vsel %vm1141, %v1396, %v1398
    %v1400 = vrot.slane %v1390, 1
    %v1401 = vsel %vm1141, %v1398, %v1400
    %v1405 = vadd.f32 %v1088, %v1397
    %v1406 = vadd.f32 %v1089, %v1399
    %v1407 = vadd.f32 %v1090, %v1401
    %s1408 = sld [smem:[#allocation2 + $0x71]]
    %v1409 = vstv %s1408
    %v1410 = vmul.f32 %v1409, %v241
    %v1411 = vmul.f32 %v1409, %v246
    %v1412 = vmul.f32 %v1409, %v251
    %v1413 = vmul.f32 %v1409, %v256
    %v1418 = vrot.slane %v1410, 1
    %v1419 = vrot.slane %v1411, 1
    %v1420 = vsel %vm1141, %v1418, %v1419
    %v1421 = vrot.slane %v1412, 1
    %v1422 = vsel %vm1141, %v1419, %v1421
    %v1423 = vrot.slane %v1413, 1
    %v1424 = vsel %vm1141, %v1421, %v1423
    %v1428 = vadd.f32 %v1108, %v1420
    %v1429 = vadd.f32 %v1109, %v1422
    %v1430 = vadd.f32 %v1110, %v1424
    %s1431 = sld [smem:[#allocation2 + $0x7a]]
    %v1432 = vstv %s1431
    %v1433 = vmul.f32 %v1432, %v241
    %v1434 = vmul.f32 %v1432, %v246
    %v1435 = vmul.f32 %v1432, %v251
    %v1436 = vmul.f32 %v1432, %v256
    %v1441 = vrot.slane %v1433, 1
    %v1442 = vrot.slane %v1434, 1
    %v1443 = vsel %vm1141, %v1441, %v1442
    %v1444 = vrot.slane %v1435, 1
    %v1445 = vsel %vm1141, %v1442, %v1444
    %v1446 = vrot.slane %v1436, 1
    %v1447 = vsel %vm1141, %v1444, %v1446
    %v1451 = vadd.f32 %v1128, %v1443
    %v1452 = vadd.f32 %v1129, %v1445
    %v1453 = vadd.f32 %v1130, %v1447
    %s1454 = sld [smem:[#allocation2 + $0x4]]
    %v1455 = vstv %s1454
    %v1456 = vmul.f32 %v1455, %v241
    %v1457 = vmul.f32 %v1455, %v246
    %v1458 = vmul.f32 %v1455, %v251
    %v1459 = vmul.f32 %v1455, %v256
    %v1464 = vrot.slane %v1456, 1
    %v1465 = vrot.slane %v1457, 1
    %v1466 = vsel %vm1141, %v1464, %v1465
    %v1467 = vrot.slane %v1458, 1
    %v1468 = vsel %vm1141, %v1465, %v1467
    %v1469 = vrot.slane %v1459, 1
    %v1470 = vsel %vm1141, %v1467, %v1469
    %1471 = vrot.lane.b32.xlu0 %v1466, 127
    %v1472 = vpop.permute.xlu0 %1471
    %1473 = vrot.lane.b32.xlu0 %v1468, 127
    %v1474 = vpop.permute.xlu0 %1473
    %1475 = vrot.lane.b32.xlu0 %v1470, 127
    %v1476 = vpop.permute.xlu0 %1475
    %v1480 = vadd.f32 %v1152, %v1472
    %v1481 = vadd.f32 %v1153, %v1474
    %v1482 = vadd.f32 %v1154, %v1476
    %s1483 = sld [smem:[#allocation2 + $0xd]]
    %v1484 = vstv %s1483
    %v1485 = vmul.f32 %v1484, %v241
    %v1486 = vmul.f32 %v1484, %v246
    %v1487 = vmul.f32 %v1484, %v251
    %v1488 = vmul.f32 %v1484, %v256
    %v1493 = vrot.slane %v1485, 1
    %v1494 = vrot.slane %v1486, 1
    %v1495 = vsel %vm1141, %v1493, %v1494
    %v1496 = vrot.slane %v1487, 1
    %v1497 = vsel %vm1141, %v1494, %v1496
    %v1498 = vrot.slane %v1488, 1
    %v1499 = vsel %vm1141, %v1496, %v1498
    %1500 = vrot.lane.b32.xlu0 %v1495, 127
    %v1501 = vpop.permute.xlu0 %1500
    %1502 = vrot.lane.b32.xlu0 %v1497, 127
    %v1503 = vpop.permute.xlu0 %1502
    %1504 = vrot.lane.b32.xlu0 %v1499, 127
    %v1505 = vpop.permute.xlu0 %1504
    %v1509 = vadd.f32 %v1175, %v1501
    %v1510 = vadd.f32 %v1176, %v1503
    %v1511 = vadd.f32 %v1177, %v1505
    %s1512 = sld [smem:[#allocation2 + $0x16]]
    %v1513 = vstv %s1512
    %v1514 = vmul.f32 %v1513, %v241
    %v1515 = vmul.f32 %v1513, %v246
    %v1516 = vmul.f32 %v1513, %v251
    %v1517 = vmul.f32 %v1513, %v256
    %v1522 = vrot.slane %v1514, 1
    %v1523 = vrot.slane %v1515, 1
    %v1524 = vsel %vm1141, %v1522, %v1523
    %v1525 = vrot.slane %v1516, 1
    %v1526 = vsel %vm1141, %v1523, %v1525
    %v1527 = vrot.slane %v1517, 1
    %v1528 = vsel %vm1141, %v1525, %v1527
    %1529 = vrot.lane.b32.xlu0 %v1524, 127
    %v1530 = vpop.permute.xlu0 %1529
    %1531 = vrot.lane.b32.xlu0 %v1526, 127
    %v1532 = vpop.permute.xlu0 %1531
    %1533 = vrot.lane.b32.xlu0 %v1528, 127
    %v1534 = vpop.permute.xlu0 %1533
    %v1538 = vadd.f32 %v1198, %v1530
    %v1539 = vadd.f32 %v1199, %v1532
    %v1540 = vadd.f32 %v1200, %v1534
    %s1541 = sld [smem:[#allocation2 + $0x1f]]
    %v1542 = vstv %s1541
    %v1543 = vmul.f32 %v1542, %v241
    %v1544 = vmul.f32 %v1542, %v246
    %v1545 = vmul.f32 %v1542, %v251
    %v1546 = vmul.f32 %v1542, %v256
    %v1551 = vrot.slane %v1543, 1
    %v1552 = vrot.slane %v1544, 1
    %v1553 = vsel %vm1141, %v1551, %v1552
    %v1554 = vrot.slane %v1545, 1
    %v1555 = vsel %vm1141, %v1552, %v1554
    %v1556 = vrot.slane %v1546, 1
    %v1557 = vsel %vm1141, %v1554, %v1556
    %1558 = vrot.lane.b32.xlu0 %v1553, 127
    %v1559 = vpop.permute.xlu0 %1558
    %1560 = vrot.lane.b32.xlu0 %v1555, 127
    %v1561 = vpop.permute.xlu0 %1560
    %1562 = vrot.lane.b32.xlu0 %v1557, 127
    %v1563 = vpop.permute.xlu0 %1562
    %v1567 = vadd.f32 %v1221, %v1559
    %v1568 = vadd.f32 %v1222, %v1561
    %v1569 = vadd.f32 %v1223, %v1563
    %s1570 = sld [smem:[#allocation2 + $0x28]]
    %v1571 = vstv %s1570
    %v1572 = vmul.f32 %v1571, %v241
    %v1573 = vmul.f32 %v1571, %v246
    %v1574 = vmul.f32 %v1571, %v251
    %v1575 = vmul.f32 %v1571, %v256
    %v1580 = vrot.slane %v1572, 1
    %v1581 = vrot.slane %v1573, 1
    %v1582 = vsel %vm1141, %v1580, %v1581
    %v1583 = vrot.slane %v1574, 1
    %v1584 = vsel %vm1141, %v1581, %v1583
    %v1585 = vrot.slane %v1575, 1
    %v1586 = vsel %vm1141, %v1583, %v1585
    %1587 = vrot.lane.b32.xlu0 %v1582, 127
    %v1588 = vpop.permute.xlu0 %1587
    %1589 = vrot.lane.b32.xlu0 %v1584, 127
    %v1590 = vpop.permute.xlu0 %1589
    %1591 = vrot.lane.b32.xlu0 %v1586, 127
    %v1592 = vpop.permute.xlu0 %1591
    %v1596 = vadd.f32 %v1244, %v1588
    %v1597 = vadd.f32 %v1245, %v1590
    %v1598 = vadd.f32 %v1246, %v1592
    %s1599 = sld [smem:[#allocation2 + $0x31]]
    %v1600 = vstv %s1599
    %v1601 = vmul.f32 %v1600, %v241
    %v1602 = vmul.f32 %v1600, %v246
    %v1603 = vmul.f32 %v1600, %v251
    %v1604 = vmul.f32 %v1600, %v256
    %v1609 = vrot.slane %v1601, 1
    %v1610 = vrot.slane %v1602, 1
    %v1611 = vsel %vm1141, %v1609, %v1610
    %v1612 = vrot.slane %v1603, 1
    %v1613 = vsel %vm1141, %v1610, %v1612
    %v1614 = vrot.slane %v1604, 1
    %v1615 = vsel %vm1141, %v1612, %v1614
    %1616 = vrot.lane.b32.xlu0 %v1611, 127
    %v1617 = vpop.permute.xlu0 %1616
    %1618 = vrot.lane.b32.xlu0 %v1613, 127
    %v1619 = vpop.permute.xlu0 %1618
    %1620 = vrot.lane.b32.xlu0 %v1615, 127
    %v1621 = vpop.permute.xlu0 %1620
    %v1625 = vadd.f32 %v1267, %v1617
    %v1626 = vadd.f32 %v1268, %v1619
    %v1627 = vadd.f32 %v1269, %v1621
    %s1628 = sld [smem:[#allocation2 + $0x3a]]
    %v1629 = vstv %s1628
    %v1630 = vmul.f32 %v1629, %v241
    %v1631 = vmul.f32 %v1629, %v246
    %v1632 = vmul.f32 %v1629, %v251
    %v1633 = vmul.f32 %v1629, %v256
    %v1638 = vrot.slane %v1630, 1
    %v1639 = vrot.slane %v1631, 1
    %v1640 = vsel %vm1141, %v1638, %v1639
    %v1641 = vrot.slane %v1632, 1
    %v1642 = vsel %vm1141, %v1639, %v1641
    %v1643 = vrot.slane %v1633, 1
    %v1644 = vsel %vm1141, %v1641, %v1643
    %1645 = vrot.lane.b32.xlu0 %v1640, 127
    %v1646 = vpop.permute.xlu0 %1645
    %1647 = vrot.lane.b32.xlu0 %v1642, 127
    %v1648 = vpop.permute.xlu0 %1647
    %1649 = vrot.lane.b32.xlu0 %v1644, 127
    %v1650 = vpop.permute.xlu0 %1649
    %v1654 = vadd.f32 %v1290, %v1646
    %v1655 = vadd.f32 %v1291, %v1648
    %v1656 = vadd.f32 %v1292, %v1650
    %s1657 = sld [smem:[#allocation2 + $0x43]]
    %v1658 = vstv %s1657
    %v1659 = vmul.f32 %v1658, %v241
    %v1660 = vmul.f32 %v1658, %v246
    %v1661 = vmul.f32 %v1658, %v251
    %v1662 = vmul.f32 %v1658, %v256
    %v1667 = vrot.slane %v1659, 1
    %v1668 = vrot.slane %v1660, 1
    %v1669 = vsel %vm1141, %v1667, %v1668
    %v1670 = vrot.slane %v1661, 1
    %v1671 = vsel %vm1141, %v1668, %v1670
    %v1672 = vrot.slane %v1662, 1
    %v1673 = vsel %vm1141, %v1670, %v1672
    %1674 = vrot.lane.b32.xlu0 %v1669, 127
    %v1675 = vpop.permute.xlu0 %1674
    %1676 = vrot.lane.b32.xlu0 %v1671, 127
    %v1677 = vpop.permute.xlu0 %1676
    %1678 = vrot.lane.b32.xlu0 %v1673, 127
    %v1679 = vpop.permute.xlu0 %1678
    %v1683 = vadd.f32 %v1313, %v1675
    %v1684 = vadd.f32 %v1314, %v1677
    %v1685 = vadd.f32 %v1315, %v1679
    %s1686 = sld [smem:[#allocation2 + $0x4c]]
    %v1687 = vstv %s1686
    %v1688 = vmul.f32 %v1687, %v241
    %v1689 = vmul.f32 %v1687, %v246
    %v1690 = vmul.f32 %v1687, %v251
    %v1691 = vmul.f32 %v1687, %v256
    %v1696 = vrot.slane %v1688, 1
    %v1697 = vrot.slane %v1689, 1
    %v1698 = vsel %vm1141, %v1696, %v1697
    %v1699 = vrot.slane %v1690, 1
    %v1700 = vsel %vm1141, %v1697, %v1699
    %v1701 = vrot.slane %v1691, 1
    %v1702 = vsel %vm1141, %v1699, %v1701
    %1703 = vrot.lane.b32.xlu0 %v1698, 127
    %v1704 = vpop.permute.xlu0 %1703
    %1705 = vrot.lane.b32.xlu0 %v1700, 127
    %v1706 = vpop.permute.xlu0 %1705
    %1707 = vrot.lane.b32.xlu0 %v1702, 127
    %v1708 = vpop.permute.xlu0 %1707
    %v1712 = vadd.f32 %v1336, %v1704
    %v1713 = vadd.f32 %v1337, %v1706
    %v1714 = vadd.f32 %v1338, %v1708
    %s1715 = sld [smem:[#allocation2 + $0x55]]
    %v1716 = vstv %s1715
    %v1717 = vmul.f32 %v1716, %v241
    %v1718 = vmul.f32 %v1716, %v246
    %v1719 = vmul.f32 %v1716, %v251
    %v1720 = vmul.f32 %v1716, %v256
    %v1725 = vrot.slane %v1717, 1
    %v1726 = vrot.slane %v1718, 1
    %v1727 = vsel %vm1141, %v1725, %v1726
    %v1728 = vrot.slane %v1719, 1
    %v1729 = vsel %vm1141, %v1726, %v1728
    %v1730 = vrot.slane %v1720, 1
    %v1731 = vsel %vm1141, %v1728, %v1730
    %1732 = vrot.lane.b32.xlu0 %v1727, 127
    %v1733 = vpop.permute.xlu0 %1732
    %1734 = vrot.lane.b32.xlu0 %v1729, 127
    %v1735 = vpop.permute.xlu0 %1734
    %1736 = vrot.lane.b32.xlu0 %v1731, 127
    %v1737 = vpop.permute.xlu0 %1736
    %v1741 = vadd.f32 %v1359, %v1733
    %v1742 = vadd.f32 %v1360, %v1735
    %v1743 = vadd.f32 %v1361, %v1737
    %s1744 = sld [smem:[#allocation2 + $0x5e]]
    %v1745 = vstv %s1744
    %v1746 = vmul.f32 %v1745, %v241
    %v1747 = vmul.f32 %v1745, %v246
    %v1748 = vmul.f32 %v1745, %v251
    %v1749 = vmul.f32 %v1745, %v256
    %v1754 = vrot.slane %v1746, 1
    %v1755 = vrot.slane %v1747, 1
    %v1756 = vsel %vm1141, %v1754, %v1755
    %v1757 = vrot.slane %v1748, 1
    %v1758 = vsel %vm1141, %v1755, %v1757
    %v1759 = vrot.slane %v1749, 1
    %v1760 = vsel %vm1141, %v1757, %v1759
    %1761 = vrot.lane.b32.xlu0 %v1756, 127
    %v1762 = vpop.permute.xlu0 %1761
    %1763 = vrot.lane.b32.xlu0 %v1758, 127
    %v1764 = vpop.permute.xlu0 %1763
    %1765 = vrot.lane.b32.xlu0 %v1760, 127
    %v1766 = vpop.permute.xlu0 %1765
    %v1770 = vadd.f32 %v1382, %v1762
    %v1771 = vadd.f32 %v1383, %v1764
    %v1772 = vadd.f32 %v1384, %v1766
    %s1773 = sld [smem:[#allocation2 + $0x67]]
    %v1774 = vstv %s1773
    %v1775 = vmul.f32 %v1774, %v241
    %v1776 = vmul.f32 %v1774, %v246
    %v1777 = vmul.f32 %v1774, %v251
    %v1778 = vmul.f32 %v1774, %v256
    %v1783 = vrot.slane %v1775, 1
    %v1784 = vrot.slane %v1776, 1
    %v1785 = vsel %vm1141, %v1783, %v1784
    %v1786 = vrot.slane %v1777, 1
    %v1787 = vsel %vm1141, %v1784, %v1786
    %v1788 = vrot.slane %v1778, 1
    %v1789 = vsel %vm1141, %v1786, %v1788
    %1790 = vrot.lane.b32.xlu0 %v1785, 127
    %v1791 = vpop.permute.xlu0 %1790
    %1792 = vrot.lane.b32.xlu0 %v1787, 127
    %v1793 = vpop.permute.xlu0 %1792
    %1794 = vrot.lane.b32.xlu0 %v1789, 127
    %v1795 = vpop.permute.xlu0 %1794
    %v1799 = vadd.f32 %v1405, %v1791
    %v1800 = vadd.f32 %v1406, %v1793
    %v1801 = vadd.f32 %v1407, %v1795
    %s1802 = sld [smem:[#allocation2 + $0x70]]
    %v1803 = vstv %s1802
    %v1804 = vmul.f32 %v1803, %v241
    %v1805 = vmul.f32 %v1803, %v246
    %v1806 = vmul.f32 %v1803, %v251
    %v1807 = vmul.f32 %v1803, %v256
    %v1812 = vrot.slane %v1804, 1
    %v1813 = vrot.slane %v1805, 1
    %v1814 = vsel %vm1141, %v1812, %v1813
    %v1815 = vrot.slane %v1806, 1
    %v1816 = vsel %vm1141, %v1813, %v1815
    %v1817 = vrot.slane %v1807, 1
    %v1818 = vsel %vm1141, %v1815, %v1817
    %1819 = vrot.lane.b32.xlu0 %v1814, 127
    %v1820 = vpop.permute.xlu0 %1819
    %1821 = vrot.lane.b32.xlu0 %v1816, 127
    %v1822 = vpop.permute.xlu0 %1821
    %1823 = vrot.lane.b32.xlu0 %v1818, 127
    %v1824 = vpop.permute.xlu0 %1823
    %v1828 = vadd.f32 %v1428, %v1820
    %v1829 = vadd.f32 %v1429, %v1822
    %v1830 = vadd.f32 %v1430, %v1824
    %s1831 = sld [smem:[#allocation2 + $0x79]]
    %v1832 = vstv %s1831
    %v1833 = vmul.f32 %v1832, %v241
    %v1834 = vmul.f32 %v1832, %v246
    %v1835 = vmul.f32 %v1832, %v251
    %v1836 = vmul.f32 %v1832, %v256
    %v1841 = vrot.slane %v1833, 1
    %v1842 = vrot.slane %v1834, 1
    %v1843 = vsel %vm1141, %v1841, %v1842
    %v1844 = vrot.slane %v1835, 1
    %v1845 = vsel %vm1141, %v1842, %v1844
    %v1846 = vrot.slane %v1836, 1
    %v1847 = vsel %vm1141, %v1844, %v1846
    %1848 = vrot.lane.b32.xlu0 %v1843, 127
    %v1849 = vpop.permute.xlu0 %1848
    %1850 = vrot.lane.b32.xlu0 %v1845, 127
    %v1851 = vpop.permute.xlu0 %1850
    %1852 = vrot.lane.b32.xlu0 %v1847, 127
    %v1853 = vpop.permute.xlu0 %1852
    %v1857 = vadd.f32 %v1451, %v1849
    %v1858 = vadd.f32 %v1452, %v1851
    %v1859 = vadd.f32 %v1453, %v1853
    %s1860 = sld [smem:[#allocation2 + $0x3]]
    %v1861 = vstv %s1860
    %v1862 = vmul.f32 %v1861, %v241
    %v1863 = vmul.f32 %v1861, %v246
    %v1864 = vmul.f32 %v1861, %v251
    %v1865 = vmul.f32 %v1861, %v256
    %v1870 = vrot.slane %v1862, 1
    %v1871 = vrot.slane %v1863, 1
    %v1872 = vsel %vm1141, %v1870, %v1871
    %v1873 = vrot.slane %v1864, 1
    %v1874 = vsel %vm1141, %v1871, %v1873
    %v1875 = vrot.slane %v1865, 1
    %v1876 = vsel %vm1141, %v1873, %v1875
    %1877 = vrot.lane.b32.xlu0 %v1872, 126
    %v1878 = vpop.permute.xlu0 %1877
    %1879 = vrot.lane.b32.xlu0 %v1874, 126
    %v1880 = vpop.permute.xlu0 %1879
    %1881 = vrot.lane.b32.xlu0 %v1876, 126
    %v1882 = vpop.permute.xlu0 %1881
    %v1886 = vadd.f32 %v1480, %v1878
    %v1887 = vadd.f32 %v1481, %v1880
    %v1888 = vadd.f32 %v1482, %v1882
    %s1889 = sld [smem:[#allocation2 + $0xc]]
    %v1890 = vstv %s1889
    %v1891 = vmul.f32 %v1890, %v241
    %v1892 = vmul.f32 %v1890, %v246
    %v1893 = vmul.f32 %v1890, %v251
    %v1894 = vmul.f32 %v1890, %v256
    %v1899 = vrot.slane %v1891, 1
    %v1900 = vrot.slane %v1892, 1
    %v1901 = vsel %vm1141, %v1899, %v1900
    %v1902 = vrot.slane %v1893, 1
    %v1903 = vsel %vm1141, %v1900, %v1902
    %v1904 = vrot.slane %v1894, 1
    %v1905 = vsel %vm1141, %v1902, %v1904
    %1906 = vrot.lane.b32.xlu0 %v1901, 126
    %v1907 = vpop.permute.xlu0 %1906
    %1908 = vrot.lane.b32.xlu0 %v1903, 126
    %v1909 = vpop.permute.xlu0 %1908
    %1910 = vrot.lane.b32.xlu0 %v1905, 126
    %v1911 = vpop.permute.xlu0 %1910
    %v1915 = vadd.f32 %v1509, %v1907
    %v1916 = vadd.f32 %v1510, %v1909
    %v1917 = vadd.f32 %v1511, %v1911
    %s1918 = sld [smem:[#allocation2 + $0x15]]
    %v1919 = vstv %s1918
    %v1920 = vmul.f32 %v1919, %v241
    %v1921 = vmul.f32 %v1919, %v246
    %v1922 = vmul.f32 %v1919, %v251
    %v1923 = vmul.f32 %v1919, %v256
    %v1928 = vrot.slane %v1920, 1
    %v1929 = vrot.slane %v1921, 1
    %v1930 = vsel %vm1141, %v1928, %v1929
    %v1931 = vrot.slane %v1922, 1
    %v1932 = vsel %vm1141, %v1929, %v1931
    %v1933 = vrot.slane %v1923, 1
    %v1934 = vsel %vm1141, %v1931, %v1933
    %1935 = vrot.lane.b32.xlu0 %v1930, 126
    %v1936 = vpop.permute.xlu0 %1935
    %1937 = vrot.lane.b32.xlu0 %v1932, 126
    %v1938 = vpop.permute.xlu0 %1937
    %1939 = vrot.lane.b32.xlu0 %v1934, 126
    %v1940 = vpop.permute.xlu0 %1939
    %v1944 = vadd.f32 %v1538, %v1936
    %v1945 = vadd.f32 %v1539, %v1938
    %v1946 = vadd.f32 %v1540, %v1940
    %s1947 = sld [smem:[#allocation2 + $0x1e]]
    %v1948 = vstv %s1947
    %v1949 = vmul.f32 %v1948, %v241
    %v1950 = vmul.f32 %v1948, %v246
    %v1951 = vmul.f32 %v1948, %v251
    %v1952 = vmul.f32 %v1948, %v256
    %v1957 = vrot.slane %v1949, 1
    %v1958 = vrot.slane %v1950, 1
    %v1959 = vsel %vm1141, %v1957, %v1958
    %v1960 = vrot.slane %v1951, 1
    %v1961 = vsel %vm1141, %v1958, %v1960
    %v1962 = vrot.slane %v1952, 1
    %v1963 = vsel %vm1141, %v1960, %v1962
    %1964 = vrot.lane.b32.xlu0 %v1959, 126
    %v1965 = vpop.permute.xlu0 %1964
    %1966 = vrot.lane.b32.xlu0 %v1961, 126
    %v1967 = vpop.permute.xlu0 %1966
    %1968 = vrot.lane.b32.xlu0 %v1963, 126
    %v1969 = vpop.permute.xlu0 %1968
    %v1973 = vadd.f32 %v1567, %v1965
    %v1974 = vadd.f32 %v1568, %v1967
    %v1975 = vadd.f32 %v1569, %v1969
    %s1976 = sld [smem:[#allocation2 + $0x27]]
    %v1977 = vstv %s1976
    %v1978 = vmul.f32 %v1977, %v241
    %v1979 = vmul.f32 %v1977, %v246
    %v1980 = vmul.f32 %v1977, %v251
    %v1981 = vmul.f32 %v1977, %v256
    %v1986 = vrot.slane %v1978, 1
    %v1987 = vrot.slane %v1979, 1
    %v1988 = vsel %vm1141, %v1986, %v1987
    %v1989 = vrot.slane %v1980, 1
    %v1990 = vsel %vm1141, %v1987, %v1989
    %v1991 = vrot.slane %v1981, 1
    %v1992 = vsel %vm1141, %v1989, %v1991
    %1993 = vrot.lane.b32.xlu0 %v1988, 126
    %v1994 = vpop.permute.xlu0 %1993
    %1995 = vrot.lane.b32.xlu0 %v1990, 126
    %v1996 = vpop.permute.xlu0 %1995
    %1997 = vrot.lane.b32.xlu0 %v1992, 126
    %v1998 = vpop.permute.xlu0 %1997
    %v2002 = vadd.f32 %v1596, %v1994
    %v2003 = vadd.f32 %v1597, %v1996
    %v2004 = vadd.f32 %v1598, %v1998
    %s2005 = sld [smem:[#allocation2 + $0x30]]
    %v2006 = vstv %s2005
    %v2007 = vmul.f32 %v2006, %v241
    %v2008 = vmul.f32 %v2006, %v246
    %v2009 = vmul.f32 %v2006, %v251
    %v2010 = vmul.f32 %v2006, %v256
    %v2015 = vrot.slane %v2007, 1
    %v2016 = vrot.slane %v2008, 1
    %v2017 = vsel %vm1141, %v2015, %v2016
    %v2018 = vrot.slane %v2009, 1
    %v2019 = vsel %vm1141, %v2016, %v2018
    %v2020 = vrot.slane %v2010, 1
    %v2021 = vsel %vm1141, %v2018, %v2020
    %2022 = vrot.lane.b32.xlu0 %v2017, 126
    %v2023 = vpop.permute.xlu0 %2022
    %2024 = vrot.lane.b32.xlu0 %v2019, 126
    %v2025 = vpop.permute.xlu0 %2024
    %2026 = vrot.lane.b32.xlu0 %v2021, 126
    %v2027 = vpop.permute.xlu0 %2026
    %v2031 = vadd.f32 %v1625, %v2023
    %v2032 = vadd.f32 %v1626, %v2025
    %v2033 = vadd.f32 %v1627, %v2027
    %s2034 = sld [smem:[#allocation2 + $0x39]]
    %v2035 = vstv %s2034
    %v2036 = vmul.f32 %v2035, %v241
    %v2037 = vmul.f32 %v2035, %v246
    %v2038 = vmul.f32 %v2035, %v251
    %v2039 = vmul.f32 %v2035, %v256
    %v2044 = vrot.slane %v2036, 1
    %v2045 = vrot.slane %v2037, 1
    %v2046 = vsel %vm1141, %v2044, %v2045
    %v2047 = vrot.slane %v2038, 1
    %v2048 = vsel %vm1141, %v2045, %v2047
    %v2049 = vrot.slane %v2039, 1
    %v2050 = vsel %vm1141, %v2047, %v2049
    %2051 = vrot.lane.b32.xlu0 %v2046, 126
    %v2052 = vpop.permute.xlu0 %2051
    %2053 = vrot.lane.b32.xlu0 %v2048, 126
    %v2054 = vpop.permute.xlu0 %2053
    %2055 = vrot.lane.b32.xlu0 %v2050, 126
    %v2056 = vpop.permute.xlu0 %2055
    %v2060 = vadd.f32 %v1654, %v2052
    %v2061 = vadd.f32 %v1655, %v2054
    %v2062 = vadd.f32 %v1656, %v2056
    %s2063 = sld [smem:[#allocation2 + $0x42]]
    %v2064 = vstv %s2063
    %v2065 = vmul.f32 %v2064, %v241
    %v2066 = vmul.f32 %v2064, %v246
    %v2067 = vmul.f32 %v2064, %v251
    %v2068 = vmul.f32 %v2064, %v256
    %v2073 = vrot.slane %v2065, 1
    %v2074 = vrot.slane %v2066, 1
    %v2075 = vsel %vm1141, %v2073, %v2074
    %v2076 = vrot.slane %v2067, 1
    %v2077 = vsel %vm1141, %v2074, %v2076
    %v2078 = vrot.slane %v2068, 1
    %v2079 = vsel %vm1141, %v2076, %v2078
    %2080 = vrot.lane.b32.xlu0 %v2075, 126
    %v2081 = vpop.permute.xlu0 %2080
    %2082 = vrot.lane.b32.xlu0 %v2077, 126
    %v2083 = vpop.permute.xlu0 %2082
    %2084 = vrot.lane.b32.xlu0 %v2079, 126
    %v2085 = vpop.permute.xlu0 %2084
    %v2089 = vadd.f32 %v1683, %v2081
    %v2090 = vadd.f32 %v1684, %v2083
    %v2091 = vadd.f32 %v1685, %v2085
    %s2092 = sld [smem:[#allocation2 + $0x4b]]
    %v2093 = vstv %s2092
    %v2094 = vmul.f32 %v2093, %v241
    %v2095 = vmul.f32 %v2093, %v246
    %v2096 = vmul.f32 %v2093, %v251
    %v2097 = vmul.f32 %v2093, %v256
    %v2102 = vrot.slane %v2094, 1
    %v2103 = vrot.slane %v2095, 1
    %v2104 = vsel %vm1141, %v2102, %v2103
    %v2105 = vrot.slane %v2096, 1
    %v2106 = vsel %vm1141, %v2103, %v2105
    %v2107 = vrot.slane %v2097, 1
    %v2108 = vsel %vm1141, %v2105, %v2107
    %2109 = vrot.lane.b32.xlu0 %v2104, 126
    %v2110 = vpop.permute.xlu0 %2109
    %2111 = vrot.lane.b32.xlu0 %v2106, 126
    %v2112 = vpop.permute.xlu0 %2111
    %2113 = vrot.lane.b32.xlu0 %v2108, 126
    %v2114 = vpop.permute.xlu0 %2113
    %v2118 = vadd.f32 %v1712, %v2110
    %v2119 = vadd.f32 %v1713, %v2112
    %v2120 = vadd.f32 %v1714, %v2114
    %s2121 = sld [smem:[#allocation2 + $0x54]]
    %v2122 = vstv %s2121
    %v2123 = vmul.f32 %v2122, %v241
    %v2124 = vmul.f32 %v2122, %v246
    %v2125 = vmul.f32 %v2122, %v251
    %v2126 = vmul.f32 %v2122, %v256
    %v2131 = vrot.slane %v2123, 1
    %v2132 = vrot.slane %v2124, 1
    %v2133 = vsel %vm1141, %v2131, %v2132
    %v2134 = vrot.slane %v2125, 1
    %v2135 = vsel %vm1141, %v2132, %v2134
    %v2136 = vrot.slane %v2126, 1
    %v2137 = vsel %vm1141, %v2134, %v2136
    %2138 = vrot.lane.b32.xlu0 %v2133, 126
    %v2139 = vpop.permute.xlu0 %2138
    %2140 = vrot.lane.b32.xlu0 %v2135, 126
    %v2141 = vpop.permute.xlu0 %2140
    %2142 = vrot.lane.b32.xlu0 %v2137, 126
    %v2143 = vpop.permute.xlu0 %2142
    %v2147 = vadd.f32 %v1741, %v2139
    %v2148 = vadd.f32 %v1742, %v2141
    %v2149 = vadd.f32 %v1743, %v2143
    %s2150 = sld [smem:[#allocation2 + $0x5d]]
    %v2151 = vstv %s2150
    %v2152 = vmul.f32 %v2151, %v241
    %v2153 = vmul.f32 %v2151, %v246
    %v2154 = vmul.f32 %v2151, %v251
    %v2155 = vmul.f32 %v2151, %v256
    %v2160 = vrot.slane %v2152, 1
    %v2161 = vrot.slane %v2153, 1
    %v2162 = vsel %vm1141, %v2160, %v2161
    %v2163 = vrot.slane %v2154, 1
    %v2164 = vsel %vm1141, %v2161, %v2163
    %v2165 = vrot.slane %v2155, 1
    %v2166 = vsel %vm1141, %v2163, %v2165
    %2167 = vrot.lane.b32.xlu0 %v2162, 126
    %v2168 = vpop.permute.xlu0 %2167
    %2169 = vrot.lane.b32.xlu0 %v2164, 126
    %v2170 = vpop.permute.xlu0 %2169
    %2171 = vrot.lane.b32.xlu0 %v2166, 126
    %v2172 = vpop.permute.xlu0 %2171
    %v2176 = vadd.f32 %v1770, %v2168
    %v2177 = vadd.f32 %v1771, %v2170
    %v2178 = vadd.f32 %v1772, %v2172
    %s2179 = sld [smem:[#allocation2 + $0x66]]
    %v2180 = vstv %s2179
    %v2181 = vmul.f32 %v2180, %v241
    %v2182 = vmul.f32 %v2180, %v246
    %v2183 = vmul.f32 %v2180, %v251
    %v2184 = vmul.f32 %v2180, %v256
    %v2189 = vrot.slane %v2181, 1
    %v2190 = vrot.slane %v2182, 1
    %v2191 = vsel %vm1141, %v2189, %v2190
    %v2192 = vrot.slane %v2183, 1
    %v2193 = vsel %vm1141, %v2190, %v2192
    %v2194 = vrot.slane %v2184, 1
    %v2195 = vsel %vm1141, %v2192, %v2194
    %2196 = vrot.lane.b32.xlu0 %v2191, 126
    %v2197 = vpop.permute.xlu0 %2196
    %2198 = vrot.lane.b32.xlu0 %v2193, 126
    %v2199 = vpop.permute.xlu0 %2198
    %2200 = vrot.lane.b32.xlu0 %v2195, 126
    %v2201 = vpop.permute.xlu0 %2200
    %v2205 = vadd.f32 %v1799, %v2197
    %v2206 = vadd.f32 %v1800, %v2199
    %v2207 = vadd.f32 %v1801, %v2201
    %s2208 = sld [smem:[#allocation2 + $0x6f]]
    %v2209 = vstv %s2208
    %v2210 = vmul.f32 %v2209, %v241
    %v2211 = vmul.f32 %v2209, %v246
    %v2212 = vmul.f32 %v2209, %v251
    %v2213 = vmul.f32 %v2209, %v256
    %v2218 = vrot.slane %v2210, 1
    %v2219 = vrot.slane %v2211, 1
    %v2220 = vsel %vm1141, %v2218, %v2219
    %v2221 = vrot.slane %v2212, 1
    %v2222 = vsel %vm1141, %v2219, %v2221
    %v2223 = vrot.slane %v2213, 1
    %v2224 = vsel %vm1141, %v2221, %v2223
    %2225 = vrot.lane.b32.xlu0 %v2220, 126
    %v2226 = vpop.permute.xlu0 %2225
    %2227 = vrot.lane.b32.xlu0 %v2222, 126
    %v2228 = vpop.permute.xlu0 %2227
    %2229 = vrot.lane.b32.xlu0 %v2224, 126
    %v2230 = vpop.permute.xlu0 %2229
    %v2234 = vadd.f32 %v1828, %v2226
    %v2235 = vadd.f32 %v1829, %v2228
    %v2236 = vadd.f32 %v1830, %v2230
    %s2237 = sld [smem:[#allocation2 + $0x78]]
    %v2238 = vstv %s2237
    %v2239 = vmul.f32 %v2238, %v241
    %v2240 = vmul.f32 %v2238, %v246
    %v2241 = vmul.f32 %v2238, %v251
    %v2242 = vmul.f32 %v2238, %v256
    %v2247 = vrot.slane %v2239, 1
    %v2248 = vrot.slane %v2240, 1
    %v2249 = vsel %vm1141, %v2247, %v2248
    %v2250 = vrot.slane %v2241, 1
    %v2251 = vsel %vm1141, %v2248, %v2250
    %v2252 = vrot.slane %v2242, 1
    %v2253 = vsel %vm1141, %v2250, %v2252
    %2254 = vrot.lane.b32.xlu0 %v2249, 126
    %v2255 = vpop.permute.xlu0 %2254
    %2256 = vrot.lane.b32.xlu0 %v2251, 126
    %v2257 = vpop.permute.xlu0 %2256
    %2258 = vrot.lane.b32.xlu0 %v2253, 126
    %v2259 = vpop.permute.xlu0 %2258
    %v2263 = vadd.f32 %v1857, %v2255
    %v2264 = vadd.f32 %v1858, %v2257
    %v2265 = vadd.f32 %v1859, %v2259
    %s2266 = sld [smem:[#allocation2 + $0x2]]
    %v2267 = vstv %s2266
    %v2268 = vmul.f32 %v2267, %v241
    %v2269 = vmul.f32 %v2267, %v246
    %v2270 = vmul.f32 %v2267, %v251
    %v2271 = vmul.f32 %v2267, %v256
    %vm2276 = vcmask 1045504
    %v2277 = vrot.slane %v2268, 2
    %v2278 = vrot.slane %v2269, 2
    %v2279 = vsel %vm2276, %v2277, %v2278
    %v2280 = vrot.slane %v2270, 2
    %v2281 = vsel %vm2276, %v2278, %v2280
    %v2282 = vrot.slane %v2271, 2
    %v2283 = vsel %vm2276, %v2280, %v2282
    %v2287 = vadd.f32 %v1886, %v2279
    %v2288 = vadd.f32 %v1887, %v2281
    %v2289 = vadd.f32 %v1888, %v2283
    %s2290 = sld [smem:[#allocation2 + $0xb]]
    %v2291 = vstv %s2290
    %v2292 = vmul.f32 %v2291, %v241
    %v2293 = vmul.f32 %v2291, %v246
    %v2294 = vmul.f32 %v2291, %v251
    %v2295 = vmul.f32 %v2291, %v256
    %v2300 = vrot.slane %v2292, 2
    %v2301 = vrot.slane %v2293, 2
    %v2302 = vsel %vm2276, %v2300, %v2301
    %v2303 = vrot.slane %v2294, 2
    %v2304 = vsel %vm2276, %v2301, %v2303
    %v2305 = vrot.slane %v2295, 2
    %v2306 = vsel %vm2276, %v2303, %v2305
    %v2310 = vadd.f32 %v1915, %v2302
    %v2311 = vadd.f32 %v1916, %v2304
    %v2312 = vadd.f32 %v1917, %v2306
    %s2313 = sld [smem:[#allocation2 + $0x14]]
    %v2314 = vstv %s2313
    %v2315 = vmul.f32 %v2314, %v241
    %v2316 = vmul.f32 %v2314, %v246
    %v2317 = vmul.f32 %v2314, %v251
    %v2318 = vmul.f32 %v2314, %v256
    %v2323 = vrot.slane %v2315, 2
    %v2324 = vrot.slane %v2316, 2
    %v2325 = vsel %vm2276, %v2323, %v2324
    %v2326 = vrot.slane %v2317, 2
    %v2327 = vsel %vm2276, %v2324, %v2326
    %v2328 = vrot.slane %v2318, 2
    %v2329 = vsel %vm2276, %v2326, %v2328
    %v2333 = vadd.f32 %v1944, %v2325
    %v2334 = vadd.f32 %v1945, %v2327
    %v2335 = vadd.f32 %v1946, %v2329
    %s2336 = sld [smem:[#allocation2 + $0x1d]]
    %v2337 = vstv %s2336
    %v2338 = vmul.f32 %v2337, %v241
    %v2339 = vmul.f32 %v2337, %v246
    %v2340 = vmul.f32 %v2337, %v251
    %v2341 = vmul.f32 %v2337, %v256
    %v2346 = vrot.slane %v2338, 2
    %v2347 = vrot.slane %v2339, 2
    %v2348 = vsel %vm2276, %v2346, %v2347
    %v2349 = vrot.slane %v2340, 2
    %v2350 = vsel %vm2276, %v2347, %v2349
    %v2351 = vrot.slane %v2341, 2
    %v2352 = vsel %vm2276, %v2349, %v2351
    %v2356 = vadd.f32 %v1973, %v2348
    %v2357 = vadd.f32 %v1974, %v2350
    %v2358 = vadd.f32 %v1975, %v2352
    %s2359 = sld [smem:[#allocation2 + $0x26]]
    %v2360 = vstv %s2359
    %v2361 = vmul.f32 %v2360, %v241
    %v2362 = vmul.f32 %v2360, %v246
    %v2363 = vmul.f32 %v2360, %v251
    %v2364 = vmul.f32 %v2360, %v256
    %v2369 = vrot.slane %v2361, 2
    %v2370 = vrot.slane %v2362, 2
    %v2371 = vsel %vm2276, %v2369, %v2370
    %v2372 = vrot.slane %v2363, 2
    %v2373 = vsel %vm2276, %v2370, %v2372
    %v2374 = vrot.slane %v2364, 2
    %v2375 = vsel %vm2276, %v2372, %v2374
    %v2379 = vadd.f32 %v2002, %v2371
    %v2380 = vadd.f32 %v2003, %v2373
    %v2381 = vadd.f32 %v2004, %v2375
    %s2382 = sld [smem:[#allocation2 + $0x2f]]
    %v2383 = vstv %s2382
    %v2384 = vmul.f32 %v2383, %v241
    %v2385 = vmul.f32 %v2383, %v246
    %v2386 = vmul.f32 %v2383, %v251
    %v2387 = vmul.f32 %v2383, %v256
    %v2392 = vrot.slane %v2384, 2
    %v2393 = vrot.slane %v2385, 2
    %v2394 = vsel %vm2276, %v2392, %v2393
    %v2395 = vrot.slane %v2386, 2
    %v2396 = vsel %vm2276, %v2393, %v2395
    %v2397 = vrot.slane %v2387, 2
    %v2398 = vsel %vm2276, %v2395, %v2397
    %v2402 = vadd.f32 %v2031, %v2394
    %v2403 = vadd.f32 %v2032, %v2396
    %v2404 = vadd.f32 %v2033, %v2398
    %s2405 = sld [smem:[#allocation2 + $0x38]]
    %v2406 = vstv %s2405
    %v2407 = vmul.f32 %v2406, %v241
    %v2408 = vmul.f32 %v2406, %v246
    %v2409 = vmul.f32 %v2406, %v251
    %v2410 = vmul.f32 %v2406, %v256
    %v2415 = vrot.slane %v2407, 2
    %v2416 = vrot.slane %v2408, 2
    %v2417 = vsel %vm2276, %v2415, %v2416
    %v2418 = vrot.slane %v2409, 2
    %v2419 = vsel %vm2276, %v2416, %v2418
    %v2420 = vrot.slane %v2410, 2
    %v2421 = vsel %vm2276, %v2418, %v2420
    %v2425 = vadd.f32 %v2060, %v2417
    %v2426 = vadd.f32 %v2061, %v2419
    %v2427 = vadd.f32 %v2062, %v2421
    %s2428 = sld [smem:[#allocation2 + $0x41]]
    %v2429 = vstv %s2428
    %v2430 = vmul.f32 %v2429, %v241
    %v2431 = vmul.f32 %v2429, %v246
    %v2432 = vmul.f32 %v2429, %v251
    %v2433 = vmul.f32 %v2429, %v256
    %v2438 = vrot.slane %v2430, 2
    %v2439 = vrot.slane %v2431, 2
    %v2440 = vsel %vm2276, %v2438, %v2439
    %v2441 = vrot.slane %v2432, 2
    %v2442 = vsel %vm2276, %v2439, %v2441
    %v2443 = vrot.slane %v2433, 2
    %v2444 = vsel %vm2276, %v2441, %v2443
    %v2448 = vadd.f32 %v2089, %v2440
    %v2449 = vadd.f32 %v2090, %v2442
    %v2450 = vadd.f32 %v2091, %v2444
    %s2451 = sld [smem:[#allocation2 + $0x4a]]
    %v2452 = vstv %s2451
    %v2453 = vmul.f32 %v2452, %v241
    %v2454 = vmul.f32 %v2452, %v246
    %v2455 = vmul.f32 %v2452, %v251
    %v2456 = vmul.f32 %v2452, %v256
    %v2461 = vrot.slane %v2453, 2
    %v2462 = vrot.slane %v2454, 2
    %v2463 = vsel %vm2276, %v2461, %v2462
    %v2464 = vrot.slane %v2455, 2
    %v2465 = vsel %vm2276, %v2462, %v2464
    %v2466 = vrot.slane %v2456, 2
    %v2467 = vsel %vm2276, %v2464, %v2466
    %v2471 = vadd.f32 %v2118, %v2463
    %v2472 = vadd.f32 %v2119, %v2465
    %v2473 = vadd.f32 %v2120, %v2467
    %s2474 = sld [smem:[#allocation2 + $0x53]]
    %v2475 = vstv %s2474
    %v2476 = vmul.f32 %v2475, %v241
    %v2477 = vmul.f32 %v2475, %v246
    %v2478 = vmul.f32 %v2475, %v251
    %v2479 = vmul.f32 %v2475, %v256
    %v2484 = vrot.slane %v2476, 2
    %v2485 = vrot.slane %v2477, 2
    %v2486 = vsel %vm2276, %v2484, %v2485
    %v2487 = vrot.slane %v2478, 2
    %v2488 = vsel %vm2276, %v2485, %v2487
    %v2489 = vrot.slane %v2479, 2
    %v2490 = vsel %vm2276, %v2487, %v2489
    %v2494 = vadd.f32 %v2147, %v2486
    %v2495 = vadd.f32 %v2148, %v2488
    %v2496 = vadd.f32 %v2149, %v2490
    %s2497 = sld [smem:[#allocation2 + $0x5c]]
    %v2498 = vstv %s2497
    %v2499 = vmul.f32 %v2498, %v241
    %v2500 = vmul.f32 %v2498, %v246
    %v2501 = vmul.f32 %v2498, %v251
    %v2502 = vmul.f32 %v2498, %v256
    %v2507 = vrot.slane %v2499, 2
    %v2508 = vrot.slane %v2500, 2
    %v2509 = vsel %vm2276, %v2507, %v2508
    %v2510 = vrot.slane %v2501, 2
    %v2511 = vsel %vm2276, %v2508, %v2510
    %v2512 = vrot.slane %v2502, 2
    %v2513 = vsel %vm2276, %v2510, %v2512
    %v2517 = vadd.f32 %v2176, %v2509
    %v2518 = vadd.f32 %v2177, %v2511
    %v2519 = vadd.f32 %v2178, %v2513
    %s2520 = sld [smem:[#allocation2 + $0x65]]
    %v2521 = vstv %s2520
    %v2522 = vmul.f32 %v2521, %v241
    %v2523 = vmul.f32 %v2521, %v246
    %v2524 = vmul.f32 %v2521, %v251
    %v2525 = vmul.f32 %v2521, %v256
    %v2530 = vrot.slane %v2522, 2
    %v2531 = vrot.slane %v2523, 2
    %v2532 = vsel %vm2276, %v2530, %v2531
    %v2533 = vrot.slane %v2524, 2
    %v2534 = vsel %vm2276, %v2531, %v2533
    %v2535 = vrot.slane %v2525, 2
    %v2536 = vsel %vm2276, %v2533, %v2535
    %v2540 = vadd.f32 %v2205, %v2532
    %v2541 = vadd.f32 %v2206, %v2534
    %v2542 = vadd.f32 %v2207, %v2536
    %s2543 = sld [smem:[#allocation2 + $0x6e]]
    %v2544 = vstv %s2543
    %v2545 = vmul.f32 %v2544, %v241
    %v2546 = vmul.f32 %v2544, %v246
    %v2547 = vmul.f32 %v2544, %v251
    %v2548 = vmul.f32 %v2544, %v256
    %v2553 = vrot.slane %v2545, 2
    %v2554 = vrot.slane %v2546, 2
    %v2555 = vsel %vm2276, %v2553, %v2554
    %v2556 = vrot.slane %v2547, 2
    %v2557 = vsel %vm2276, %v2554, %v2556
    %v2558 = vrot.slane %v2548, 2
    %v2559 = vsel %vm2276, %v2556, %v2558
    %v2563 = vadd.f32 %v2234, %v2555
    %v2564 = vadd.f32 %v2235, %v2557
    %v2565 = vadd.f32 %v2236, %v2559
    %s2566 = sld [smem:[#allocation2 + $0x77]]
    %v2567 = vstv %s2566
    %v2568 = vmul.f32 %v2567, %v241
    %v2569 = vmul.f32 %v2567, %v246
    %v2570 = vmul.f32 %v2567, %v251
    %v2571 = vmul.f32 %v2567, %v256
    %v2576 = vrot.slane %v2568, 2
    %v2577 = vrot.slane %v2569, 2
    %v2578 = vsel %vm2276, %v2576, %v2577
    %v2579 = vrot.slane %v2570, 2
    %v2580 = vsel %vm2276, %v2577, %v2579
    %v2581 = vrot.slane %v2571, 2
    %v2582 = vsel %vm2276, %v2579, %v2581
    %v2586 = vadd.f32 %v2263, %v2578
    %v2587 = vadd.f32 %v2264, %v2580
    %v2588 = vadd.f32 %v2265, %v2582
    %s2589 = sld [smem:[#allocation2 + $0x1]]
    %v2590 = vstv %s2589
    %v2591 = vmul.f32 %v2590, %v241
    %v2592 = vmul.f32 %v2590, %v246
    %v2593 = vmul.f32 %v2590, %v251
    %v2594 = vmul.f32 %v2590, %v256
    %v2599 = vrot.slane %v2591, 2
    %v2600 = vrot.slane %v2592, 2
    %v2601 = vsel %vm2276, %v2599, %v2600
    %v2602 = vrot.slane %v2593, 2
    %v2603 = vsel %vm2276, %v2600, %v2602
    %v2604 = vrot.slane %v2594, 2
    %v2605 = vsel %vm2276, %v2602, %v2604
    %2606 = vrot.lane.b32.xlu0 %v2601, 127
    %v2607 = vpop.permute.xlu0 %2606
    %2608 = vrot.lane.b32.xlu0 %v2603, 127
    %v2609 = vpop.permute.xlu0 %2608
    %2610 = vrot.lane.b32.xlu0 %v2605, 127
    %v2611 = vpop.permute.xlu0 %2610
    %v2615 = vadd.f32 %v2287, %v2607
    %v2616 = vadd.f32 %v2288, %v2609
    %v2617 = vadd.f32 %v2289, %v2611
    %s2618 = sld [smem:[#allocation2 + $0xa]]
    %v2619 = vstv %s2618
    %v2620 = vmul.f32 %v2619, %v241
    %v2621 = vmul.f32 %v2619, %v246
    %v2622 = vmul.f32 %v2619, %v251
    %v2623 = vmul.f32 %v2619, %v256
    %v2628 = vrot.slane %v2620, 2
    %v2629 = vrot.slane %v2621, 2
    %v2630 = vsel %vm2276, %v2628, %v2629
    %v2631 = vrot.slane %v2622, 2
    %v2632 = vsel %vm2276, %v2629, %v2631
    %v2633 = vrot.slane %v2623, 2
    %v2634 = vsel %vm2276, %v2631, %v2633
    %2635 = vrot.lane.b32.xlu0 %v2630, 127
    %v2636 = vpop.permute.xlu0 %2635
    %2637 = vrot.lane.b32.xlu0 %v2632, 127
    %v2638 = vpop.permute.xlu0 %2637
    %2639 = vrot.lane.b32.xlu0 %v2634, 127
    %v2640 = vpop.permute.xlu0 %2639
    %v2644 = vadd.f32 %v2310, %v2636
    %v2645 = vadd.f32 %v2311, %v2638
    %v2646 = vadd.f32 %v2312, %v2640
    %s2647 = sld [smem:[#allocation2 + $0x13]]
    %v2648 = vstv %s2647
    %v2649 = vmul.f32 %v2648, %v241
    %v2650 = vmul.f32 %v2648, %v246
    %v2651 = vmul.f32 %v2648, %v251
    %v2652 = vmul.f32 %v2648, %v256
    %v2657 = vrot.slane %v2649, 2
    %v2658 = vrot.slane %v2650, 2
    %v2659 = vsel %vm2276, %v2657, %v2658
    %v2660 = vrot.slane %v2651, 2
    %v2661 = vsel %vm2276, %v2658, %v2660
    %v2662 = vrot.slane %v2652, 2
    %v2663 = vsel %vm2276, %v2660, %v2662
    %2664 = vrot.lane.b32.xlu0 %v2659, 127
    %v2665 = vpop.permute.xlu0 %2664
    %2666 = vrot.lane.b32.xlu0 %v2661, 127
    %v2667 = vpop.permute.xlu0 %2666
    %2668 = vrot.lane.b32.xlu0 %v2663, 127
    %v2669 = vpop.permute.xlu0 %2668
    %v2673 = vadd.f32 %v2333, %v2665
    %v2674 = vadd.f32 %v2334, %v2667
    %v2675 = vadd.f32 %v2335, %v2669
    %s2676 = sld [smem:[#allocation2 + $0x1c]]
    %v2677 = vstv %s2676
    %v2678 = vmul.f32 %v2677, %v241
    %v2679 = vmul.f32 %v2677, %v246
    %v2680 = vmul.f32 %v2677, %v251
    %v2681 = vmul.f32 %v2677, %v256
    %v2686 = vrot.slane %v2678, 2
    %v2687 = vrot.slane %v2679, 2
    %v2688 = vsel %vm2276, %v2686, %v2687
    %v2689 = vrot.slane %v2680, 2
    %v2690 = vsel %vm2276, %v2687, %v2689
    %v2691 = vrot.slane %v2681, 2
    %v2692 = vsel %vm2276, %v2689, %v2691
    %2693 = vrot.lane.b32.xlu0 %v2688, 127
    %v2694 = vpop.permute.xlu0 %2693
    %2695 = vrot.lane.b32.xlu0 %v2690, 127
    %v2696 = vpop.permute.xlu0 %2695
    %2697 = vrot.lane.b32.xlu0 %v2692, 127
    %v2698 = vpop.permute.xlu0 %2697
    %v2702 = vadd.f32 %v2356, %v2694
    %v2703 = vadd.f32 %v2357, %v2696
    %v2704 = vadd.f32 %v2358, %v2698
    %s2705 = sld [smem:[#allocation2 + $0x25]]
    %v2706 = vstv %s2705
    %v2707 = vmul.f32 %v2706, %v241
    %v2708 = vmul.f32 %v2706, %v246
    %v2709 = vmul.f32 %v2706, %v251
    %v2710 = vmul.f32 %v2706, %v256
    %v2715 = vrot.slane %v2707, 2
    %v2716 = vrot.slane %v2708, 2
    %v2717 = vsel %vm2276, %v2715, %v2716
    %v2718 = vrot.slane %v2709, 2
    %v2719 = vsel %vm2276, %v2716, %v2718
    %v2720 = vrot.slane %v2710, 2
    %v2721 = vsel %vm2276, %v2718, %v2720
    %2722 = vrot.lane.b32.xlu0 %v2717, 127
    %v2723 = vpop.permute.xlu0 %2722
    %2724 = vrot.lane.b32.xlu0 %v2719, 127
    %v2725 = vpop.permute.xlu0 %2724
    %2726 = vrot.lane.b32.xlu0 %v2721, 127
    %v2727 = vpop.permute.xlu0 %2726
    %v2731 = vadd.f32 %v2379, %v2723
    %v2732 = vadd.f32 %v2380, %v2725
    %v2733 = vadd.f32 %v2381, %v2727
    %s2734 = sld [smem:[#allocation2 + $0x2e]]
    %v2735 = vstv %s2734
    %v2736 = vmul.f32 %v2735, %v241
    %v2737 = vmul.f32 %v2735, %v246
    %v2738 = vmul.f32 %v2735, %v251
    %v2739 = vmul.f32 %v2735, %v256
    %v2744 = vrot.slane %v2736, 2
    %v2745 = vrot.slane %v2737, 2
    %v2746 = vsel %vm2276, %v2744, %v2745
    %v2747 = vrot.slane %v2738, 2
    %v2748 = vsel %vm2276, %v2745, %v2747
    %v2749 = vrot.slane %v2739, 2
    %v2750 = vsel %vm2276, %v2747, %v2749
    %2751 = vrot.lane.b32.xlu0 %v2746, 127
    %v2752 = vpop.permute.xlu0 %2751
    %2753 = vrot.lane.b32.xlu0 %v2748, 127
    %v2754 = vpop.permute.xlu0 %2753
    %2755 = vrot.lane.b32.xlu0 %v2750, 127
    %v2756 = vpop.permute.xlu0 %2755
    %v2760 = vadd.f32 %v2402, %v2752
    %v2761 = vadd.f32 %v2403, %v2754
    %v2762 = vadd.f32 %v2404, %v2756
    %s2763 = sld [smem:[#allocation2 + $0x37]]
    %v2764 = vstv %s2763
    %v2765 = vmul.f32 %v2764, %v241
    %v2766 = vmul.f32 %v2764, %v246
    %v2767 = vmul.f32 %v2764, %v251
    %v2768 = vmul.f32 %v2764, %v256
    %v2773 = vrot.slane %v2765, 2
    %v2774 = vrot.slane %v2766, 2
    %v2775 = vsel %vm2276, %v2773, %v2774
    %v2776 = vrot.slane %v2767, 2
    %v2777 = vsel %vm2276, %v2774, %v2776
    %v2778 = vrot.slane %v2768, 2
    %v2779 = vsel %vm2276, %v2776, %v2778
    %2780 = vrot.lane.b32.xlu0 %v2775, 127
    %v2781 = vpop.permute.xlu0 %2780
    %2782 = vrot.lane.b32.xlu0 %v2777, 127
    %v2783 = vpop.permute.xlu0 %2782
    %2784 = vrot.lane.b32.xlu0 %v2779, 127
    %v2785 = vpop.permute.xlu0 %2784
    %v2789 = vadd.f32 %v2425, %v2781
    %v2790 = vadd.f32 %v2426, %v2783
    %v2791 = vadd.f32 %v2427, %v2785
    %s2792 = sld [smem:[#allocation2 + $0x40]]
    %v2793 = vstv %s2792
    %v2794 = vmul.f32 %v2793, %v241
    %v2795 = vmul.f32 %v2793, %v246
    %v2796 = vmul.f32 %v2793, %v251
    %v2797 = vmul.f32 %v2793, %v256
    %v2802 = vrot.slane %v2794, 2
    %v2803 = vrot.slane %v2795, 2
    %v2804 = vsel %vm2276, %v2802, %v2803
    %v2805 = vrot.slane %v2796, 2
    %v2806 = vsel %vm2276, %v2803, %v2805
    %v2807 = vrot.slane %v2797, 2
    %v2808 = vsel %vm2276, %v2805, %v2807
    %2809 = vrot.lane.b32.xlu0 %v2804, 127
    %v2810 = vpop.permute.xlu0 %2809
    %2811 = vrot.lane.b32.xlu0 %v2806, 127
    %v2812 = vpop.permute.xlu0 %2811
    %2813 = vrot.lane.b32.xlu0 %v2808, 127
    %v2814 = vpop.permute.xlu0 %2813
    %v2818 = vadd.f32 %v2448, %v2810
    %v2819 = vadd.f32 %v2449, %v2812
    %v2820 = vadd.f32 %v2450, %v2814
    %s2821 = sld [smem:[#allocation2 + $0x49]]
    %v2822 = vstv %s2821
    %v2823 = vmul.f32 %v2822, %v241
    %v2824 = vmul.f32 %v2822, %v246
    %v2825 = vmul.f32 %v2822, %v251
    %v2826 = vmul.f32 %v2822, %v256
    %v2831 = vrot.slane %v2823, 2
    %v2832 = vrot.slane %v2824, 2
    %v2833 = vsel %vm2276, %v2831, %v2832
    %v2834 = vrot.slane %v2825, 2
    %v2835 = vsel %vm2276, %v2832, %v2834
    %v2836 = vrot.slane %v2826, 2
    %v2837 = vsel %vm2276, %v2834, %v2836
    %2838 = vrot.lane.b32.xlu0 %v2833, 127
    %v2839 = vpop.permute.xlu0 %2838
    %2840 = vrot.lane.b32.xlu0 %v2835, 127
    %v2841 = vpop.permute.xlu0 %2840
    %2842 = vrot.lane.b32.xlu0 %v2837, 127
    %v2843 = vpop.permute.xlu0 %2842
    %v2847 = vadd.f32 %v2471, %v2839
    %v2848 = vadd.f32 %v2472, %v2841
    %v2849 = vadd.f32 %v2473, %v2843
    %s2850 = sld [smem:[#allocation2 + $0x52]]
    %v2851 = vstv %s2850
    %v2852 = vmul.f32 %v2851, %v241
    %v2853 = vmul.f32 %v2851, %v246
    %v2854 = vmul.f32 %v2851, %v251
    %v2855 = vmul.f32 %v2851, %v256
    %v2860 = vrot.slane %v2852, 2
    %v2861 = vrot.slane %v2853, 2
    %v2862 = vsel %vm2276, %v2860, %v2861
    %v2863 = vrot.slane %v2854, 2
    %v2864 = vsel %vm2276, %v2861, %v2863
    %v2865 = vrot.slane %v2855, 2
    %v2866 = vsel %vm2276, %v2863, %v2865
    %2867 = vrot.lane.b32.xlu0 %v2862, 127
    %v2868 = vpop.permute.xlu0 %2867
    %2869 = vrot.lane.b32.xlu0 %v2864, 127
    %v2870 = vpop.permute.xlu0 %2869
    %2871 = vrot.lane.b32.xlu0 %v2866, 127
    %v2872 = vpop.permute.xlu0 %2871
    %v2876 = vadd.f32 %v2494, %v2868
    %v2877 = vadd.f32 %v2495, %v2870
    %v2878 = vadd.f32 %v2496, %v2872
    %s2879 = sld [smem:[#allocation2 + $0x5b]]
    %v2880 = vstv %s2879
    %v2881 = vmul.f32 %v2880, %v241
    %v2882 = vmul.f32 %v2880, %v246
    %v2883 = vmul.f32 %v2880, %v251
    %v2884 = vmul.f32 %v2880, %v256
    %v2889 = vrot.slane %v2881, 2
    %v2890 = vrot.slane %v2882, 2
    %v2891 = vsel %vm2276, %v2889, %v2890
    %v2892 = vrot.slane %v2883, 2
    %v2893 = vsel %vm2276, %v2890, %v2892
    %v2894 = vrot.slane %v2884, 2
    %v2895 = vsel %vm2276, %v2892, %v2894
    %2896 = vrot.lane.b32.xlu0 %v2891, 127
    %v2897 = vpop.permute.xlu0 %2896
    %2898 = vrot.lane.b32.xlu0 %v2893, 127
    %v2899 = vpop.permute.xlu0 %2898
    %2900 = vrot.lane.b32.xlu0 %v2895, 127
    %v2901 = vpop.permute.xlu0 %2900
    %v2905 = vadd.f32 %v2517, %v2897
    %v2906 = vadd.f32 %v2518, %v2899
    %v2907 = vadd.f32 %v2519, %v2901
    %s2908 = sld [smem:[#allocation2 + $0x64]]
    %v2909 = vstv %s2908
    %v2910 = vmul.f32 %v2909, %v241
    %v2911 = vmul.f32 %v2909, %v246
    %v2912 = vmul.f32 %v2909, %v251
    %v2913 = vmul.f32 %v2909, %v256
    %v2918 = vrot.slane %v2910, 2
    %v2919 = vrot.slane %v2911, 2
    %v2920 = vsel %vm2276, %v2918, %v2919
    %v2921 = vrot.slane %v2912, 2
    %v2922 = vsel %vm2276, %v2919, %v2921
    %v2923 = vrot.slane %v2913, 2
    %v2924 = vsel %vm2276, %v2921, %v2923
    %2925 = vrot.lane.b32.xlu0 %v2920, 127
    %v2926 = vpop.permute.xlu0 %2925
    %2927 = vrot.lane.b32.xlu0 %v2922, 127
    %v2928 = vpop.permute.xlu0 %2927
    %2929 = vrot.lane.b32.xlu0 %v2924, 127
    %v2930 = vpop.permute.xlu0 %2929
    %v2934 = vadd.f32 %v2540, %v2926
    %v2935 = vadd.f32 %v2541, %v2928
    %v2936 = vadd.f32 %v2542, %v2930
    %s2937 = sld [smem:[#allocation2 + $0x6d]]
    %v2938 = vstv %s2937
    %v2939 = vmul.f32 %v2938, %v241
    %v2940 = vmul.f32 %v2938, %v246
    %v2941 = vmul.f32 %v2938, %v251
    %v2942 = vmul.f32 %v2938, %v256
    %v2947 = vrot.slane %v2939, 2
    %v2948 = vrot.slane %v2940, 2
    %v2949 = vsel %vm2276, %v2947, %v2948
    %v2950 = vrot.slane %v2941, 2
    %v2951 = vsel %vm2276, %v2948, %v2950
    %v2952 = vrot.slane %v2942, 2
    %v2953 = vsel %vm2276, %v2950, %v2952
    %2954 = vrot.lane.b32.xlu0 %v2949, 127
    %v2955 = vpop.permute.xlu0 %2954
    %2956 = vrot.lane.b32.xlu0 %v2951, 127
    %v2957 = vpop.permute.xlu0 %2956
    %2958 = vrot.lane.b32.xlu0 %v2953, 127
    %v2959 = vpop.permute.xlu0 %2958
    %v2963 = vadd.f32 %v2563, %v2955
    %v2964 = vadd.f32 %v2564, %v2957
    %v2965 = vadd.f32 %v2565, %v2959
    %s2966 = sld [smem:[#allocation2 + $0x76]]
    %v2967 = vstv %s2966
    %v2968 = vmul.f32 %v2967, %v241
    %v2969 = vmul.f32 %v2967, %v246
    %v2970 = vmul.f32 %v2967, %v251
    %v2971 = vmul.f32 %v2967, %v256
    %v2976 = vrot.slane %v2968, 2
    %v2977 = vrot.slane %v2969, 2
    %v2978 = vsel %vm2276, %v2976, %v2977
    %v2979 = vrot.slane %v2970, 2
    %v2980 = vsel %vm2276, %v2977, %v2979
    %v2981 = vrot.slane %v2971, 2
    %v2982 = vsel %vm2276, %v2979, %v2981
    %2983 = vrot.lane.b32.xlu0 %v2978, 127
    %v2984 = vpop.permute.xlu0 %2983
    %2985 = vrot.lane.b32.xlu0 %v2980, 127
    %v2986 = vpop.permute.xlu0 %2985
    %2987 = vrot.lane.b32.xlu0 %v2982, 127
    %v2988 = vpop.permute.xlu0 %2987
    %v2992 = vadd.f32 %v2586, %v2984
    %v2993 = vadd.f32 %v2587, %v2986
    %v2994 = vadd.f32 %v2588, %v2988
    %s2995 = sld [smem:[#allocation2]]
    %v2996 = vstv %s2995
    %v2997 = vmul.f32 %v2996, %v241
    %v2998 = vmul.f32 %v2996, %v246
    %v2999 = vmul.f32 %v2996, %v251
    %v3000 = vmul.f32 %v2996, %v256
    %v3005 = vrot.slane %v2997, 2
    %v3006 = vrot.slane %v2998, 2
    %v3007 = vsel %vm2276, %v3005, %v3006
    %v3008 = vrot.slane %v2999, 2
    %v3009 = vsel %vm2276, %v3006, %v3008
    %v3010 = vrot.slane %v3000, 2
    %v3011 = vsel %vm2276, %v3008, %v3010
    %3012 = vrot.lane.b32.xlu0 %v3007, 126
    %v3013 = vpop.permute.xlu0 %3012
    %3014 = vrot.lane.b32.xlu0 %v3009, 126
    %v3015 = vpop.permute.xlu0 %3014
    %3016 = vrot.lane.b32.xlu0 %v3011, 126
    %v3017 = vpop.permute.xlu0 %3016
    %v3021 = vadd.f32 %v2615, %v3013
    %v3022 = vadd.f32 %v2616, %v3015
    %v3023 = vadd.f32 %v2617, %v3017
    %s3024 = sld [smem:[#allocation2 + $0x9]]
    %v3025 = vstv %s3024
    %v3026 = vmul.f32 %v3025, %v241
    %v3027 = vmul.f32 %v3025, %v246
    %v3028 = vmul.f32 %v3025, %v251
    %v3029 = vmul.f32 %v3025, %v256
    %v3034 = vrot.slane %v3026, 2
    %v3035 = vrot.slane %v3027, 2
    %v3036 = vsel %vm2276, %v3034, %v3035
    %v3037 = vrot.slane %v3028, 2
    %v3038 = vsel %vm2276, %v3035, %v3037
    %v3039 = vrot.slane %v3029, 2
    %v3040 = vsel %vm2276, %v3037, %v3039
    %3041 = vrot.lane.b32.xlu0 %v3036, 126
    %v3042 = vpop.permute.xlu0 %3041
    %3043 = vrot.lane.b32.xlu0 %v3038, 126
    %v3044 = vpop.permute.xlu0 %3043
    %3045 = vrot.lane.b32.xlu0 %v3040, 126
    %v3046 = vpop.permute.xlu0 %3045
    %v3050 = vadd.f32 %v2644, %v3042
    %v3051 = vadd.f32 %v2645, %v3044
    %v3052 = vadd.f32 %v2646, %v3046
    %s3053 = sld [smem:[#allocation2 + $0x12]]
    %v3054 = vstv %s3053
    %v3055 = vmul.f32 %v3054, %v241
    %v3056 = vmul.f32 %v3054, %v246
    %v3057 = vmul.f32 %v3054, %v251
    %v3058 = vmul.f32 %v3054, %v256
    %v3063 = vrot.slane %v3055, 2
    %v3064 = vrot.slane %v3056, 2
    %v3065 = vsel %vm2276, %v3063, %v3064
    %v3066 = vrot.slane %v3057, 2
    %v3067 = vsel %vm2276, %v3064, %v3066
    %v3068 = vrot.slane %v3058, 2
    %v3069 = vsel %vm2276, %v3066, %v3068
    %3070 = vrot.lane.b32.xlu0 %v3065, 126
    %v3071 = vpop.permute.xlu0 %3070
    %3072 = vrot.lane.b32.xlu0 %v3067, 126
    %v3073 = vpop.permute.xlu0 %3072
    %3074 = vrot.lane.b32.xlu0 %v3069, 126
    %v3075 = vpop.permute.xlu0 %3074
    %v3079 = vadd.f32 %v2673, %v3071
    %v3080 = vadd.f32 %v2674, %v3073
    %v3081 = vadd.f32 %v2675, %v3075
    %s3082 = sld [smem:[#allocation2 + $0x1b]]
    %v3083 = vstv %s3082
    %v3084 = vmul.f32 %v3083, %v241
    %v3085 = vmul.f32 %v3083, %v246
    %v3086 = vmul.f32 %v3083, %v251
    %v3087 = vmul.f32 %v3083, %v256
    %v3092 = vrot.slane %v3084, 2
    %v3093 = vrot.slane %v3085, 2
    %v3094 = vsel %vm2276, %v3092, %v3093
    %v3095 = vrot.slane %v3086, 2
    %v3096 = vsel %vm2276, %v3093, %v3095
    %v3097 = vrot.slane %v3087, 2
    %v3098 = vsel %vm2276, %v3095, %v3097
    %3099 = vrot.lane.b32.xlu0 %v3094, 126
    %v3100 = vpop.permute.xlu0 %3099
    %3101 = vrot.lane.b32.xlu0 %v3096, 126
    %v3102 = vpop.permute.xlu0 %3101
    %3103 = vrot.lane.b32.xlu0 %v3098, 126
    %v3104 = vpop.permute.xlu0 %3103
    %v3108 = vadd.f32 %v2702, %v3100
    %v3109 = vadd.f32 %v2703, %v3102
    %v3110 = vadd.f32 %v2704, %v3104
    %s3111 = sld [smem:[#allocation2 + $0x24]]
    %v3112 = vstv %s3111
    %v3113 = vmul.f32 %v3112, %v241
    %v3114 = vmul.f32 %v3112, %v246
    %v3115 = vmul.f32 %v3112, %v251
    %v3116 = vmul.f32 %v3112, %v256
    %v3121 = vrot.slane %v3113, 2
    %v3122 = vrot.slane %v3114, 2
    %v3123 = vsel %vm2276, %v3121, %v3122
    %v3124 = vrot.slane %v3115, 2
    %v3125 = vsel %vm2276, %v3122, %v3124
    %v3126 = vrot.slane %v3116, 2
    %v3127 = vsel %vm2276, %v3124, %v3126
    %3128 = vrot.lane.b32.xlu0 %v3123, 126
    %v3129 = vpop.permute.xlu0 %3128
    %3130 = vrot.lane.b32.xlu0 %v3125, 126
    %v3131 = vpop.permute.xlu0 %3130
    %3132 = vrot.lane.b32.xlu0 %v3127, 126
    %v3133 = vpop.permute.xlu0 %3132
    %v3137 = vadd.f32 %v2731, %v3129
    %v3138 = vadd.f32 %v2732, %v3131
    %v3139 = vadd.f32 %v2733, %v3133
    %s3140 = sld [smem:[#allocation2 + $0x2d]]
    %v3141 = vstv %s3140
    %v3142 = vmul.f32 %v3141, %v241
    %v3143 = vmul.f32 %v3141, %v246
    %v3144 = vmul.f32 %v3141, %v251
    %v3145 = vmul.f32 %v3141, %v256
    %v3150 = vrot.slane %v3142, 2
    %v3151 = vrot.slane %v3143, 2
    %v3152 = vsel %vm2276, %v3150, %v3151
    %v3153 = vrot.slane %v3144, 2
    %v3154 = vsel %vm2276, %v3151, %v3153
    %v3155 = vrot.slane %v3145, 2
    %v3156 = vsel %vm2276, %v3153, %v3155
    %3157 = vrot.lane.b32.xlu0 %v3152, 126
    %v3158 = vpop.permute.xlu0 %3157
    %3159 = vrot.lane.b32.xlu0 %v3154, 126
    %v3160 = vpop.permute.xlu0 %3159
    %3161 = vrot.lane.b32.xlu0 %v3156, 126
    %v3162 = vpop.permute.xlu0 %3161
    %v3166 = vadd.f32 %v2760, %v3158
    %v3167 = vadd.f32 %v2761, %v3160
    %v3168 = vadd.f32 %v2762, %v3162
    %s3169 = sld [smem:[#allocation2 + $0x36]]
    %v3170 = vstv %s3169
    %v3171 = vmul.f32 %v3170, %v241
    %v3172 = vmul.f32 %v3170, %v246
    %v3173 = vmul.f32 %v3170, %v251
    %v3174 = vmul.f32 %v3170, %v256
    %v3179 = vrot.slane %v3171, 2
    %v3180 = vrot.slane %v3172, 2
    %v3181 = vsel %vm2276, %v3179, %v3180
    %v3182 = vrot.slane %v3173, 2
    %v3183 = vsel %vm2276, %v3180, %v3182
    %v3184 = vrot.slane %v3174, 2
    %v3185 = vsel %vm2276, %v3182, %v3184
    %3186 = vrot.lane.b32.xlu0 %v3181, 126
    %v3187 = vpop.permute.xlu0 %3186
    %3188 = vrot.lane.b32.xlu0 %v3183, 126
    %v3189 = vpop.permute.xlu0 %3188
    %3190 = vrot.lane.b32.xlu0 %v3185, 126
    %v3191 = vpop.permute.xlu0 %3190
    %v3195 = vadd.f32 %v2789, %v3187
    %v3196 = vadd.f32 %v2790, %v3189
    %v3197 = vadd.f32 %v2791, %v3191
    %s3198 = sld [smem:[#allocation2 + $0x3f]]
    %v3199 = vstv %s3198
    %v3200 = vmul.f32 %v3199, %v241
    %v3201 = vmul.f32 %v3199, %v246
    %v3202 = vmul.f32 %v3199, %v251
    %v3203 = vmul.f32 %v3199, %v256
    %v3208 = vrot.slane %v3200, 2
    %v3209 = vrot.slane %v3201, 2
    %v3210 = vsel %vm2276, %v3208, %v3209
    %v3211 = vrot.slane %v3202, 2
    %v3212 = vsel %vm2276, %v3209, %v3211
    %v3213 = vrot.slane %v3203, 2
    %v3214 = vsel %vm2276, %v3211, %v3213
    %3215 = vrot.lane.b32.xlu0 %v3210, 126
    %v3216 = vpop.permute.xlu0 %3215
    %3217 = vrot.lane.b32.xlu0 %v3212, 126
    %v3218 = vpop.permute.xlu0 %3217
    %3219 = vrot.lane.b32.xlu0 %v3214, 126
    %v3220 = vpop.permute.xlu0 %3219
    %v3224 = vadd.f32 %v2818, %v3216
    %v3225 = vadd.f32 %v2819, %v3218
    %v3226 = vadd.f32 %v2820, %v3220
    %s3227 = sld [smem:[#allocation2 + $0x48]]
    %v3228 = vstv %s3227
    %v3229 = vmul.f32 %v3228, %v241
    %v3230 = vmul.f32 %v3228, %v246
    %v3231 = vmul.f32 %v3228, %v251
    %v3232 = vmul.f32 %v3228, %v256
    %v3237 = vrot.slane %v3229, 2
    %v3238 = vrot.slane %v3230, 2
    %v3239 = vsel %vm2276, %v3237, %v3238
    %v3240 = vrot.slane %v3231, 2
    %v3241 = vsel %vm2276, %v3238, %v3240
    %v3242 = vrot.slane %v3232, 2
    %v3243 = vsel %vm2276, %v3240, %v3242
    %3244 = vrot.lane.b32.xlu0 %v3239, 126
    %v3245 = vpop.permute.xlu0 %3244
    %3246 = vrot.lane.b32.xlu0 %v3241, 126
    %v3247 = vpop.permute.xlu0 %3246
    %3248 = vrot.lane.b32.xlu0 %v3243, 126
    %v3249 = vpop.permute.xlu0 %3248
    %v3253 = vadd.f32 %v2847, %v3245
    %v3254 = vadd.f32 %v2848, %v3247
    %v3255 = vadd.f32 %v2849, %v3249
    %s3256 = sld [smem:[#allocation2 + $0x51]]
    %v3257 = vstv %s3256
    %v3258 = vmul.f32 %v3257, %v241
    %v3259 = vmul.f32 %v3257, %v246
    %v3260 = vmul.f32 %v3257, %v251
    %v3261 = vmul.f32 %v3257, %v256
    %v3266 = vrot.slane %v3258, 2
    %v3267 = vrot.slane %v3259, 2
    %v3268 = vsel %vm2276, %v3266, %v3267
    %v3269 = vrot.slane %v3260, 2
    %v3270 = vsel %vm2276, %v3267, %v3269
    %v3271 = vrot.slane %v3261, 2
    %v3272 = vsel %vm2276, %v3269, %v3271
    %3273 = vrot.lane.b32.xlu0 %v3268, 126
    %v3274 = vpop.permute.xlu0 %3273
    %3275 = vrot.lane.b32.xlu0 %v3270, 126
    %v3276 = vpop.permute.xlu0 %3275
    %3277 = vrot.lane.b32.xlu0 %v3272, 126
    %v3278 = vpop.permute.xlu0 %3277
    %v3282 = vadd.f32 %v2876, %v3274
    %v3283 = vadd.f32 %v2877, %v3276
    %v3284 = vadd.f32 %v2878, %v3278
    %s3285 = sld [smem:[#allocation2 + $0x5a]]
    %v3286 = vstv %s3285
    %v3287 = vmul.f32 %v3286, %v241
    %v3288 = vmul.f32 %v3286, %v246
    %v3289 = vmul.f32 %v3286, %v251
    %v3290 = vmul.f32 %v3286, %v256
    %v3295 = vrot.slane %v3287, 2
    %v3296 = vrot.slane %v3288, 2
    %v3297 = vsel %vm2276, %v3295, %v3296
    %v3298 = vrot.slane %v3289, 2
    %v3299 = vsel %vm2276, %v3296, %v3298
    %v3300 = vrot.slane %v3290, 2
    %v3301 = vsel %vm2276, %v3298, %v3300
    %3302 = vrot.lane.b32.xlu0 %v3297, 126
    %v3303 = vpop.permute.xlu0 %3302
    %3304 = vrot.lane.b32.xlu0 %v3299, 126
    %v3305 = vpop.permute.xlu0 %3304
    %3306 = vrot.lane.b32.xlu0 %v3301, 126
    %v3307 = vpop.permute.xlu0 %3306
    %v3311 = vadd.f32 %v2905, %v3303
    %v3312 = vadd.f32 %v2906, %v3305
    %v3313 = vadd.f32 %v2907, %v3307
    %s3314 = sld [smem:[#allocation2 + $0x63]]
    %v3315 = vstv %s3314
    %v3316 = vmul.f32 %v3315, %v241
    %v3317 = vmul.f32 %v3315, %v246
    %v3318 = vmul.f32 %v3315, %v251
    %v3319 = vmul.f32 %v3315, %v256
    %v3324 = vrot.slane %v3316, 2
    %v3325 = vrot.slane %v3317, 2
    %v3326 = vsel %vm2276, %v3324, %v3325
    %v3327 = vrot.slane %v3318, 2
    %v3328 = vsel %vm2276, %v3325, %v3327
    %v3329 = vrot.slane %v3319, 2
    %v3330 = vsel %vm2276, %v3327, %v3329
    %3331 = vrot.lane.b32.xlu0 %v3326, 126
    %v3332 = vpop.permute.xlu0 %3331
    %3333 = vrot.lane.b32.xlu0 %v3328, 126
    %v3334 = vpop.permute.xlu0 %3333
    %3335 = vrot.lane.b32.xlu0 %v3330, 126
    %v3336 = vpop.permute.xlu0 %3335
    %v3340 = vadd.f32 %v2934, %v3332
    %v3341 = vadd.f32 %v2935, %v3334
    %v3342 = vadd.f32 %v2936, %v3336
    %s3343 = sld [smem:[#allocation2 + $0x6c]]
    %v3344 = vstv %s3343
    %v3345 = vmul.f32 %v3344, %v241
    %v3346 = vmul.f32 %v3344, %v246
    %v3347 = vmul.f32 %v3344, %v251
    %v3348 = vmul.f32 %v3344, %v256
    %v3353 = vrot.slane %v3345, 2
    %v3354 = vrot.slane %v3346, 2
    %v3355 = vsel %vm2276, %v3353, %v3354
    %v3356 = vrot.slane %v3347, 2
    %v3357 = vsel %vm2276, %v3354, %v3356
    %v3358 = vrot.slane %v3348, 2
    %v3359 = vsel %vm2276, %v3356, %v3358
    %3360 = vrot.lane.b32.xlu0 %v3355, 126
    %v3361 = vpop.permute.xlu0 %3360
    %3362 = vrot.lane.b32.xlu0 %v3357, 126
    %v3363 = vpop.permute.xlu0 %3362
    %3364 = vrot.lane.b32.xlu0 %v3359, 126
    %v3365 = vpop.permute.xlu0 %3364
    %v3369 = vadd.f32 %v2963, %v3361
    %v3370 = vadd.f32 %v2964, %v3363
    %v3371 = vadd.f32 %v2965, %v3365
    %s3372 = sld [smem:[#allocation2 + $0x75]]
    %v3373 = vstv %s3372
    %v3374 = vmul.f32 %v3373, %v241
    %v3375 = vmul.f32 %v3373, %v246
    %v3376 = vmul.f32 %v3373, %v251
    %v3377 = vmul.f32 %v3373, %v256
    %v3382 = vrot.slane %v3374, 2
    %v3383 = vrot.slane %v3375, 2
    %v3384 = vsel %vm2276, %v3382, %v3383
    %v3385 = vrot.slane %v3376, 2
    %v3386 = vsel %vm2276, %v3383, %v3385
    %v3387 = vrot.slane %v3377, 2
    %v3388 = vsel %vm2276, %v3385, %v3387
    %3389 = vrot.lane.b32.xlu0 %v3384, 126
    %v3390 = vpop.permute.xlu0 %3389
    %3391 = vrot.lane.b32.xlu0 %v3386, 126
    %v3392 = vpop.permute.xlu0 %3391
    %3393 = vrot.lane.b32.xlu0 %v3388, 126
    %v3394 = vpop.permute.xlu0 %3393
    %v3398 = vadd.f32 %v2992, %v3390
    %v3399 = vadd.f32 %v2993, %v3392
    %v3400 = vadd.f32 %v2994, %v3394
    %s3401 = sld [smem:[#allocation2 + $0x86]]
    %v3402 = vstv %s3401
    %v3403 = vmul.f32 %v3402, %v413
    %v3404 = vmul.f32 %v3402, %v418
    %v3405 = vmul.f32 %v3402, %v423
    %v3406 = vadd.f32 %v3021, %v3403
    %v3407 = vadd.f32 %v3022, %v3404
    %v3408 = vadd.f32 %v3023, %v3405
    %s3409 = sld [smem:[#allocation2 + $0x8f]]
    %v3410 = vstv %s3409
    %v3411 = vmul.f32 %v3410, %v413
    %v3412 = vmul.f32 %v3410, %v418
    %v3413 = vmul.f32 %v3410, %v423
    %v3414 = vadd.f32 %v3050, %v3411
    %v3415 = vadd.f32 %v3051, %v3412
    %v3416 = vadd.f32 %v3052, %v3413
    %s3417 = sld [smem:[#allocation2 + $0x98]]
    %v3418 = vstv %s3417
    %v3419 = vmul.f32 %v3418, %v413
    %v3420 = vmul.f32 %v3418, %v418
    %v3421 = vmul.f32 %v3418, %v423
    %v3422 = vadd.f32 %v3079, %v3419
    %v3423 = vadd.f32 %v3080, %v3420
    %v3424 = vadd.f32 %v3081, %v3421
    %s3425 = sld [smem:[#allocation2 + $0xa1]]
    %v3426 = vstv %s3425
    %v3427 = vmul.f32 %v3426, %v413
    %v3428 = vmul.f32 %v3426, %v418
    %v3429 = vmul.f32 %v3426, %v423
    %v3430 = vadd.f32 %v3108, %v3427
    %v3431 = vadd.f32 %v3109, %v3428
    %v3432 = vadd.f32 %v3110, %v3429
    %s3433 = sld [smem:[#allocation2 + $0xaa]]
    %v3434 = vstv %s3433
    %v3435 = vmul.f32 %v3434, %v413
    %v3436 = vmul.f32 %v3434, %v418
    %v3437 = vmul.f32 %v3434, %v423
    %v3438 = vadd.f32 %v3137, %v3435
    %v3439 = vadd.f32 %v3138, %v3436
    %v3440 = vadd.f32 %v3139, %v3437
    %s3441 = sld [smem:[#allocation2 + $0xb3]]
    %v3442 = vstv %s3441
    %v3443 = vmul.f32 %v3442, %v413
    %v3444 = vmul.f32 %v3442, %v418
    %v3445 = vmul.f32 %v3442, %v423
    %v3446 = vadd.f32 %v3166, %v3443
    %v3447 = vadd.f32 %v3167, %v3444
    %v3448 = vadd.f32 %v3168, %v3445
    %s3449 = sld [smem:[#allocation2 + $0xbc]]
    %v3450 = vstv %s3449
    %v3451 = vmul.f32 %v3450, %v413
    %v3452 = vmul.f32 %v3450, %v418
    %v3453 = vmul.f32 %v3450, %v423
    %v3454 = vadd.f32 %v3195, %v3451
    %v3455 = vadd.f32 %v3196, %v3452
    %v3456 = vadd.f32 %v3197, %v3453
    %s3457 = sld [smem:[#allocation2 + $0xc5]]
    %v3458 = vstv %s3457
    %v3459 = vmul.f32 %v3458, %v413
    %v3460 = vmul.f32 %v3458, %v418
    %v3461 = vmul.f32 %v3458, %v423
    %v3462 = vadd.f32 %v3224, %v3459
    %v3463 = vadd.f32 %v3225, %v3460
    %v3464 = vadd.f32 %v3226, %v3461
    %s3465 = sld [smem:[#allocation2 + $0xce]]
    %v3466 = vstv %s3465
    %v3467 = vmul.f32 %v3466, %v413
    %v3468 = vmul.f32 %v3466, %v418
    %v3469 = vmul.f32 %v3466, %v423
    %v3470 = vadd.f32 %v3253, %v3467
    %v3471 = vadd.f32 %v3254, %v3468
    %v3472 = vadd.f32 %v3255, %v3469
    %s3473 = sld [smem:[#allocation2 + $0xd7]]
    %v3474 = vstv %s3473
    %v3475 = vmul.f32 %v3474, %v413
    %v3476 = vmul.f32 %v3474, %v418
    %v3477 = vmul.f32 %v3474, %v423
    %v3478 = vadd.f32 %v3282, %v3475
    %v3479 = vadd.f32 %v3283, %v3476
    %v3480 = vadd.f32 %v3284, %v3477
    %s3481 = sld [smem:[#allocation2 + $0xe0]]
    %v3482 = vstv %s3481
    %v3483 = vmul.f32 %v3482, %v413
    %v3484 = vmul.f32 %v3482, %v418
    %v3485 = vmul.f32 %v3482, %v423
    %v3486 = vadd.f32 %v3311, %v3483
    %v3487 = vadd.f32 %v3312, %v3484
    %v3488 = vadd.f32 %v3313, %v3485
    %s3489 = sld [smem:[#allocation2 + $0xe9]]
    %v3490 = vstv %s3489
    %v3491 = vmul.f32 %v3490, %v413
    %v3492 = vmul.f32 %v3490, %v418
    %v3493 = vmul.f32 %v3490, %v423
    %v3494 = vadd.f32 %v3340, %v3491
    %v3495 = vadd.f32 %v3341, %v3492
    %v3496 = vadd.f32 %v3342, %v3493
    %s3497 = sld [smem:[#allocation2 + $0xf2]]
    %v3498 = vstv %s3497
    %v3499 = vmul.f32 %v3498, %v413
    %v3500 = vmul.f32 %v3498, %v418
    %v3501 = vmul.f32 %v3498, %v423
    %v3502 = vadd.f32 %v3369, %v3499
    %v3503 = vadd.f32 %v3370, %v3500
    %v3504 = vadd.f32 %v3371, %v3501
    %s3505 = sld [smem:[#allocation2 + $0xfb]]
    %v3506 = vstv %s3505
    %v3507 = vmul.f32 %v3506, %v413
    %v3508 = vmul.f32 %v3506, %v418
    %v3509 = vmul.f32 %v3506, %v423
    %v3510 = vadd.f32 %v3398, %v3507
    %v3511 = vadd.f32 %v3399, %v3508
    %v3512 = vadd.f32 %v3400, %v3509
    %s3513 = sld [smem:[#allocation2 + $0x85]]
    %v3514 = vstv %s3513
    %v3515 = vmul.f32 %v3514, %v413
    %v3516 = vmul.f32 %v3514, %v418
    %v3517 = vmul.f32 %v3514, %v423
    %3521 = vrot.lane.b32.xlu0 %v3515, 127
    %v3522 = vpop.permute.xlu0 %3521
    %3523 = vrot.lane.b32.xlu0 %v3516, 127
    %v3524 = vpop.permute.xlu0 %3523
    %3525 = vrot.lane.b32.xlu0 %v3517, 127
    %v3526 = vpop.permute.xlu0 %3525
    %v3530 = vadd.f32 %v3406, %v3522
    %v3531 = vadd.f32 %v3407, %v3524
    %v3532 = vadd.f32 %v3408, %v3526
    %s3533 = sld [smem:[#allocation2 + $0x8e]]
    %v3534 = vstv %s3533
    %v3535 = vmul.f32 %v3534, %v413
    %v3536 = vmul.f32 %v3534, %v418
    %v3537 = vmul.f32 %v3534, %v423
    %3541 = vrot.lane.b32.xlu0 %v3535, 127
    %v3542 = vpop.permute.xlu0 %3541
    %3543 = vrot.lane.b32.xlu0 %v3536, 127
    %v3544 = vpop.permute.xlu0 %3543
    %3545 = vrot.lane.b32.xlu0 %v3537, 127
    %v3546 = vpop.permute.xlu0 %3545
    %v3550 = vadd.f32 %v3414, %v3542
    %v3551 = vadd.f32 %v3415, %v3544
    %v3552 = vadd.f32 %v3416, %v3546
    %s3553 = sld [smem:[#allocation2 + $0x97]]
    %v3554 = vstv %s3553
    %v3555 = vmul.f32 %v3554, %v413
    %v3556 = vmul.f32 %v3554, %v418
    %v3557 = vmul.f32 %v3554, %v423
    %3561 = vrot.lane.b32.xlu0 %v3555, 127
    %v3562 = vpop.permute.xlu0 %3561
    %3563 = vrot.lane.b32.xlu0 %v3556, 127
    %v3564 = vpop.permute.xlu0 %3563
    %3565 = vrot.lane.b32.xlu0 %v3557, 127
    %v3566 = vpop.permute.xlu0 %3565
    %v3570 = vadd.f32 %v3422, %v3562
    %v3571 = vadd.f32 %v3423, %v3564
    %v3572 = vadd.f32 %v3424, %v3566
    %s3573 = sld [smem:[#allocation2 + $0xa0]]
    %v3574 = vstv %s3573
    %v3575 = vmul.f32 %v3574, %v413
    %v3576 = vmul.f32 %v3574, %v418
    %v3577 = vmul.f32 %v3574, %v423
    %3581 = vrot.lane.b32.xlu0 %v3575, 127
    %v3582 = vpop.permute.xlu0 %3581
    %3583 = vrot.lane.b32.xlu0 %v3576, 127
    %v3584 = vpop.permute.xlu0 %3583
    %3585 = vrot.lane.b32.xlu0 %v3577, 127
    %v3586 = vpop.permute.xlu0 %3585
    %v3590 = vadd.f32 %v3430, %v3582
    %v3591 = vadd.f32 %v3431, %v3584
    %v3592 = vadd.f32 %v3432, %v3586
    %s3593 = sld [smem:[#allocation2 + $0xa9]]
    %v3594 = vstv %s3593
    %v3595 = vmul.f32 %v3594, %v413
    %v3596 = vmul.f32 %v3594, %v418
    %v3597 = vmul.f32 %v3594, %v423
    %3601 = vrot.lane.b32.xlu0 %v3595, 127
    %v3602 = vpop.permute.xlu0 %3601
    %3603 = vrot.lane.b32.xlu0 %v3596, 127
    %v3604 = vpop.permute.xlu0 %3603
    %3605 = vrot.lane.b32.xlu0 %v3597, 127
    %v3606 = vpop.permute.xlu0 %3605
    %v3610 = vadd.f32 %v3438, %v3602
    %v3611 = vadd.f32 %v3439, %v3604
    %v3612 = vadd.f32 %v3440, %v3606
    %s3613 = sld [smem:[#allocation2 + $0xb2]]
    %v3614 = vstv %s3613
    %v3615 = vmul.f32 %v3614, %v413
    %v3616 = vmul.f32 %v3614, %v418
    %v3617 = vmul.f32 %v3614, %v423
    %3621 = vrot.lane.b32.xlu0 %v3615, 127
    %v3622 = vpop.permute.xlu0 %3621
    %3623 = vrot.lane.b32.xlu0 %v3616, 127
    %v3624 = vpop.permute.xlu0 %3623
    %3625 = vrot.lane.b32.xlu0 %v3617, 127
    %v3626 = vpop.permute.xlu0 %3625
    %v3630 = vadd.f32 %v3446, %v3622
    %v3631 = vadd.f32 %v3447, %v3624
    %v3632 = vadd.f32 %v3448, %v3626
    %s3633 = sld [smem:[#allocation2 + $0xbb]]
    %v3634 = vstv %s3633
    %v3635 = vmul.f32 %v3634, %v413
    %v3636 = vmul.f32 %v3634, %v418
    %v3637 = vmul.f32 %v3634, %v423
    %3641 = vrot.lane.b32.xlu0 %v3635, 127
    %v3642 = vpop.permute.xlu0 %3641
    %3643 = vrot.lane.b32.xlu0 %v3636, 127
    %v3644 = vpop.permute.xlu0 %3643
    %3645 = vrot.lane.b32.xlu0 %v3637, 127
    %v3646 = vpop.permute.xlu0 %3645
    %v3650 = vadd.f32 %v3454, %v3642
    %v3651 = vadd.f32 %v3455, %v3644
    %v3652 = vadd.f32 %v3456, %v3646
    %s3653 = sld [smem:[#allocation2 + $0xc4]]
    %v3654 = vstv %s3653
    %v3655 = vmul.f32 %v3654, %v413
    %v3656 = vmul.f32 %v3654, %v418
    %v3657 = vmul.f32 %v3654, %v423
    %3661 = vrot.lane.b32.xlu0 %v3655, 127
    %v3662 = vpop.permute.xlu0 %3661
    %3663 = vrot.lane.b32.xlu0 %v3656, 127
    %v3664 = vpop.permute.xlu0 %3663
    %3665 = vrot.lane.b32.xlu0 %v3657, 127
    %v3666 = vpop.permute.xlu0 %3665
    %v3670 = vadd.f32 %v3462, %v3662
    %v3671 = vadd.f32 %v3463, %v3664
    %v3672 = vadd.f32 %v3464, %v3666
    %s3673 = sld [smem:[#allocation2 + $0xcd]]
    %v3674 = vstv %s3673
    %v3675 = vmul.f32 %v3674, %v413
    %v3676 = vmul.f32 %v3674, %v418
    %v3677 = vmul.f32 %v3674, %v423
    %3681 = vrot.lane.b32.xlu0 %v3675, 127
    %v3682 = vpop.permute.xlu0 %3681
    %3683 = vrot.lane.b32.xlu0 %v3676, 127
    %v3684 = vpop.permute.xlu0 %3683
    %3685 = vrot.lane.b32.xlu0 %v3677, 127
    %v3686 = vpop.permute.xlu0 %3685
    %v3690 = vadd.f32 %v3470, %v3682
    %v3691 = vadd.f32 %v3471, %v3684
    %v3692 = vadd.f32 %v3472, %v3686
    %s3693 = sld [smem:[#allocation2 + $0xd6]]
    %v3694 = vstv %s3693
    %v3695 = vmul.f32 %v3694, %v413
    %v3696 = vmul.f32 %v3694, %v418
    %v3697 = vmul.f32 %v3694, %v423
    %3701 = vrot.lane.b32.xlu0 %v3695, 127
    %v3702 = vpop.permute.xlu0 %3701
    %3703 = vrot.lane.b32.xlu0 %v3696, 127
    %v3704 = vpop.permute.xlu0 %3703
    %3705 = vrot.lane.b32.xlu0 %v3697, 127
    %v3706 = vpop.permute.xlu0 %3705
    %v3710 = vadd.f32 %v3478, %v3702
    %v3711 = vadd.f32 %v3479, %v3704
    %v3712 = vadd.f32 %v3480, %v3706
    %s3713 = sld [smem:[#allocation2 + $0xdf]]
    %v3714 = vstv %s3713
    %v3715 = vmul.f32 %v3714, %v413
    %v3716 = vmul.f32 %v3714, %v418
    %v3717 = vmul.f32 %v3714, %v423
    %3721 = vrot.lane.b32.xlu0 %v3715, 127
    %v3722 = vpop.permute.xlu0 %3721
    %3723 = vrot.lane.b32.xlu0 %v3716, 127
    %v3724 = vpop.permute.xlu0 %3723
    %3725 = vrot.lane.b32.xlu0 %v3717, 127
    %v3726 = vpop.permute.xlu0 %3725
    %v3730 = vadd.f32 %v3486, %v3722
    %v3731 = vadd.f32 %v3487, %v3724
    %v3732 = vadd.f32 %v3488, %v3726
    %s3733 = sld [smem:[#allocation2 + $0xe8]]
    %v3734 = vstv %s3733
    %v3735 = vmul.f32 %v3734, %v413
    %v3736 = vmul.f32 %v3734, %v418
    %v3737 = vmul.f32 %v3734, %v423
    %3741 = vrot.lane.b32.xlu0 %v3735, 127
    %v3742 = vpop.permute.xlu0 %3741
    %3743 = vrot.lane.b32.xlu0 %v3736, 127
    %v3744 = vpop.permute.xlu0 %3743
    %3745 = vrot.lane.b32.xlu0 %v3737, 127
    %v3746 = vpop.permute.xlu0 %3745
    %v3750 = vadd.f32 %v3494, %v3742
    %v3751 = vadd.f32 %v3495, %v3744
    %v3752 = vadd.f32 %v3496, %v3746
    %s3753 = sld [smem:[#allocation2 + $0xf1]]
    %v3754 = vstv %s3753
    %v3755 = vmul.f32 %v3754, %v413
    %v3756 = vmul.f32 %v3754, %v418
    %v3757 = vmul.f32 %v3754, %v423
    %3761 = vrot.lane.b32.xlu0 %v3755, 127
    %v3762 = vpop.permute.xlu0 %3761
    %3763 = vrot.lane.b32.xlu0 %v3756, 127
    %v3764 = vpop.permute.xlu0 %3763
    %3765 = vrot.lane.b32.xlu0 %v3757, 127
    %v3766 = vpop.permute.xlu0 %3765
    %v3770 = vadd.f32 %v3502, %v3762
    %v3771 = vadd.f32 %v3503, %v3764
    %v3772 = vadd.f32 %v3504, %v3766
    %s3773 = sld [smem:[#allocation2 + $0xfa]]
    %v3774 = vstv %s3773
    %v3775 = vmul.f32 %v3774, %v413
    %v3776 = vmul.f32 %v3774, %v418
    %v3777 = vmul.f32 %v3774, %v423
    %3781 = vrot.lane.b32.xlu0 %v3775, 127
    %v3782 = vpop.permute.xlu0 %3781
    %3783 = vrot.lane.b32.xlu0 %v3776, 127
    %v3784 = vpop.permute.xlu0 %3783
    %3785 = vrot.lane.b32.xlu0 %v3777, 127
    %v3786 = vpop.permute.xlu0 %3785
    %v3790 = vadd.f32 %v3510, %v3782
    %v3791 = vadd.f32 %v3511, %v3784
    %v3792 = vadd.f32 %v3512, %v3786
    %s3793 = sld [smem:[#allocation2 + $0x84]]
    %v3794 = vstv %s3793
    %v3795 = vmul.f32 %v3794, %v413
    %v3796 = vmul.f32 %v3794, %v418
    %v3797 = vmul.f32 %v3794, %v423
    %3801 = vrot.lane.b32.xlu0 %v3795, 126
    %v3802 = vpop.permute.xlu0 %3801
    %3803 = vrot.lane.b32.xlu0 %v3796, 126
    %v3804 = vpop.permute.xlu0 %3803
    %3805 = vrot.lane.b32.xlu0 %v3797, 126
    %v3806 = vpop.permute.xlu0 %3805
    %v3810 = vadd.f32 %v3530, %v3802
    %v3811 = vadd.f32 %v3531, %v3804
    %v3812 = vadd.f32 %v3532, %v3806
    %s3813 = sld [smem:[#allocation2 + $0x8d]]
    %v3814 = vstv %s3813
    %v3815 = vmul.f32 %v3814, %v413
    %v3816 = vmul.f32 %v3814, %v418
    %v3817 = vmul.f32 %v3814, %v423
    %3821 = vrot.lane.b32.xlu0 %v3815, 126
    %v3822 = vpop.permute.xlu0 %3821
    %3823 = vrot.lane.b32.xlu0 %v3816, 126
    %v3824 = vpop.permute.xlu0 %3823
    %3825 = vrot.lane.b32.xlu0 %v3817, 126
    %v3826 = vpop.permute.xlu0 %3825
    %v3830 = vadd.f32 %v3550, %v3822
    %v3831 = vadd.f32 %v3551, %v3824
    %v3832 = vadd.f32 %v3552, %v3826
    %s3833 = sld [smem:[#allocation2 + $0x96]]
    %v3834 = vstv %s3833
    %v3835 = vmul.f32 %v3834, %v413
    %v3836 = vmul.f32 %v3834, %v418
    %v3837 = vmul.f32 %v3834, %v423
    %3841 = vrot.lane.b32.xlu0 %v3835, 126
    %v3842 = vpop.permute.xlu0 %3841
    %3843 = vrot.lane.b32.xlu0 %v3836, 126
    %v3844 = vpop.permute.xlu0 %3843
    %3845 = vrot.lane.b32.xlu0 %v3837, 126
    %v3846 = vpop.permute.xlu0 %3845
    %v3850 = vadd.f32 %v3570, %v3842
    %v3851 = vadd.f32 %v3571, %v3844
    %v3852 = vadd.f32 %v3572, %v3846
    %s3853 = sld [smem:[#allocation2 + $0x9f]]
    %v3854 = vstv %s3853
    %v3855 = vmul.f32 %v3854, %v413
    %v3856 = vmul.f32 %v3854, %v418
    %v3857 = vmul.f32 %v3854, %v423
    %3861 = vrot.lane.b32.xlu0 %v3855, 126
    %v3862 = vpop.permute.xlu0 %3861
    %3863 = vrot.lane.b32.xlu0 %v3856, 126
    %v3864 = vpop.permute.xlu0 %3863
    %3865 = vrot.lane.b32.xlu0 %v3857, 126
    %v3866 = vpop.permute.xlu0 %3865
    %v3870 = vadd.f32 %v3590, %v3862
    %v3871 = vadd.f32 %v3591, %v3864
    %v3872 = vadd.f32 %v3592, %v3866
    %s3873 = sld [smem:[#allocation2 + $0xa8]]
    %v3874 = vstv %s3873
    %v3875 = vmul.f32 %v3874, %v413
    %v3876 = vmul.f32 %v3874, %v418
    %v3877 = vmul.f32 %v3874, %v423
    %3881 = vrot.lane.b32.xlu0 %v3875, 126
    %v3882 = vpop.permute.xlu0 %3881
    %3883 = vrot.lane.b32.xlu0 %v3876, 126
    %v3884 = vpop.permute.xlu0 %3883
    %3885 = vrot.lane.b32.xlu0 %v3877, 126
    %v3886 = vpop.permute.xlu0 %3885
    %v3890 = vadd.f32 %v3610, %v3882
    %v3891 = vadd.f32 %v3611, %v3884
    %v3892 = vadd.f32 %v3612, %v3886
    %s3893 = sld [smem:[#allocation2 + $0xb1]]
    %v3894 = vstv %s3893
    %v3895 = vmul.f32 %v3894, %v413
    %v3896 = vmul.f32 %v3894, %v418
    %v3897 = vmul.f32 %v3894, %v423
    %3901 = vrot.lane.b32.xlu0 %v3895, 126
    %v3902 = vpop.permute.xlu0 %3901
    %3903 = vrot.lane.b32.xlu0 %v3896, 126
    %v3904 = vpop.permute.xlu0 %3903
    %3905 = vrot.lane.b32.xlu0 %v3897, 126
    %v3906 = vpop.permute.xlu0 %3905
    %v3910 = vadd.f32 %v3630, %v3902
    %v3911 = vadd.f32 %v3631, %v3904
    %v3912 = vadd.f32 %v3632, %v3906
    %s3913 = sld [smem:[#allocation2 + $0xba]]
    %v3914 = vstv %s3913
    %v3915 = vmul.f32 %v3914, %v413
    %v3916 = vmul.f32 %v3914, %v418
    %v3917 = vmul.f32 %v3914, %v423
    %3921 = vrot.lane.b32.xlu0 %v3915, 126
    %v3922 = vpop.permute.xlu0 %3921
    %3923 = vrot.lane.b32.xlu0 %v3916, 126
    %v3924 = vpop.permute.xlu0 %3923
    %3925 = vrot.lane.b32.xlu0 %v3917, 126
    %v3926 = vpop.permute.xlu0 %3925
    %v3930 = vadd.f32 %v3650, %v3922
    %v3931 = vadd.f32 %v3651, %v3924
    %v3932 = vadd.f32 %v3652, %v3926
    %s3933 = sld [smem:[#allocation2 + $0xc3]]
    %v3934 = vstv %s3933
    %v3935 = vmul.f32 %v3934, %v413
    %v3936 = vmul.f32 %v3934, %v418
    %v3937 = vmul.f32 %v3934, %v423
    %3941 = vrot.lane.b32.xlu0 %v3935, 126
    %v3942 = vpop.permute.xlu0 %3941
    %3943 = vrot.lane.b32.xlu0 %v3936, 126
    %v3944 = vpop.permute.xlu0 %3943
    %3945 = vrot.lane.b32.xlu0 %v3937, 126
    %v3946 = vpop.permute.xlu0 %3945
    %v3950 = vadd.f32 %v3670, %v3942
    %v3951 = vadd.f32 %v3671, %v3944
    %v3952 = vadd.f32 %v3672, %v3946
    %s3953 = sld [smem:[#allocation2 + $0xcc]]
    %v3954 = vstv %s3953
    %v3955 = vmul.f32 %v3954, %v413
    %v3956 = vmul.f32 %v3954, %v418
    %v3957 = vmul.f32 %v3954, %v423
    %3961 = vrot.lane.b32.xlu0 %v3955, 126
    %v3962 = vpop.permute.xlu0 %3961
    %3963 = vrot.lane.b32.xlu0 %v3956, 126
    %v3964 = vpop.permute.xlu0 %3963
    %3965 = vrot.lane.b32.xlu0 %v3957, 126
    %v3966 = vpop.permute.xlu0 %3965
    %v3970 = vadd.f32 %v3690, %v3962
    %v3971 = vadd.f32 %v3691, %v3964
    %v3972 = vadd.f32 %v3692, %v3966
    %s3973 = sld [smem:[#allocation2 + $0xd5]]
    %v3974 = vstv %s3973
    %v3975 = vmul.f32 %v3974, %v413
    %v3976 = vmul.f32 %v3974, %v418
    %v3977 = vmul.f32 %v3974, %v423
    %3981 = vrot.lane.b32.xlu0 %v3975, 126
    %v3982 = vpop.permute.xlu0 %3981
    %3983 = vrot.lane.b32.xlu0 %v3976, 126
    %v3984 = vpop.permute.xlu0 %3983
    %3985 = vrot.lane.b32.xlu0 %v3977, 126
    %v3986 = vpop.permute.xlu0 %3985
    %v3990 = vadd.f32 %v3710, %v3982
    %v3991 = vadd.f32 %v3711, %v3984
    %v3992 = vadd.f32 %v3712, %v3986
    %s3993 = sld [smem:[#allocation2 + $0xde]]
    %v3994 = vstv %s3993
    %v3995 = vmul.f32 %v3994, %v413
    %v3996 = vmul.f32 %v3994, %v418
    %v3997 = vmul.f32 %v3994, %v423
    %4001 = vrot.lane.b32.xlu0 %v3995, 126
    %v4002 = vpop.permute.xlu0 %4001
    %4003 = vrot.lane.b32.xlu0 %v3996, 126
    %v4004 = vpop.permute.xlu0 %4003
    %4005 = vrot.lane.b32.xlu0 %v3997, 126
    %v4006 = vpop.permute.xlu0 %4005
    %v4010 = vadd.f32 %v3730, %v4002
    %v4011 = vadd.f32 %v3731, %v4004
    %v4012 = vadd.f32 %v3732, %v4006
    %s4013 = sld [smem:[#allocation2 + $0xe7]]
    %v4014 = vstv %s4013
    %v4015 = vmul.f32 %v4014, %v413
    %v4016 = vmul.f32 %v4014, %v418
    %v4017 = vmul.f32 %v4014, %v423
    %4021 = vrot.lane.b32.xlu0 %v4015, 126
    %v4022 = vpop.permute.xlu0 %4021
    %4023 = vrot.lane.b32.xlu0 %v4016, 126
    %v4024 = vpop.permute.xlu0 %4023
    %4025 = vrot.lane.b32.xlu0 %v4017, 126
    %v4026 = vpop.permute.xlu0 %4025
    %v4030 = vadd.f32 %v3750, %v4022
    %v4031 = vadd.f32 %v3751, %v4024
    %v4032 = vadd.f32 %v3752, %v4026
    %s4033 = sld [smem:[#allocation2 + $0xf0]]
    %v4034 = vstv %s4033
    %v4035 = vmul.f32 %v4034, %v413
    %v4036 = vmul.f32 %v4034, %v418
    %v4037 = vmul.f32 %v4034, %v423
    %4041 = vrot.lane.b32.xlu0 %v4035, 126
    %v4042 = vpop.permute.xlu0 %4041
    %4043 = vrot.lane.b32.xlu0 %v4036, 126
    %v4044 = vpop.permute.xlu0 %4043
    %4045 = vrot.lane.b32.xlu0 %v4037, 126
    %v4046 = vpop.permute.xlu0 %4045
    %v4050 = vadd.f32 %v3770, %v4042
    %v4051 = vadd.f32 %v3771, %v4044
    %v4052 = vadd.f32 %v3772, %v4046
    %s4053 = sld [smem:[#allocation2 + $0xf9]]
    %v4054 = vstv %s4053
    %v4055 = vmul.f32 %v4054, %v413
    %v4056 = vmul.f32 %v4054, %v418
    %v4057 = vmul.f32 %v4054, %v423
    %4061 = vrot.lane.b32.xlu0 %v4055, 126
    %v4062 = vpop.permute.xlu0 %4061
    %4063 = vrot.lane.b32.xlu0 %v4056, 126
    %v4064 = vpop.permute.xlu0 %4063
    %4065 = vrot.lane.b32.xlu0 %v4057, 126
    %v4066 = vpop.permute.xlu0 %4065
    %v4070 = vadd.f32 %v3790, %v4062
    %v4071 = vadd.f32 %v3791, %v4064
    %v4072 = vadd.f32 %v3792, %v4066
    %s4073 = sld [smem:[#allocation2 + $0x83]]
    %v4074 = vstv %s4073
    %v4075 = vmul.f32 %v4074, %v413
    %v4076 = vmul.f32 %v4074, %v418
    %v4077 = vmul.f32 %v4074, %v423
    %v4078 = vmul.f32 %v4074, %v428
    %v4083 = vrot.slane %v4075, 1
    %v4084 = vrot.slane %v4076, 1
    %v4085 = vsel %vm1141, %v4083, %v4084
    %v4086 = vrot.slane %v4077, 1
    %v4087 = vsel %vm1141, %v4084, %v4086
    %v4088 = vrot.slane %v4078, 1
    %v4089 = vsel %vm1141, %v4086, %v4088
    %v4093 = vadd.f32 %v3810, %v4085
    %v4094 = vadd.f32 %v3811, %v4087
    %v4095 = vadd.f32 %v3812, %v4089
    %s4096 = sld [smem:[#allocation2 + $0x8c]]
    %v4097 = vstv %s4096
    %v4098 = vmul.f32 %v4097, %v413
    %v4099 = vmul.f32 %v4097, %v418
    %v4100 = vmul.f32 %v4097, %v423
    %v4101 = vmul.f32 %v4097, %v428
    %v4106 = vrot.slane %v4098, 1
    %v4107 = vrot.slane %v4099, 1
    %v4108 = vsel %vm1141, %v4106, %v4107
    %v4109 = vrot.slane %v4100, 1
    %v4110 = vsel %vm1141, %v4107, %v4109
    %v4111 = vrot.slane %v4101, 1
    %v4112 = vsel %vm1141, %v4109, %v4111
    %v4116 = vadd.f32 %v3830, %v4108
    %v4117 = vadd.f32 %v3831, %v4110
    %v4118 = vadd.f32 %v3832, %v4112
    %s4119 = sld [smem:[#allocation2 + $0x95]]
    %v4120 = vstv %s4119
    %v4121 = vmul.f32 %v4120, %v413
    %v4122 = vmul.f32 %v4120, %v418
    %v4123 = vmul.f32 %v4120, %v423
    %v4124 = vmul.f32 %v4120, %v428
    %v4129 = vrot.slane %v4121, 1
    %v4130 = vrot.slane %v4122, 1
    %v4131 = vsel %vm1141, %v4129, %v4130
    %v4132 = vrot.slane %v4123, 1
    %v4133 = vsel %vm1141, %v4130, %v4132
    %v4134 = vrot.slane %v4124, 1
    %v4135 = vsel %vm1141, %v4132, %v4134
    %v4139 = vadd.f32 %v3850, %v4131
    %v4140 = vadd.f32 %v3851, %v4133
    %v4141 = vadd.f32 %v3852, %v4135
    %s4142 = sld [smem:[#allocation2 + $0x9e]]
    %v4143 = vstv %s4142
    %v4144 = vmul.f32 %v4143, %v413
    %v4145 = vmul.f32 %v4143, %v418
    %v4146 = vmul.f32 %v4143, %v423
    %v4147 = vmul.f32 %v4143, %v428
    %v4152 = vrot.slane %v4144, 1
    %v4153 = vrot.slane %v4145, 1
    %v4154 = vsel %vm1141, %v4152, %v4153
    %v4155 = vrot.slane %v4146, 1
    %v4156 = vsel %vm1141, %v4153, %v4155
    %v4157 = vrot.slane %v4147, 1
    %v4158 = vsel %vm1141, %v4155, %v4157
    %v4162 = vadd.f32 %v3870, %v4154
    %v4163 = vadd.f32 %v3871, %v4156
    %v4164 = vadd.f32 %v3872, %v4158
    %s4165 = sld [smem:[#allocation2 + $0xa7]]
    %v4166 = vstv %s4165
    %v4167 = vmul.f32 %v4166, %v413
    %v4168 = vmul.f32 %v4166, %v418
    %v4169 = vmul.f32 %v4166, %v423
    %v4170 = vmul.f32 %v4166, %v428
    %v4175 = vrot.slane %v4167, 1
    %v4176 = vrot.slane %v4168, 1
    %v4177 = vsel %vm1141, %v4175, %v4176
    %v4178 = vrot.slane %v4169, 1
    %v4179 = vsel %vm1141, %v4176, %v4178
    %v4180 = vrot.slane %v4170, 1
    %v4181 = vsel %vm1141, %v4178, %v4180
    %v4185 = vadd.f32 %v3890, %v4177
    %v4186 = vadd.f32 %v3891, %v4179
    %v4187 = vadd.f32 %v3892, %v4181
    %s4188 = sld [smem:[#allocation2 + $0xb0]]
    %v4189 = vstv %s4188
    %v4190 = vmul.f32 %v4189, %v413
    %v4191 = vmul.f32 %v4189, %v418
    %v4192 = vmul.f32 %v4189, %v423
    %v4193 = vmul.f32 %v4189, %v428
    %v4198 = vrot.slane %v4190, 1
    %v4199 = vrot.slane %v4191, 1
    %v4200 = vsel %vm1141, %v4198, %v4199
    %v4201 = vrot.slane %v4192, 1
    %v4202 = vsel %vm1141, %v4199, %v4201
    %v4203 = vrot.slane %v4193, 1
    %v4204 = vsel %vm1141, %v4201, %v4203
    %v4208 = vadd.f32 %v3910, %v4200
    %v4209 = vadd.f32 %v3911, %v4202
    %v4210 = vadd.f32 %v3912, %v4204
    %s4211 = sld [smem:[#allocation2 + $0xb9]]
    %v4212 = vstv %s4211
    %v4213 = vmul.f32 %v4212, %v413
    %v4214 = vmul.f32 %v4212, %v418
    %v4215 = vmul.f32 %v4212, %v423
    %v4216 = vmul.f32 %v4212, %v428
    %v4221 = vrot.slane %v4213, 1
    %v4222 = vrot.slane %v4214, 1
    %v4223 = vsel %vm1141, %v4221, %v4222
    %v4224 = vrot.slane %v4215, 1
    %v4225 = vsel %vm1141, %v4222, %v4224
    %v4226 = vrot.slane %v4216, 1
    %v4227 = vsel %vm1141, %v4224, %v4226
    %v4231 = vadd.f32 %v3930, %v4223
    %v4232 = vadd.f32 %v3931, %v4225
    %v4233 = vadd.f32 %v3932, %v4227
    %s4234 = sld [smem:[#allocation2 + $0xc2]]
    %v4235 = vstv %s4234
    %v4236 = vmul.f32 %v4235, %v413
    %v4237 = vmul.f32 %v4235, %v418
    %v4238 = vmul.f32 %v4235, %v423
    %v4239 = vmul.f32 %v4235, %v428
    %v4244 = vrot.slane %v4236, 1
    %v4245 = vrot.slane %v4237, 1
    %v4246 = vsel %vm1141, %v4244, %v4245
    %v4247 = vrot.slane %v4238, 1
    %v4248 = vsel %vm1141, %v4245, %v4247
    %v4249 = vrot.slane %v4239, 1
    %v4250 = vsel %vm1141, %v4247, %v4249
    %v4254 = vadd.f32 %v3950, %v4246
    %v4255 = vadd.f32 %v3951, %v4248
    %v4256 = vadd.f32 %v3952, %v4250
    %s4257 = sld [smem:[#allocation2 + $0xcb]]
    %v4258 = vstv %s4257
    %v4259 = vmul.f32 %v4258, %v413
    %v4260 = vmul.f32 %v4258, %v418
    %v4261 = vmul.f32 %v4258, %v423
    %v4262 = vmul.f32 %v4258, %v428
    %v4267 = vrot.slane %v4259, 1
    %v4268 = vrot.slane %v4260, 1
    %v4269 = vsel %vm1141, %v4267, %v4268
    %v4270 = vrot.slane %v4261, 1
    %v4271 = vsel %vm1141, %v4268, %v4270
    %v4272 = vrot.slane %v4262, 1
    %v4273 = vsel %vm1141, %v4270, %v4272
    %v4277 = vadd.f32 %v3970, %v4269
    %v4278 = vadd.f32 %v3971, %v4271
    %v4279 = vadd.f32 %v3972, %v4273
    %s4280 = sld [smem:[#allocation2 + $0xd4]]
    %v4281 = vstv %s4280
    %v4282 = vmul.f32 %v4281, %v413
    %v4283 = vmul.f32 %v4281, %v418
    %v4284 = vmul.f32 %v4281, %v423
    %v4285 = vmul.f32 %v4281, %v428
    %v4290 = vrot.slane %v4282, 1
    %v4291 = vrot.slane %v4283, 1
    %v4292 = vsel %vm1141, %v4290, %v4291
    %v4293 = vrot.slane %v4284, 1
    %v4294 = vsel %vm1141, %v4291, %v4293
    %v4295 = vrot.slane %v4285, 1
    %v4296 = vsel %vm1141, %v4293, %v4295
    %v4300 = vadd.f32 %v3990, %v4292
    %v4301 = vadd.f32 %v3991, %v4294
    %v4302 = vadd.f32 %v3992, %v4296
    %s4303 = sld [smem:[#allocation2 + $0xdd]]
    %v4304 = vstv %s4303
    %v4305 = vmul.f32 %v4304, %v413
    %v4306 = vmul.f32 %v4304, %v418
    %v4307 = vmul.f32 %v4304, %v423
    %v4308 = vmul.f32 %v4304, %v428
    %v4313 = vrot.slane %v4305, 1
    %v4314 = vrot.slane %v4306, 1
    %v4315 = vsel %vm1141, %v4313, %v4314
    %v4316 = vrot.slane %v4307, 1
    %v4317 = vsel %vm1141, %v4314, %v4316
    %v4318 = vrot.slane %v4308, 1
    %v4319 = vsel %vm1141, %v4316, %v4318
    %v4323 = vadd.f32 %v4010, %v4315
    %v4324 = vadd.f32 %v4011, %v4317
    %v4325 = vadd.f32 %v4012, %v4319
    %s4326 = sld [smem:[#allocation2 + $0xe6]]
    %v4327 = vstv %s4326
    %v4328 = vmul.f32 %v4327, %v413
    %v4329 = vmul.f32 %v4327, %v418
    %v4330 = vmul.f32 %v4327, %v423
    %v4331 = vmul.f32 %v4327, %v428
    %v4336 = vrot.slane %v4328, 1
    %v4337 = vrot.slane %v4329, 1
    %v4338 = vsel %vm1141, %v4336, %v4337
    %v4339 = vrot.slane %v4330, 1
    %v4340 = vsel %vm1141, %v4337, %v4339
    %v4341 = vrot.slane %v4331, 1
    %v4342 = vsel %vm1141, %v4339, %v4341
    %v4346 = vadd.f32 %v4030, %v4338
    %v4347 = vadd.f32 %v4031, %v4340
    %v4348 = vadd.f32 %v4032, %v4342
    %s4349 = sld [smem:[#allocation2 + $0xef]]
    %v4350 = vstv %s4349
    %v4351 = vmul.f32 %v4350, %v413
    %v4352 = vmul.f32 %v4350, %v418
    %v4353 = vmul.f32 %v4350, %v423
    %v4354 = vmul.f32 %v4350, %v428
    %v4359 = vrot.slane %v4351, 1
    %v4360 = vrot.slane %v4352, 1
    %v4361 = vsel %vm1141, %v4359, %v4360
    %v4362 = vrot.slane %v4353, 1
    %v4363 = vsel %vm1141, %v4360, %v4362
    %v4364 = vrot.slane %v4354, 1
    %v4365 = vsel %vm1141, %v4362, %v4364
    %v4369 = vadd.f32 %v4050, %v4361
    %v4370 = vadd.f32 %v4051, %v4363
    %v4371 = vadd.f32 %v4052, %v4365
    %s4372 = sld [smem:[#allocation2 + $0xf8]]
    %v4373 = vstv %s4372
    %v4374 = vmul.f32 %v4373, %v413
    %v4375 = vmul.f32 %v4373, %v418
    %v4376 = vmul.f32 %v4373, %v423
    %v4377 = vmul.f32 %v4373, %v428
    %v4382 = vrot.slane %v4374, 1
    %v4383 = vrot.slane %v4375, 1
    %v4384 = vsel %vm1141, %v4382, %v4383
    %v4385 = vrot.slane %v4376, 1
    %v4386 = vsel %vm1141, %v4383, %v4385
    %v4387 = vrot.slane %v4377, 1
    %v4388 = vsel %vm1141, %v4385, %v4387
    %v4392 = vadd.f32 %v4070, %v4384
    %v4393 = vadd.f32 %v4071, %v4386
    %v4394 = vadd.f32 %v4072, %v4388
    %s4395 = sld [smem:[#allocation2 + $0x82]]
    %v4396 = vstv %s4395
    %v4397 = vmul.f32 %v4396, %v413
    %v4398 = vmul.f32 %v4396, %v418
    %v4399 = vmul.f32 %v4396, %v423
    %v4400 = vmul.f32 %v4396, %v428
    %v4405 = vrot.slane %v4397, 1
    %v4406 = vrot.slane %v4398, 1
    %v4407 = vsel %vm1141, %v4405, %v4406
    %v4408 = vrot.slane %v4399, 1
    %v4409 = vsel %vm1141, %v4406, %v4408
    %v4410 = vrot.slane %v4400, 1
    %v4411 = vsel %vm1141, %v4408, %v4410
    %4412 = vrot.lane.b32.xlu0 %v4407, 127
    %v4413 = vpop.permute.xlu0 %4412
    %4414 = vrot.lane.b32.xlu0 %v4409, 127
    %v4415 = vpop.permute.xlu0 %4414
    %4416 = vrot.lane.b32.xlu0 %v4411, 127
    %v4417 = vpop.permute.xlu0 %4416
    %v4421 = vadd.f32 %v4093, %v4413
    %v4422 = vadd.f32 %v4094, %v4415
    %v4423 = vadd.f32 %v4095, %v4417
    %s4424 = sld [smem:[#allocation2 + $0x8b]]
    %v4425 = vstv %s4424
    %v4426 = vmul.f32 %v4425, %v413
    %v4427 = vmul.f32 %v4425, %v418
    %v4428 = vmul.f32 %v4425, %v423
    %v4429 = vmul.f32 %v4425, %v428
    %v4434 = vrot.slane %v4426, 1
    %v4435 = vrot.slane %v4427, 1
    %v4436 = vsel %vm1141, %v4434, %v4435
    %v4437 = vrot.slane %v4428, 1
    %v4438 = vsel %vm1141, %v4435, %v4437
    %v4439 = vrot.slane %v4429, 1
    %v4440 = vsel %vm1141, %v4437, %v4439
    %4441 = vrot.lane.b32.xlu0 %v4436, 127
    %v4442 = vpop.permute.xlu0 %4441
    %4443 = vrot.lane.b32.xlu0 %v4438, 127
    %v4444 = vpop.permute.xlu0 %4443
    %4445 = vrot.lane.b32.xlu0 %v4440, 127
    %v4446 = vpop.permute.xlu0 %4445
    %v4450 = vadd.f32 %v4116, %v4442
    %v4451 = vadd.f32 %v4117, %v4444
    %v4452 = vadd.f32 %v4118, %v4446
    %s4453 = sld [smem:[#allocation2 + $0x94]]
    %v4454 = vstv %s4453
    %v4455 = vmul.f32 %v4454, %v413
    %v4456 = vmul.f32 %v4454, %v418
    %v4457 = vmul.f32 %v4454, %v423
    %v4458 = vmul.f32 %v4454, %v428
    %v4463 = vrot.slane %v4455, 1
    %v4464 = vrot.slane %v4456, 1
    %v4465 = vsel %vm1141, %v4463, %v4464
    %v4466 = vrot.slane %v4457, 1
    %v4467 = vsel %vm1141, %v4464, %v4466
    %v4468 = vrot.slane %v4458, 1
    %v4469 = vsel %vm1141, %v4466, %v4468
    %4470 = vrot.lane.b32.xlu0 %v4465, 127
    %v4471 = vpop.permute.xlu0 %4470
    %4472 = vrot.lane.b32.xlu0 %v4467, 127
    %v4473 = vpop.permute.xlu0 %4472
    %4474 = vrot.lane.b32.xlu0 %v4469, 127
    %v4475 = vpop.permute.xlu0 %4474
    %v4479 = vadd.f32 %v4139, %v4471
    %v4480 = vadd.f32 %v4140, %v4473
    %v4481 = vadd.f32 %v4141, %v4475
    %s4482 = sld [smem:[#allocation2 + $0x9d]]
    %v4483 = vstv %s4482
    %v4484 = vmul.f32 %v4483, %v413
    %v4485 = vmul.f32 %v4483, %v418
    %v4486 = vmul.f32 %v4483, %v423
    %v4487 = vmul.f32 %v4483, %v428
    %v4492 = vrot.slane %v4484, 1
    %v4493 = vrot.slane %v4485, 1
    %v4494 = vsel %vm1141, %v4492, %v4493
    %v4495 = vrot.slane %v4486, 1
    %v4496 = vsel %vm1141, %v4493, %v4495
    %v4497 = vrot.slane %v4487, 1
    %v4498 = vsel %vm1141, %v4495, %v4497
    %4499 = vrot.lane.b32.xlu0 %v4494, 127
    %v4500 = vpop.permute.xlu0 %4499
    %4501 = vrot.lane.b32.xlu0 %v4496, 127
    %v4502 = vpop.permute.xlu0 %4501
    %4503 = vrot.lane.b32.xlu0 %v4498, 127
    %v4504 = vpop.permute.xlu0 %4503
    %v4508 = vadd.f32 %v4162, %v4500
    %v4509 = vadd.f32 %v4163, %v4502
    %v4510 = vadd.f32 %v4164, %v4504
    %s4511 = sld [smem:[#allocation2 + $0xa6]]
    %v4512 = vstv %s4511
    %v4513 = vmul.f32 %v4512, %v413
    %v4514 = vmul.f32 %v4512, %v418
    %v4515 = vmul.f32 %v4512, %v423
    %v4516 = vmul.f32 %v4512, %v428
    %v4521 = vrot.slane %v4513, 1
    %v4522 = vrot.slane %v4514, 1
    %v4523 = vsel %vm1141, %v4521, %v4522
    %v4524 = vrot.slane %v4515, 1
    %v4525 = vsel %vm1141, %v4522, %v4524
    %v4526 = vrot.slane %v4516, 1
    %v4527 = vsel %vm1141, %v4524, %v4526
    %4528 = vrot.lane.b32.xlu0 %v4523, 127
    %v4529 = vpop.permute.xlu0 %4528
    %4530 = vrot.lane.b32.xlu0 %v4525, 127
    %v4531 = vpop.permute.xlu0 %4530
    %4532 = vrot.lane.b32.xlu0 %v4527, 127
    %v4533 = vpop.permute.xlu0 %4532
    %v4537 = vadd.f32 %v4185, %v4529
    %v4538 = vadd.f32 %v4186, %v4531
    %v4539 = vadd.f32 %v4187, %v4533
    %s4540 = sld [smem:[#allocation2 + $0xaf]]
    %v4541 = vstv %s4540
    %v4542 = vmul.f32 %v4541, %v413
    %v4543 = vmul.f32 %v4541, %v418
    %v4544 = vmul.f32 %v4541, %v423
    %v4545 = vmul.f32 %v4541, %v428
    %v4550 = vrot.slane %v4542, 1
    %v4551 = vrot.slane %v4543, 1
    %v4552 = vsel %vm1141, %v4550, %v4551
    %v4553 = vrot.slane %v4544, 1
    %v4554 = vsel %vm1141, %v4551, %v4553
    %v4555 = vrot.slane %v4545, 1
    %v4556 = vsel %vm1141, %v4553, %v4555
    %4557 = vrot.lane.b32.xlu0 %v4552, 127
    %v4558 = vpop.permute.xlu0 %4557
    %4559 = vrot.lane.b32.xlu0 %v4554, 127
    %v4560 = vpop.permute.xlu0 %4559
    %4561 = vrot.lane.b32.xlu0 %v4556, 127
    %v4562 = vpop.permute.xlu0 %4561
    %v4566 = vadd.f32 %v4208, %v4558
    %v4567 = vadd.f32 %v4209, %v4560
    %v4568 = vadd.f32 %v4210, %v4562
    %s4569 = sld [smem:[#allocation2 + $0xb8]]
    %v4570 = vstv %s4569
    %v4571 = vmul.f32 %v4570, %v413
    %v4572 = vmul.f32 %v4570, %v418
    %v4573 = vmul.f32 %v4570, %v423
    %v4574 = vmul.f32 %v4570, %v428
    %v4579 = vrot.slane %v4571, 1
    %v4580 = vrot.slane %v4572, 1
    %v4581 = vsel %vm1141, %v4579, %v4580
    %v4582 = vrot.slane %v4573, 1
    %v4583 = vsel %vm1141, %v4580, %v4582
    %v4584 = vrot.slane %v4574, 1
    %v4585 = vsel %vm1141, %v4582, %v4584
    %4586 = vrot.lane.b32.xlu0 %v4581, 127
    %v4587 = vpop.permute.xlu0 %4586
    %4588 = vrot.lane.b32.xlu0 %v4583, 127
    %v4589 = vpop.permute.xlu0 %4588
    %4590 = vrot.lane.b32.xlu0 %v4585, 127
    %v4591 = vpop.permute.xlu0 %4590
    %v4595 = vadd.f32 %v4231, %v4587
    %v4596 = vadd.f32 %v4232, %v4589
    %v4597 = vadd.f32 %v4233, %v4591
    %s4598 = sld [smem:[#allocation2 + $0xc1]]
    %v4599 = vstv %s4598
    %v4600 = vmul.f32 %v4599, %v413
    %v4601 = vmul.f32 %v4599, %v418
    %v4602 = vmul.f32 %v4599, %v423
    %v4603 = vmul.f32 %v4599, %v428
    %v4608 = vrot.slane %v4600, 1
    %v4609 = vrot.slane %v4601, 1
    %v4610 = vsel %vm1141, %v4608, %v4609
    %v4611 = vrot.slane %v4602, 1
    %v4612 = vsel %vm1141, %v4609, %v4611
    %v4613 = vrot.slane %v4603, 1
    %v4614 = vsel %vm1141, %v4611, %v4613
    %4615 = vrot.lane.b32.xlu0 %v4610, 127
    %v4616 = vpop.permute.xlu0 %4615
    %4617 = vrot.lane.b32.xlu0 %v4612, 127
    %v4618 = vpop.permute.xlu0 %4617
    %4619 = vrot.lane.b32.xlu0 %v4614, 127
    %v4620 = vpop.permute.xlu0 %4619
    %v4624 = vadd.f32 %v4254, %v4616
    %v4625 = vadd.f32 %v4255, %v4618
    %v4626 = vadd.f32 %v4256, %v4620
    %s4627 = sld [smem:[#allocation2 + $0xca]]
    %v4628 = vstv %s4627
    %v4629 = vmul.f32 %v4628, %v413
    %v4630 = vmul.f32 %v4628, %v418
    %v4631 = vmul.f32 %v4628, %v423
    %v4632 = vmul.f32 %v4628, %v428
    %v4637 = vrot.slane %v4629, 1
    %v4638 = vrot.slane %v4630, 1
    %v4639 = vsel %vm1141, %v4637, %v4638
    %v4640 = vrot.slane %v4631, 1
    %v4641 = vsel %vm1141, %v4638, %v4640
    %v4642 = vrot.slane %v4632, 1
    %v4643 = vsel %vm1141, %v4640, %v4642
    %4644 = vrot.lane.b32.xlu0 %v4639, 127
    %v4645 = vpop.permute.xlu0 %4644
    %4646 = vrot.lane.b32.xlu0 %v4641, 127
    %v4647 = vpop.permute.xlu0 %4646
    %4648 = vrot.lane.b32.xlu0 %v4643, 127
    %v4649 = vpop.permute.xlu0 %4648
    %v4653 = vadd.f32 %v4277, %v4645
    %v4654 = vadd.f32 %v4278, %v4647
    %v4655 = vadd.f32 %v4279, %v4649
    %s4656 = sld [smem:[#allocation2 + $0xd3]]
    %v4657 = vstv %s4656
    %v4658 = vmul.f32 %v4657, %v413
    %v4659 = vmul.f32 %v4657, %v418
    %v4660 = vmul.f32 %v4657, %v423
    %v4661 = vmul.f32 %v4657, %v428
    %v4666 = vrot.slane %v4658, 1
    %v4667 = vrot.slane %v4659, 1
    %v4668 = vsel %vm1141, %v4666, %v4667
    %v4669 = vrot.slane %v4660, 1
    %v4670 = vsel %vm1141, %v4667, %v4669
    %v4671 = vrot.slane %v4661, 1
    %v4672 = vsel %vm1141, %v4669, %v4671
    %4673 = vrot.lane.b32.xlu0 %v4668, 127
    %v4674 = vpop.permute.xlu0 %4673
    %4675 = vrot.lane.b32.xlu0 %v4670, 127
    %v4676 = vpop.permute.xlu0 %4675
    %4677 = vrot.lane.b32.xlu0 %v4672, 127
    %v4678 = vpop.permute.xlu0 %4677
    %v4682 = vadd.f32 %v4300, %v4674
    %v4683 = vadd.f32 %v4301, %v4676
    %v4684 = vadd.f32 %v4302, %v4678
    %s4685 = sld [smem:[#allocation2 + $0xdc]]
    %v4686 = vstv %s4685
    %v4687 = vmul.f32 %v4686, %v413
    %v4688 = vmul.f32 %v4686, %v418
    %v4689 = vmul.f32 %v4686, %v423
    %v4690 = vmul.f32 %v4686, %v428
    %v4695 = vrot.slane %v4687, 1
    %v4696 = vrot.slane %v4688, 1
    %v4697 = vsel %vm1141, %v4695, %v4696
    %v4698 = vrot.slane %v4689, 1
    %v4699 = vsel %vm1141, %v4696, %v4698
    %v4700 = vrot.slane %v4690, 1
    %v4701 = vsel %vm1141, %v4698, %v4700
    %4702 = vrot.lane.b32.xlu0 %v4697, 127
    %v4703 = vpop.permute.xlu0 %4702
    %4704 = vrot.lane.b32.xlu0 %v4699, 127
    %v4705 = vpop.permute.xlu0 %4704
    %4706 = vrot.lane.b32.xlu0 %v4701, 127
    %v4707 = vpop.permute.xlu0 %4706
    %v4711 = vadd.f32 %v4323, %v4703
    %v4712 = vadd.f32 %v4324, %v4705
    %v4713 = vadd.f32 %v4325, %v4707
    %s4714 = sld [smem:[#allocation2 + $0xe5]]
    %v4715 = vstv %s4714
    %v4716 = vmul.f32 %v4715, %v413
    %v4717 = vmul.f32 %v4715, %v418
    %v4718 = vmul.f32 %v4715, %v423
    %v4719 = vmul.f32 %v4715, %v428
    %v4724 = vrot.slane %v4716, 1
    %v4725 = vrot.slane %v4717, 1
    %v4726 = vsel %vm1141, %v4724, %v4725
    %v4727 = vrot.slane %v4718, 1
    %v4728 = vsel %vm1141, %v4725, %v4727
    %v4729 = vrot.slane %v4719, 1
    %v4730 = vsel %vm1141, %v4727, %v4729
    %4731 = vrot.lane.b32.xlu0 %v4726, 127
    %v4732 = vpop.permute.xlu0 %4731
    %4733 = vrot.lane.b32.xlu0 %v4728, 127
    %v4734 = vpop.permute.xlu0 %4733
    %4735 = vrot.lane.b32.xlu0 %v4730, 127
    %v4736 = vpop.permute.xlu0 %4735
    %v4740 = vadd.f32 %v4346, %v4732
    %v4741 = vadd.f32 %v4347, %v4734
    %v4742 = vadd.f32 %v4348, %v4736
    %s4743 = sld [smem:[#allocation2 + $0xee]]
    %v4744 = vstv %s4743
    %v4745 = vmul.f32 %v4744, %v413
    %v4746 = vmul.f32 %v4744, %v418
    %v4747 = vmul.f32 %v4744, %v423
    %v4748 = vmul.f32 %v4744, %v428
    %v4753 = vrot.slane %v4745, 1
    %v4754 = vrot.slane %v4746, 1
    %v4755 = vsel %vm1141, %v4753, %v4754
    %v4756 = vrot.slane %v4747, 1
    %v4757 = vsel %vm1141, %v4754, %v4756
    %v4758 = vrot.slane %v4748, 1
    %v4759 = vsel %vm1141, %v4756, %v4758
    %4760 = vrot.lane.b32.xlu0 %v4755, 127
    %v4761 = vpop.permute.xlu0 %4760
    %4762 = vrot.lane.b32.xlu0 %v4757, 127
    %v4763 = vpop.permute.xlu0 %4762
    %4764 = vrot.lane.b32.xlu0 %v4759, 127
    %v4765 = vpop.permute.xlu0 %4764
    %v4769 = vadd.f32 %v4369, %v4761
    %v4770 = vadd.f32 %v4370, %v4763
    %v4771 = vadd.f32 %v4371, %v4765
    %s4772 = sld [smem:[#allocation2 + $0xf7]]
    %v4773 = vstv %s4772
    %v4774 = vmul.f32 %v4773, %v413
    %v4775 = vmul.f32 %v4773, %v418
    %v4776 = vmul.f32 %v4773, %v423
    %v4777 = vmul.f32 %v4773, %v428
    %v4782 = vrot.slane %v4774, 1
    %v4783 = vrot.slane %v4775, 1
    %v4784 = vsel %vm1141, %v4782, %v4783
    %v4785 = vrot.slane %v4776, 1
    %v4786 = vsel %vm1141, %v4783, %v4785
    %v4787 = vrot.slane %v4777, 1
    %v4788 = vsel %vm1141, %v4785, %v4787
    %4789 = vrot.lane.b32.xlu0 %v4784, 127
    %v4790 = vpop.permute.xlu0 %4789
    %4791 = vrot.lane.b32.xlu0 %v4786, 127
    %v4792 = vpop.permute.xlu0 %4791
    %4793 = vrot.lane.b32.xlu0 %v4788, 127
    %v4794 = vpop.permute.xlu0 %4793
    %v4798 = vadd.f32 %v4392, %v4790
    %v4799 = vadd.f32 %v4393, %v4792
    %v4800 = vadd.f32 %v4394, %v4794
    %s4801 = sld [smem:[#allocation2 + $0x81]]
    %v4802 = vstv %s4801
    %v4803 = vmul.f32 %v4802, %v413
    %v4804 = vmul.f32 %v4802, %v418
    %v4805 = vmul.f32 %v4802, %v423
    %v4806 = vmul.f32 %v4802, %v428
    %v4811 = vrot.slane %v4803, 1
    %v4812 = vrot.slane %v4804, 1
    %v4813 = vsel %vm1141, %v4811, %v4812
    %v4814 = vrot.slane %v4805, 1
    %v4815 = vsel %vm1141, %v4812, %v4814
    %v4816 = vrot.slane %v4806, 1
    %v4817 = vsel %vm1141, %v4814, %v4816
    %4818 = vrot.lane.b32.xlu0 %v4813, 126
    %v4819 = vpop.permute.xlu0 %4818
    %4820 = vrot.lane.b32.xlu0 %v4815, 126
    %v4821 = vpop.permute.xlu0 %4820
    %4822 = vrot.lane.b32.xlu0 %v4817, 126
    %v4823 = vpop.permute.xlu0 %4822
    %v4827 = vadd.f32 %v4421, %v4819
    %v4828 = vadd.f32 %v4422, %v4821
    %v4829 = vadd.f32 %v4423, %v4823
    %s4830 = sld [smem:[#allocation2 + $0x8a]]
    %v4831 = vstv %s4830
    %v4832 = vmul.f32 %v4831, %v413
    %v4833 = vmul.f32 %v4831, %v418
    %v4834 = vmul.f32 %v4831, %v423
    %v4835 = vmul.f32 %v4831, %v428
    %v4840 = vrot.slane %v4832, 1
    %v4841 = vrot.slane %v4833, 1
    %v4842 = vsel %vm1141, %v4840, %v4841
    %v4843 = vrot.slane %v4834, 1
    %v4844 = vsel %vm1141, %v4841, %v4843
    %v4845 = vrot.slane %v4835, 1
    %v4846 = vsel %vm1141, %v4843, %v4845
    %4847 = vrot.lane.b32.xlu0 %v4842, 126
    %v4848 = vpop.permute.xlu0 %4847
    %4849 = vrot.lane.b32.xlu0 %v4844, 126
    %v4850 = vpop.permute.xlu0 %4849
    %4851 = vrot.lane.b32.xlu0 %v4846, 126
    %v4852 = vpop.permute.xlu0 %4851
    %v4856 = vadd.f32 %v4450, %v4848
    %v4857 = vadd.f32 %v4451, %v4850
    %v4858 = vadd.f32 %v4452, %v4852
    %s4859 = sld [smem:[#allocation2 + $0x93]]
    %v4860 = vstv %s4859
    %v4861 = vmul.f32 %v4860, %v413
    %v4862 = vmul.f32 %v4860, %v418
    %v4863 = vmul.f32 %v4860, %v423
    %v4864 = vmul.f32 %v4860, %v428
    %v4869 = vrot.slane %v4861, 1
    %v4870 = vrot.slane %v4862, 1
    %v4871 = vsel %vm1141, %v4869, %v4870
    %v4872 = vrot.slane %v4863, 1
    %v4873 = vsel %vm1141, %v4870, %v4872
    %v4874 = vrot.slane %v4864, 1
    %v4875 = vsel %vm1141, %v4872, %v4874
    %4876 = vrot.lane.b32.xlu0 %v4871, 126
    %v4877 = vpop.permute.xlu0 %4876
    %4878 = vrot.lane.b32.xlu0 %v4873, 126
    %v4879 = vpop.permute.xlu0 %4878
    %4880 = vrot.lane.b32.xlu0 %v4875, 126
    %v4881 = vpop.permute.xlu0 %4880
    %v4885 = vadd.f32 %v4479, %v4877
    %v4886 = vadd.f32 %v4480, %v4879
    %v4887 = vadd.f32 %v4481, %v4881
    %s4888 = sld [smem:[#allocation2 + $0x9c]]
    %v4889 = vstv %s4888
    %v4890 = vmul.f32 %v4889, %v413
    %v4891 = vmul.f32 %v4889, %v418
    %v4892 = vmul.f32 %v4889, %v423
    %v4893 = vmul.f32 %v4889, %v428
    %v4898 = vrot.slane %v4890, 1
    %v4899 = vrot.slane %v4891, 1
    %v4900 = vsel %vm1141, %v4898, %v4899
    %v4901 = vrot.slane %v4892, 1
    %v4902 = vsel %vm1141, %v4899, %v4901
    %v4903 = vrot.slane %v4893, 1
    %v4904 = vsel %vm1141, %v4901, %v4903
    %4905 = vrot.lane.b32.xlu0 %v4900, 126
    %v4906 = vpop.permute.xlu0 %4905
    %4907 = vrot.lane.b32.xlu0 %v4902, 126
    %v4908 = vpop.permute.xlu0 %4907
    %4909 = vrot.lane.b32.xlu0 %v4904, 126
    %v4910 = vpop.permute.xlu0 %4909
    %v4914 = vadd.f32 %v4508, %v4906
    %v4915 = vadd.f32 %v4509, %v4908
    %v4916 = vadd.f32 %v4510, %v4910
    %s4917 = sld [smem:[#allocation2 + $0xa5]]
    %v4918 = vstv %s4917
    %v4919 = vmul.f32 %v4918, %v413
    %v4920 = vmul.f32 %v4918, %v418
    %v4921 = vmul.f32 %v4918, %v423
    %v4922 = vmul.f32 %v4918, %v428
    %v4927 = vrot.slane %v4919, 1
    %v4928 = vrot.slane %v4920, 1
    %v4929 = vsel %vm1141, %v4927, %v4928
    %v4930 = vrot.slane %v4921, 1
    %v4931 = vsel %vm1141, %v4928, %v4930
    %v4932 = vrot.slane %v4922, 1
    %v4933 = vsel %vm1141, %v4930, %v4932
    %4934 = vrot.lane.b32.xlu0 %v4929, 126
    %v4935 = vpop.permute.xlu0 %4934
    %4936 = vrot.lane.b32.xlu0 %v4931, 126
    %v4937 = vpop.permute.xlu0 %4936
    %4938 = vrot.lane.b32.xlu0 %v4933, 126
    %v4939 = vpop.permute.xlu0 %4938
    %v4943 = vadd.f32 %v4537, %v4935
    %v4944 = vadd.f32 %v4538, %v4937
    %v4945 = vadd.f32 %v4539, %v4939
    %s4946 = sld [smem:[#allocation2 + $0xae]]
    %v4947 = vstv %s4946
    %v4948 = vmul.f32 %v4947, %v413
    %v4949 = vmul.f32 %v4947, %v418
    %v4950 = vmul.f32 %v4947, %v423
    %v4951 = vmul.f32 %v4947, %v428
    %v4956 = vrot.slane %v4948, 1
    %v4957 = vrot.slane %v4949, 1
    %v4958 = vsel %vm1141, %v4956, %v4957
    %v4959 = vrot.slane %v4950, 1
    %v4960 = vsel %vm1141, %v4957, %v4959
    %v4961 = vrot.slane %v4951, 1
    %v4962 = vsel %vm1141, %v4959, %v4961
    %4963 = vrot.lane.b32.xlu0 %v4958, 126
    %v4964 = vpop.permute.xlu0 %4963
    %4965 = vrot.lane.b32.xlu0 %v4960, 126
    %v4966 = vpop.permute.xlu0 %4965
    %4967 = vrot.lane.b32.xlu0 %v4962, 126
    %v4968 = vpop.permute.xlu0 %4967
    %v4972 = vadd.f32 %v4566, %v4964
    %v4973 = vadd.f32 %v4567, %v4966
    %v4974 = vadd.f32 %v4568, %v4968
    %s4975 = sld [smem:[#allocation2 + $0xb7]]
    %v4976 = vstv %s4975
    %v4977 = vmul.f32 %v4976, %v413
    %v4978 = vmul.f32 %v4976, %v418
    %v4979 = vmul.f32 %v4976, %v423
    %v4980 = vmul.f32 %v4976, %v428
    %v4985 = vrot.slane %v4977, 1
    %v4986 = vrot.slane %v4978, 1
    %v4987 = vsel %vm1141, %v4985, %v4986
    %v4988 = vrot.slane %v4979, 1
    %v4989 = vsel %vm1141, %v4986, %v4988
    %v4990 = vrot.slane %v4980, 1
    %v4991 = vsel %vm1141, %v4988, %v4990
    %4992 = vrot.lane.b32.xlu0 %v4987, 126
    %v4993 = vpop.permute.xlu0 %4992
    %4994 = vrot.lane.b32.xlu0 %v4989, 126
    %v4995 = vpop.permute.xlu0 %4994
    %4996 = vrot.lane.b32.xlu0 %v4991, 126
    %v4997 = vpop.permute.xlu0 %4996
    %v5001 = vadd.f32 %v4595, %v4993
    %v5002 = vadd.f32 %v4596, %v4995
    %v5003 = vadd.f32 %v4597, %v4997
    %s5004 = sld [smem:[#allocation2 + $0xc0]]
    %v5005 = vstv %s5004
    %v5006 = vmul.f32 %v5005, %v413
    %v5007 = vmul.f32 %v5005, %v418
    %v5008 = vmul.f32 %v5005, %v423
    %v5009 = vmul.f32 %v5005, %v428
    %v5014 = vrot.slane %v5006, 1
    %v5015 = vrot.slane %v5007, 1
    %v5016 = vsel %vm1141, %v5014, %v5015
    %v5017 = vrot.slane %v5008, 1
    %v5018 = vsel %vm1141, %v5015, %v5017
    %v5019 = vrot.slane %v5009, 1
    %v5020 = vsel %vm1141, %v5017, %v5019
    %5021 = vrot.lane.b32.xlu0 %v5016, 126
    %v5022 = vpop.permute.xlu0 %5021
    %5023 = vrot.lane.b32.xlu0 %v5018, 126
    %v5024 = vpop.permute.xlu0 %5023
    %5025 = vrot.lane.b32.xlu0 %v5020, 126
    %v5026 = vpop.permute.xlu0 %5025
    %v5030 = vadd.f32 %v4624, %v5022
    %v5031 = vadd.f32 %v4625, %v5024
    %v5032 = vadd.f32 %v4626, %v5026
    %s5033 = sld [smem:[#allocation2 + $0xc9]]
    %v5034 = vstv %s5033
    %v5035 = vmul.f32 %v5034, %v413
    %v5036 = vmul.f32 %v5034, %v418
    %v5037 = vmul.f32 %v5034, %v423
    %v5038 = vmul.f32 %v5034, %v428
    %v5043 = vrot.slane %v5035, 1
    %v5044 = vrot.slane %v5036, 1
    %v5045 = vsel %vm1141, %v5043, %v5044
    %v5046 = vrot.slane %v5037, 1
    %v5047 = vsel %vm1141, %v5044, %v5046
    %v5048 = vrot.slane %v5038, 1
    %v5049 = vsel %vm1141, %v5046, %v5048
    %5050 = vrot.lane.b32.xlu0 %v5045, 126
    %v5051 = vpop.permute.xlu0 %5050
    %5052 = vrot.lane.b32.xlu0 %v5047, 126
    %v5053 = vpop.permute.xlu0 %5052
    %5054 = vrot.lane.b32.xlu0 %v5049, 126
    %v5055 = vpop.permute.xlu0 %5054
    %v5059 = vadd.f32 %v4653, %v5051
    %v5060 = vadd.f32 %v4654, %v5053
    %v5061 = vadd.f32 %v4655, %v5055
    %s5062 = sld [smem:[#allocation2 + $0xd2]]
    %v5063 = vstv %s5062
    %v5064 = vmul.f32 %v5063, %v413
    %v5065 = vmul.f32 %v5063, %v418
    %v5066 = vmul.f32 %v5063, %v423
    %v5067 = vmul.f32 %v5063, %v428
    %v5072 = vrot.slane %v5064, 1
    %v5073 = vrot.slane %v5065, 1
    %v5074 = vsel %vm1141, %v5072, %v5073
    %v5075 = vrot.slane %v5066, 1
    %v5076 = vsel %vm1141, %v5073, %v5075
    %v5077 = vrot.slane %v5067, 1
    %v5078 = vsel %vm1141, %v5075, %v5077
    %5079 = vrot.lane.b32.xlu0 %v5074, 126
    %v5080 = vpop.permute.xlu0 %5079
    %5081 = vrot.lane.b32.xlu0 %v5076, 126
    %v5082 = vpop.permute.xlu0 %5081
    %5083 = vrot.lane.b32.xlu0 %v5078, 126
    %v5084 = vpop.permute.xlu0 %5083
    %v5088 = vadd.f32 %v4682, %v5080
    %v5089 = vadd.f32 %v4683, %v5082
    %v5090 = vadd.f32 %v4684, %v5084
    %s5091 = sld [smem:[#allocation2 + $0xdb]]
    %v5092 = vstv %s5091
    %v5093 = vmul.f32 %v5092, %v413
    %v5094 = vmul.f32 %v5092, %v418
    %v5095 = vmul.f32 %v5092, %v423
    %v5096 = vmul.f32 %v5092, %v428
    %v5101 = vrot.slane %v5093, 1
    %v5102 = vrot.slane %v5094, 1
    %v5103 = vsel %vm1141, %v5101, %v5102
    %v5104 = vrot.slane %v5095, 1
    %v5105 = vsel %vm1141, %v5102, %v5104
    %v5106 = vrot.slane %v5096, 1
    %v5107 = vsel %vm1141, %v5104, %v5106
    %5108 = vrot.lane.b32.xlu0 %v5103, 126
    %v5109 = vpop.permute.xlu0 %5108
    %5110 = vrot.lane.b32.xlu0 %v5105, 126
    %v5111 = vpop.permute.xlu0 %5110
    %5112 = vrot.lane.b32.xlu0 %v5107, 126
    %v5113 = vpop.permute.xlu0 %5112
    %v5117 = vadd.f32 %v4711, %v5109
    %v5118 = vadd.f32 %v4712, %v5111
    %v5119 = vadd.f32 %v4713, %v5113
    %s5120 = sld [smem:[#allocation2 + $0xe4]]
    %v5121 = vstv %s5120
    %v5122 = vmul.f32 %v5121, %v413
    %v5123 = vmul.f32 %v5121, %v418
    %v5124 = vmul.f32 %v5121, %v423
    %v5125 = vmul.f32 %v5121, %v428
    %v5130 = vrot.slane %v5122, 1
    %v5131 = vrot.slane %v5123, 1
    %v5132 = vsel %vm1141, %v5130, %v5131
    %v5133 = vrot.slane %v5124, 1
    %v5134 = vsel %vm1141, %v5131, %v5133
    %v5135 = vrot.slane %v5125, 1
    %v5136 = vsel %vm1141, %v5133, %v5135
    %5137 = vrot.lane.b32.xlu0 %v5132, 126
    %v5138 = vpop.permute.xlu0 %5137
    %5139 = vrot.lane.b32.xlu0 %v5134, 126
    %v5140 = vpop.permute.xlu0 %5139
    %5141 = vrot.lane.b32.xlu0 %v5136, 126
    %v5142 = vpop.permute.xlu0 %5141
    %v5146 = vadd.f32 %v4740, %v5138
    %v5147 = vadd.f32 %v4741, %v5140
    %v5148 = vadd.f32 %v4742, %v5142
    %s5149 = sld [smem:[#allocation2 + $0xed]]
    %v5150 = vstv %s5149
    %v5151 = vmul.f32 %v5150, %v413
    %v5152 = vmul.f32 %v5150, %v418
    %v5153 = vmul.f32 %v5150, %v423
    %v5154 = vmul.f32 %v5150, %v428
    %v5159 = vrot.slane %v5151, 1
    %v5160 = vrot.slane %v5152, 1
    %v5161 = vsel %vm1141, %v5159, %v5160
    %v5162 = vrot.slane %v5153, 1
    %v5163 = vsel %vm1141, %v5160, %v5162
    %v5164 = vrot.slane %v5154, 1
    %v5165 = vsel %vm1141, %v5162, %v5164
    %5166 = vrot.lane.b32.xlu0 %v5161, 126
    %v5167 = vpop.permute.xlu0 %5166
    %5168 = vrot.lane.b32.xlu0 %v5163, 126
    %v5169 = vpop.permute.xlu0 %5168
    %5170 = vrot.lane.b32.xlu0 %v5165, 126
    %v5171 = vpop.permute.xlu0 %5170
    %v5175 = vadd.f32 %v4769, %v5167
    %v5176 = vadd.f32 %v4770, %v5169
    %v5177 = vadd.f32 %v4771, %v5171
    %s5178 = sld [smem:[#allocation2 + $0xf6]]
    %v5179 = vstv %s5178
    %v5180 = vmul.f32 %v5179, %v413
    %v5181 = vmul.f32 %v5179, %v418
    %v5182 = vmul.f32 %v5179, %v423
    %v5183 = vmul.f32 %v5179, %v428
    %v5188 = vrot.slane %v5180, 1
    %v5189 = vrot.slane %v5181, 1
    %v5190 = vsel %vm1141, %v5188, %v5189
    %v5191 = vrot.slane %v5182, 1
    %v5192 = vsel %vm1141, %v5189, %v5191
    %v5193 = vrot.slane %v5183, 1
    %v5194 = vsel %vm1141, %v5191, %v5193
    %5195 = vrot.lane.b32.xlu0 %v5190, 126
    %v5196 = vpop.permute.xlu0 %5195
    %5197 = vrot.lane.b32.xlu0 %v5192, 126
    %v5198 = vpop.permute.xlu0 %5197
    %5199 = vrot.lane.b32.xlu0 %v5194, 126
    %v5200 = vpop.permute.xlu0 %5199
    %v5204 = vadd.f32 %v4798, %v5196
    %v5205 = vadd.f32 %v4799, %v5198
    %v5206 = vadd.f32 %v4800, %v5200
    %s5207 = sld [smem:[#allocation2 + $0x80]]
    %v5208 = vstv %s5207
    %v5209 = vmul.f32 %v5208, %v413
    %v5210 = vmul.f32 %v5208, %v418
    %v5211 = vmul.f32 %v5208, %v423
    %v5212 = vmul.f32 %v5208, %v428
    %v5217 = vrot.slane %v5209, 2
    %v5218 = vrot.slane %v5210, 2
    %v5219 = vsel %vm2276, %v5217, %v5218
    %v5220 = vrot.slane %v5211, 2
    %v5221 = vsel %vm2276, %v5218, %v5220
    %v5222 = vrot.slane %v5212, 2
    %v5223 = vsel %vm2276, %v5220, %v5222
    %v5227 = vadd.f32 %v4827, %v5219
    %v5228 = vadd.f32 %v4828, %v5221
    %v5229 = vadd.f32 %v4829, %v5223
    %s5230 = sld [smem:[#allocation2 + $0x89]]
    %v5231 = vstv %s5230
    %v5232 = vmul.f32 %v5231, %v413
    %v5233 = vmul.f32 %v5231, %v418
    %v5234 = vmul.f32 %v5231, %v423
    %v5235 = vmul.f32 %v5231, %v428
    %v5240 = vrot.slane %v5232, 2
    %v5241 = vrot.slane %v5233, 2
    %v5242 = vsel %vm2276, %v5240, %v5241
    %v5243 = vrot.slane %v5234, 2
    %v5244 = vsel %vm2276, %v5241, %v5243
    %v5245 = vrot.slane %v5235, 2
    %v5246 = vsel %vm2276, %v5243, %v5245
    %v5250 = vadd.f32 %v4856, %v5242
    %v5251 = vadd.f32 %v4857, %v5244
    %v5252 = vadd.f32 %v4858, %v5246
    %s5253 = sld [smem:[#allocation2 + $0x92]]
    %v5254 = vstv %s5253
    %v5255 = vmul.f32 %v5254, %v413
    %v5256 = vmul.f32 %v5254, %v418
    %v5257 = vmul.f32 %v5254, %v423
    %v5258 = vmul.f32 %v5254, %v428
    %v5263 = vrot.slane %v5255, 2
    %v5264 = vrot.slane %v5256, 2
    %v5265 = vsel %vm2276, %v5263, %v5264
    %v5266 = vrot.slane %v5257, 2
    %v5267 = vsel %vm2276, %v5264, %v5266
    %v5268 = vrot.slane %v5258, 2
    %v5269 = vsel %vm2276, %v5266, %v5268
    %v5273 = vadd.f32 %v4885, %v5265
    %v5274 = vadd.f32 %v4886, %v5267
    %v5275 = vadd.f32 %v4887, %v5269
    %s5276 = sld [smem:[#allocation2 + $0x9b]]
    %v5277 = vstv %s5276
    %v5278 = vmul.f32 %v5277, %v413
    %v5279 = vmul.f32 %v5277, %v418
    %v5280 = vmul.f32 %v5277, %v423
    %v5281 = vmul.f32 %v5277, %v428
    %v5286 = vrot.slane %v5278, 2
    %v5287 = vrot.slane %v5279, 2
    %v5288 = vsel %vm2276, %v5286, %v5287
    %v5289 = vrot.slane %v5280, 2
    %v5290 = vsel %vm2276, %v5287, %v5289
    %v5291 = vrot.slane %v5281, 2
    %v5292 = vsel %vm2276, %v5289, %v5291
    %v5296 = vadd.f32 %v4914, %v5288
    %v5297 = vadd.f32 %v4915, %v5290
    %v5298 = vadd.f32 %v4916, %v5292
    %s5299 = sld [smem:[#allocation2 + $0xa4]]
    %v5300 = vstv %s5299
    %v5301 = vmul.f32 %v5300, %v413
    %v5302 = vmul.f32 %v5300, %v418
    %v5303 = vmul.f32 %v5300, %v423
    %v5304 = vmul.f32 %v5300, %v428
    %v5309 = vrot.slane %v5301, 2
    %v5310 = vrot.slane %v5302, 2
    %v5311 = vsel %vm2276, %v5309, %v5310
    %v5312 = vrot.slane %v5303, 2
    %v5313 = vsel %vm2276, %v5310, %v5312
    %v5314 = vrot.slane %v5304, 2
    %v5315 = vsel %vm2276, %v5312, %v5314
    %v5319 = vadd.f32 %v4943, %v5311
    %v5320 = vadd.f32 %v4944, %v5313
    %v5321 = vadd.f32 %v4945, %v5315
    %s5322 = sld [smem:[#allocation2 + $0xad]]
    %v5323 = vstv %s5322
    %v5324 = vmul.f32 %v5323, %v413
    %v5325 = vmul.f32 %v5323, %v418
    %v5326 = vmul.f32 %v5323, %v423
    %v5327 = vmul.f32 %v5323, %v428
    %v5332 = vrot.slane %v5324, 2
    %v5333 = vrot.slane %v5325, 2
    %v5334 = vsel %vm2276, %v5332, %v5333
    %v5335 = vrot.slane %v5326, 2
    %v5336 = vsel %vm2276, %v5333, %v5335
    %v5337 = vrot.slane %v5327, 2
    %v5338 = vsel %vm2276, %v5335, %v5337
    %v5342 = vadd.f32 %v4972, %v5334
    %v5343 = vadd.f32 %v4973, %v5336
    %v5344 = vadd.f32 %v4974, %v5338
    %s5345 = sld [smem:[#allocation2 + $0xb6]]
    %v5346 = vstv %s5345
    %v5347 = vmul.f32 %v5346, %v413
    %v5348 = vmul.f32 %v5346, %v418
    %v5349 = vmul.f32 %v5346, %v423
    %v5350 = vmul.f32 %v5346, %v428
    %v5355 = vrot.slane %v5347, 2
    %v5356 = vrot.slane %v5348, 2
    %v5357 = vsel %vm2276, %v5355, %v5356
    %v5358 = vrot.slane %v5349, 2
    %v5359 = vsel %vm2276, %v5356, %v5358
    %v5360 = vrot.slane %v5350, 2
    %v5361 = vsel %vm2276, %v5358, %v5360
    %v5365 = vadd.f32 %v5001, %v5357
    %v5366 = vadd.f32 %v5002, %v5359
    %v5367 = vadd.f32 %v5003, %v5361
    %s5368 = sld [smem:[#allocation2 + $0xbf]]
    %v5369 = vstv %s5368
    %v5370 = vmul.f32 %v5369, %v413
    %v5371 = vmul.f32 %v5369, %v418
    %v5372 = vmul.f32 %v5369, %v423
    %v5373 = vmul.f32 %v5369, %v428
    %v5378 = vrot.slane %v5370, 2
    %v5379 = vrot.slane %v5371, 2
    %v5380 = vsel %vm2276, %v5378, %v5379
    %v5381 = vrot.slane %v5372, 2
    %v5382 = vsel %vm2276, %v5379, %v5381
    %v5383 = vrot.slane %v5373, 2
    %v5384 = vsel %vm2276, %v5381, %v5383
    %v5388 = vadd.f32 %v5030, %v5380
    %v5389 = vadd.f32 %v5031, %v5382
    %v5390 = vadd.f32 %v5032, %v5384
    %s5391 = sld [smem:[#allocation2 + $0xc8]]
    %v5392 = vstv %s5391
    %v5393 = vmul.f32 %v5392, %v413
    %v5394 = vmul.f32 %v5392, %v418
    %v5395 = vmul.f32 %v5392, %v423
    %v5396 = vmul.f32 %v5392, %v428
    %v5401 = vrot.slane %v5393, 2
    %v5402 = vrot.slane %v5394, 2
    %v5403 = vsel %vm2276, %v5401, %v5402
    %v5404 = vrot.slane %v5395, 2
    %v5405 = vsel %vm2276, %v5402, %v5404
    %v5406 = vrot.slane %v5396, 2
    %v5407 = vsel %vm2276, %v5404, %v5406
    %v5411 = vadd.f32 %v5059, %v5403
    %v5412 = vadd.f32 %v5060, %v5405
    %v5413 = vadd.f32 %v5061, %v5407
    %s5414 = sld [smem:[#allocation2 + $0xd1]]
    %v5415 = vstv %s5414
    %v5416 = vmul.f32 %v5415, %v413
    %v5417 = vmul.f32 %v5415, %v418
    %v5418 = vmul.f32 %v5415, %v423
    %v5419 = vmul.f32 %v5415, %v428
    %v5424 = vrot.slane %v5416, 2
    %v5425 = vrot.slane %v5417, 2
    %v5426 = vsel %vm2276, %v5424, %v5425
    %v5427 = vrot.slane %v5418, 2
    %v5428 = vsel %vm2276, %v5425, %v5427
    %v5429 = vrot.slane %v5419, 2
    %v5430 = vsel %vm2276, %v5427, %v5429
    %v5434 = vadd.f32 %v5088, %v5426
    %v5435 = vadd.f32 %v5089, %v5428
    %v5436 = vadd.f32 %v5090, %v5430
    %s5437 = sld [smem:[#allocation2 + $0xda]]
    %v5438 = vstv %s5437
    %v5439 = vmul.f32 %v5438, %v413
    %v5440 = vmul.f32 %v5438, %v418
    %v5441 = vmul.f32 %v5438, %v423
    %v5442 = vmul.f32 %v5438, %v428
    %v5447 = vrot.slane %v5439, 2
    %v5448 = vrot.slane %v5440, 2
    %v5449 = vsel %vm2276, %v5447, %v5448
    %v5450 = vrot.slane %v5441, 2
    %v5451 = vsel %vm2276, %v5448, %v5450
    %v5452 = vrot.slane %v5442, 2
    %v5453 = vsel %vm2276, %v5450, %v5452
    %v5457 = vadd.f32 %v5117, %v5449
    %v5458 = vadd.f32 %v5118, %v5451
    %v5459 = vadd.f32 %v5119, %v5453
    %s5460 = sld [smem:[#allocation2 + $0xe3]]
    %v5461 = vstv %s5460
    %v5462 = vmul.f32 %v5461, %v413
    %v5463 = vmul.f32 %v5461, %v418
    %v5464 = vmul.f32 %v5461, %v423
    %v5465 = vmul.f32 %v5461, %v428
    %v5470 = vrot.slane %v5462, 2
    %v5471 = vrot.slane %v5463, 2
    %v5472 = vsel %vm2276, %v5470, %v5471
    %v5473 = vrot.slane %v5464, 2
    %v5474 = vsel %vm2276, %v5471, %v5473
    %v5475 = vrot.slane %v5465, 2
    %v5476 = vsel %vm2276, %v5473, %v5475
    %v5480 = vadd.f32 %v5146, %v5472
    %v5481 = vadd.f32 %v5147, %v5474
    %v5482 = vadd.f32 %v5148, %v5476
    %s5483 = sld [smem:[#allocation2 + $0xec]]
    %v5484 = vstv %s5483
    %v5485 = vmul.f32 %v5484, %v413
    %v5486 = vmul.f32 %v5484, %v418
    %v5487 = vmul.f32 %v5484, %v423
    %v5488 = vmul.f32 %v5484, %v428
    %v5493 = vrot.slane %v5485, 2
    %v5494 = vrot.slane %v5486, 2
    %v5495 = vsel %vm2276, %v5493, %v5494
    %v5496 = vrot.slane %v5487, 2
    %v5497 = vsel %vm2276, %v5494, %v5496
    %v5498 = vrot.slane %v5488, 2
    %v5499 = vsel %vm2276, %v5496, %v5498
    %v5503 = vadd.f32 %v5175, %v5495
    %v5504 = vadd.f32 %v5176, %v5497
    %v5505 = vadd.f32 %v5177, %v5499
    %s5506 = sld [smem:[#allocation2 + $0xf5]]
    %v5507 = vstv %s5506
    %v5508 = vmul.f32 %v5507, %v413
    %v5509 = vmul.f32 %v5507, %v418
    %v5510 = vmul.f32 %v5507, %v423
    %v5511 = vmul.f32 %v5507, %v428
    %v5516 = vrot.slane %v5508, 2
    %v5517 = vrot.slane %v5509, 2
    %v5518 = vsel %vm2276, %v5516, %v5517
    %v5519 = vrot.slane %v5510, 2
    %v5520 = vsel %vm2276, %v5517, %v5519
    %v5521 = vrot.slane %v5511, 2
    %v5522 = vsel %vm2276, %v5519, %v5521
    %v5526 = vadd.f32 %v5204, %v5518
    %v5527 = vadd.f32 %v5205, %v5520
    %v5528 = vadd.f32 %v5206, %v5522
    %s5529 = sld [smem:[#allocation2 + $0x7f]]
    %v5530 = vstv %s5529
    %v5531 = vmul.f32 %v5530, %v413
    %v5532 = vmul.f32 %v5530, %v418
    %v5533 = vmul.f32 %v5530, %v423
    %v5534 = vmul.f32 %v5530, %v428
    %v5539 = vrot.slane %v5531, 2
    %v5540 = vrot.slane %v5532, 2
    %v5541 = vsel %vm2276, %v5539, %v5540
    %v5542 = vrot.slane %v5533, 2
    %v5543 = vsel %vm2276, %v5540, %v5542
    %v5544 = vrot.slane %v5534, 2
    %v5545 = vsel %vm2276, %v5542, %v5544
    %5546 = vrot.lane.b32.xlu0 %v5541, 127
    %v5547 = vpop.permute.xlu0 %5546
    %5548 = vrot.lane.b32.xlu0 %v5543, 127
    %v5549 = vpop.permute.xlu0 %5548
    %5550 = vrot.lane.b32.xlu0 %v5545, 127
    %v5551 = vpop.permute.xlu0 %5550
    %v5555 = vadd.f32 %v5227, %v5547
    %v5556 = vadd.f32 %v5228, %v5549
    %v5557 = vadd.f32 %v5229, %v5551
    %s5558 = sld [smem:[#allocation2 + $0x88]]
    %v5559 = vstv %s5558
    %v5560 = vmul.f32 %v5559, %v413
    %v5561 = vmul.f32 %v5559, %v418
    %v5562 = vmul.f32 %v5559, %v423
    %v5563 = vmul.f32 %v5559, %v428
    %v5568 = vrot.slane %v5560, 2
    %v5569 = vrot.slane %v5561, 2
    %v5570 = vsel %vm2276, %v5568, %v5569
    %v5571 = vrot.slane %v5562, 2
    %v5572 = vsel %vm2276, %v5569, %v5571
    %v5573 = vrot.slane %v5563, 2
    %v5574 = vsel %vm2276, %v5571, %v5573
    %5575 = vrot.lane.b32.xlu0 %v5570, 127
    %v5576 = vpop.permute.xlu0 %5575
    %5577 = vrot.lane.b32.xlu0 %v5572, 127
    %v5578 = vpop.permute.xlu0 %5577
    %5579 = vrot.lane.b32.xlu0 %v5574, 127
    %v5580 = vpop.permute.xlu0 %5579
    %v5584 = vadd.f32 %v5250, %v5576
    %v5585 = vadd.f32 %v5251, %v5578
    %v5586 = vadd.f32 %v5252, %v5580
    %s5587 = sld [smem:[#allocation2 + $0x91]]
    %v5588 = vstv %s5587
    %v5589 = vmul.f32 %v5588, %v413
    %v5590 = vmul.f32 %v5588, %v418
    %v5591 = vmul.f32 %v5588, %v423
    %v5592 = vmul.f32 %v5588, %v428
    %v5597 = vrot.slane %v5589, 2
    %v5598 = vrot.slane %v5590, 2
    %v5599 = vsel %vm2276, %v5597, %v5598
    %v5600 = vrot.slane %v5591, 2
    %v5601 = vsel %vm2276, %v5598, %v5600
    %v5602 = vrot.slane %v5592, 2
    %v5603 = vsel %vm2276, %v5600, %v5602
    %5604 = vrot.lane.b32.xlu0 %v5599, 127
    %v5605 = vpop.permute.xlu0 %5604
    %5606 = vrot.lane.b32.xlu0 %v5601, 127
    %v5607 = vpop.permute.xlu0 %5606
    %5608 = vrot.lane.b32.xlu0 %v5603, 127
    %v5609 = vpop.permute.xlu0 %5608
    %v5613 = vadd.f32 %v5273, %v5605
    %v5614 = vadd.f32 %v5274, %v5607
    %v5615 = vadd.f32 %v5275, %v5609
    %s5616 = sld [smem:[#allocation2 + $0x9a]]
    %v5617 = vstv %s5616
    %v5618 = vmul.f32 %v5617, %v413
    %v5619 = vmul.f32 %v5617, %v418
    %v5620 = vmul.f32 %v5617, %v423
    %v5621 = vmul.f32 %v5617, %v428
    %v5626 = vrot.slane %v5618, 2
    %v5627 = vrot.slane %v5619, 2
    %v5628 = vsel %vm2276, %v5626, %v5627
    %v5629 = vrot.slane %v5620, 2
    %v5630 = vsel %vm2276, %v5627, %v5629
    %v5631 = vrot.slane %v5621, 2
    %v5632 = vsel %vm2276, %v5629, %v5631
    %5633 = vrot.lane.b32.xlu0 %v5628, 127
    %v5634 = vpop.permute.xlu0 %5633
    %5635 = vrot.lane.b32.xlu0 %v5630, 127
    %v5636 = vpop.permute.xlu0 %5635
    %5637 = vrot.lane.b32.xlu0 %v5632, 127
    %v5638 = vpop.permute.xlu0 %5637
    %v5642 = vadd.f32 %v5296, %v5634
    %v5643 = vadd.f32 %v5297, %v5636
    %v5644 = vadd.f32 %v5298, %v5638
    %s5645 = sld [smem:[#allocation2 + $0xa3]]
    %v5646 = vstv %s5645
    %v5647 = vmul.f32 %v5646, %v413
    %v5648 = vmul.f32 %v5646, %v418
    %v5649 = vmul.f32 %v5646, %v423
    %v5650 = vmul.f32 %v5646, %v428
    %v5655 = vrot.slane %v5647, 2
    %v5656 = vrot.slane %v5648, 2
    %v5657 = vsel %vm2276, %v5655, %v5656
    %v5658 = vrot.slane %v5649, 2
    %v5659 = vsel %vm2276, %v5656, %v5658
    %v5660 = vrot.slane %v5650, 2
    %v5661 = vsel %vm2276, %v5658, %v5660
    %5662 = vrot.lane.b32.xlu0 %v5657, 127
    %v5663 = vpop.permute.xlu0 %5662
    %5664 = vrot.lane.b32.xlu0 %v5659, 127
    %v5665 = vpop.permute.xlu0 %5664
    %5666 = vrot.lane.b32.xlu0 %v5661, 127
    %v5667 = vpop.permute.xlu0 %5666
    %v5671 = vadd.f32 %v5319, %v5663
    %v5672 = vadd.f32 %v5320, %v5665
    %v5673 = vadd.f32 %v5321, %v5667
    %s5674 = sld [smem:[#allocation2 + $0xac]]
    %v5675 = vstv %s5674
    %v5676 = vmul.f32 %v5675, %v413
    %v5677 = vmul.f32 %v5675, %v418
    %v5678 = vmul.f32 %v5675, %v423
    %v5679 = vmul.f32 %v5675, %v428
    %v5684 = vrot.slane %v5676, 2
    %v5685 = vrot.slane %v5677, 2
    %v5686 = vsel %vm2276, %v5684, %v5685
    %v5687 = vrot.slane %v5678, 2
    %v5688 = vsel %vm2276, %v5685, %v5687
    %v5689 = vrot.slane %v5679, 2
    %v5690 = vsel %vm2276, %v5687, %v5689
    %5691 = vrot.lane.b32.xlu0 %v5686, 127
    %v5692 = vpop.permute.xlu0 %5691
    %5693 = vrot.lane.b32.xlu0 %v5688, 127
    %v5694 = vpop.permute.xlu0 %5693
    %5695 = vrot.lane.b32.xlu0 %v5690, 127
    %v5696 = vpop.permute.xlu0 %5695
    %v5700 = vadd.f32 %v5342, %v5692
    %v5701 = vadd.f32 %v5343, %v5694
    %v5702 = vadd.f32 %v5344, %v5696
    %s5703 = sld [smem:[#allocation2 + $0xb5]]
    %v5704 = vstv %s5703
    %v5705 = vmul.f32 %v5704, %v413
    %v5706 = vmul.f32 %v5704, %v418
    %v5707 = vmul.f32 %v5704, %v423
    %v5708 = vmul.f32 %v5704, %v428
    %v5713 = vrot.slane %v5705, 2
    %v5714 = vrot.slane %v5706, 2
    %v5715 = vsel %vm2276, %v5713, %v5714
    %v5716 = vrot.slane %v5707, 2
    %v5717 = vsel %vm2276, %v5714, %v5716
    %v5718 = vrot.slane %v5708, 2
    %v5719 = vsel %vm2276, %v5716, %v5718
    %5720 = vrot.lane.b32.xlu0 %v5715, 127
    %v5721 = vpop.permute.xlu0 %5720
    %5722 = vrot.lane.b32.xlu0 %v5717, 127
    %v5723 = vpop.permute.xlu0 %5722
    %5724 = vrot.lane.b32.xlu0 %v5719, 127
    %v5725 = vpop.permute.xlu0 %5724
    %v5729 = vadd.f32 %v5365, %v5721
    %v5730 = vadd.f32 %v5366, %v5723
    %v5731 = vadd.f32 %v5367, %v5725
    %s5732 = sld [smem:[#allocation2 + $0xbe]]
    %v5733 = vstv %s5732
    %v5734 = vmul.f32 %v5733, %v413
    %v5735 = vmul.f32 %v5733, %v418
    %v5736 = vmul.f32 %v5733, %v423
    %v5737 = vmul.f32 %v5733, %v428
    %v5742 = vrot.slane %v5734, 2
    %v5743 = vrot.slane %v5735, 2
    %v5744 = vsel %vm2276, %v5742, %v5743
    %v5745 = vrot.slane %v5736, 2
    %v5746 = vsel %vm2276, %v5743, %v5745
    %v5747 = vrot.slane %v5737, 2
    %v5748 = vsel %vm2276, %v5745, %v5747
    %5749 = vrot.lane.b32.xlu0 %v5744, 127
    %v5750 = vpop.permute.xlu0 %5749
    %5751 = vrot.lane.b32.xlu0 %v5746, 127
    %v5752 = vpop.permute.xlu0 %5751
    %5753 = vrot.lane.b32.xlu0 %v5748, 127
    %v5754 = vpop.permute.xlu0 %5753
    %v5758 = vadd.f32 %v5388, %v5750
    %v5759 = vadd.f32 %v5389, %v5752
    %v5760 = vadd.f32 %v5390, %v5754
    %s5761 = sld [smem:[#allocation2 + $0xc7]]
    %v5762 = vstv %s5761
    %v5763 = vmul.f32 %v5762, %v413
    %v5764 = vmul.f32 %v5762, %v418
    %v5765 = vmul.f32 %v5762, %v423
    %v5766 = vmul.f32 %v5762, %v428
    %v5771 = vrot.slane %v5763, 2
    %v5772 = vrot.slane %v5764, 2
    %v5773 = vsel %vm2276, %v5771, %v5772
    %v5774 = vrot.slane %v5765, 2
    %v5775 = vsel %vm2276, %v5772, %v5774
    %v5776 = vrot.slane %v5766, 2
    %v5777 = vsel %vm2276, %v5774, %v5776
    %5778 = vrot.lane.b32.xlu0 %v5773, 127
    %v5779 = vpop.permute.xlu0 %5778
    %5780 = vrot.lane.b32.xlu0 %v5775, 127
    %v5781 = vpop.permute.xlu0 %5780
    %5782 = vrot.lane.b32.xlu0 %v5777, 127
    %v5783 = vpop.permute.xlu0 %5782
    %v5787 = vadd.f32 %v5411, %v5779
    %v5788 = vadd.f32 %v5412, %v5781
    %v5789 = vadd.f32 %v5413, %v5783
    %s5790 = sld [smem:[#allocation2 + $0xd0]]
    %v5791 = vstv %s5790
    %v5792 = vmul.f32 %v5791, %v413
    %v5793 = vmul.f32 %v5791, %v418
    %v5794 = vmul.f32 %v5791, %v423
    %v5795 = vmul.f32 %v5791, %v428
    %v5800 = vrot.slane %v5792, 2
    %v5801 = vrot.slane %v5793, 2
    %v5802 = vsel %vm2276, %v5800, %v5801
    %v5803 = vrot.slane %v5794, 2
    %v5804 = vsel %vm2276, %v5801, %v5803
    %v5805 = vrot.slane %v5795, 2
    %v5806 = vsel %vm2276, %v5803, %v5805
    %5807 = vrot.lane.b32.xlu0 %v5802, 127
    %v5808 = vpop.permute.xlu0 %5807
    %5809 = vrot.lane.b32.xlu0 %v5804, 127
    %v5810 = vpop.permute.xlu0 %5809
    %5811 = vrot.lane.b32.xlu0 %v5806, 127
    %v5812 = vpop.permute.xlu0 %5811
    %v5816 = vadd.f32 %v5434, %v5808
    %v5817 = vadd.f32 %v5435, %v5810
    %v5818 = vadd.f32 %v5436, %v5812
    %s5819 = sld [smem:[#allocation2 + $0xd9]]
    %v5820 = vstv %s5819
    %v5821 = vmul.f32 %v5820, %v413
    %v5822 = vmul.f32 %v5820, %v418
    %v5823 = vmul.f32 %v5820, %v423
    %v5824 = vmul.f32 %v5820, %v428
    %v5829 = vrot.slane %v5821, 2
    %v5830 = vrot.slane %v5822, 2
    %v5831 = vsel %vm2276, %v5829, %v5830
    %v5832 = vrot.slane %v5823, 2
    %v5833 = vsel %vm2276, %v5830, %v5832
    %v5834 = vrot.slane %v5824, 2
    %v5835 = vsel %vm2276, %v5832, %v5834
    %5836 = vrot.lane.b32.xlu0 %v5831, 127
    %v5837 = vpop.permute.xlu0 %5836
    %5838 = vrot.lane.b32.xlu0 %v5833, 127
    %v5839 = vpop.permute.xlu0 %5838
    %5840 = vrot.lane.b32.xlu0 %v5835, 127
    %v5841 = vpop.permute.xlu0 %5840
    %v5845 = vadd.f32 %v5457, %v5837
    %v5846 = vadd.f32 %v5458, %v5839
    %v5847 = vadd.f32 %v5459, %v5841
    %s5848 = sld [smem:[#allocation2 + $0xe2]]
    %v5849 = vstv %s5848
    %v5850 = vmul.f32 %v5849, %v413
    %v5851 = vmul.f32 %v5849, %v418
    %v5852 = vmul.f32 %v5849, %v423
    %v5853 = vmul.f32 %v5849, %v428
    %v5858 = vrot.slane %v5850, 2
    %v5859 = vrot.slane %v5851, 2
    %v5860 = vsel %vm2276, %v5858, %v5859
    %v5861 = vrot.slane %v5852, 2
    %v5862 = vsel %vm2276, %v5859, %v5861
    %v5863 = vrot.slane %v5853, 2
    %v5864 = vsel %vm2276, %v5861, %v5863
    %5865 = vrot.lane.b32.xlu0 %v5860, 127
    %v5866 = vpop.permute.xlu0 %5865
    %5867 = vrot.lane.b32.xlu0 %v5862, 127
    %v5868 = vpop.permute.xlu0 %5867
    %5869 = vrot.lane.b32.xlu0 %v5864, 127
    %v5870 = vpop.permute.xlu0 %5869
    %v5874 = vadd.f32 %v5480, %v5866
    %v5875 = vadd.f32 %v5481, %v5868
    %v5876 = vadd.f32 %v5482, %v5870
    %s5877 = sld [smem:[#allocation2 + $0xeb]]
    %v5878 = vstv %s5877
    %v5879 = vmul.f32 %v5878, %v413
    %v5880 = vmul.f32 %v5878, %v418
    %v5881 = vmul.f32 %v5878, %v423
    %v5882 = vmul.f32 %v5878, %v428
    %v5887 = vrot.slane %v5879, 2
    %v5888 = vrot.slane %v5880, 2
    %v5889 = vsel %vm2276, %v5887, %v5888
    %v5890 = vrot.slane %v5881, 2
    %v5891 = vsel %vm2276, %v5888, %v5890
    %v5892 = vrot.slane %v5882, 2
    %v5893 = vsel %vm2276, %v5890, %v5892
    %5894 = vrot.lane.b32.xlu0 %v5889, 127
    %v5895 = vpop.permute.xlu0 %5894
    %5896 = vrot.lane.b32.xlu0 %v5891, 127
    %v5897 = vpop.permute.xlu0 %5896
    %5898 = vrot.lane.b32.xlu0 %v5893, 127
    %v5899 = vpop.permute.xlu0 %5898
    %v5903 = vadd.f32 %v5503, %v5895
    %v5904 = vadd.f32 %v5504, %v5897
    %v5905 = vadd.f32 %v5505, %v5899
    %s5906 = sld [smem:[#allocation2 + $0xf4]]
    %v5907 = vstv %s5906
    %v5908 = vmul.f32 %v5907, %v413
    %v5909 = vmul.f32 %v5907, %v418
    %v5910 = vmul.f32 %v5907, %v423
    %v5911 = vmul.f32 %v5907, %v428
    %v5916 = vrot.slane %v5908, 2
    %v5917 = vrot.slane %v5909, 2
    %v5918 = vsel %vm2276, %v5916, %v5917
    %v5919 = vrot.slane %v5910, 2
    %v5920 = vsel %vm2276, %v5917, %v5919
    %v5921 = vrot.slane %v5911, 2
    %v5922 = vsel %vm2276, %v5919, %v5921
    %5923 = vrot.lane.b32.xlu0 %v5918, 127
    %v5924 = vpop.permute.xlu0 %5923
    %5925 = vrot.lane.b32.xlu0 %v5920, 127
    %v5926 = vpop.permute.xlu0 %5925
    %5927 = vrot.lane.b32.xlu0 %v5922, 127
    %v5928 = vpop.permute.xlu0 %5927
    %v5932 = vadd.f32 %v5526, %v5924
    %v5933 = vadd.f32 %v5527, %v5926
    %v5934 = vadd.f32 %v5528, %v5928
    %s5935 = sld [smem:[#allocation2 + $0x7e]]
    %v5936 = vstv %s5935
    %v5937 = vmul.f32 %v5936, %v413
    %v5938 = vmul.f32 %v5936, %v418
    %v5939 = vmul.f32 %v5936, %v423
    %v5940 = vmul.f32 %v5936, %v428
    %v5945 = vrot.slane %v5937, 2
    %v5946 = vrot.slane %v5938, 2
    %v5947 = vsel %vm2276, %v5945, %v5946
    %v5948 = vrot.slane %v5939, 2
    %v5949 = vsel %vm2276, %v5946, %v5948
    %v5950 = vrot.slane %v5940, 2
    %v5951 = vsel %vm2276, %v5948, %v5950
    %5952 = vrot.lane.b32.xlu0 %v5947, 126
    %v5953 = vpop.permute.xlu0 %5952
    %5954 = vrot.lane.b32.xlu0 %v5949, 126
    %v5955 = vpop.permute.xlu0 %5954
    %5956 = vrot.lane.b32.xlu0 %v5951, 126
    %v5957 = vpop.permute.xlu0 %5956
    %v5961 = vadd.f32 %v5555, %v5953
    %v5962 = vadd.f32 %v5556, %v5955
    %v5963 = vadd.f32 %v5557, %v5957
    %s5964 = sld [smem:[#allocation2 + $0x87]]
    %v5965 = vstv %s5964
    %v5966 = vmul.f32 %v5965, %v413
    %v5967 = vmul.f32 %v5965, %v418
    %v5968 = vmul.f32 %v5965, %v423
    %v5969 = vmul.f32 %v5965, %v428
    %v5974 = vrot.slane %v5966, 2
    %v5975 = vrot.slane %v5967, 2
    %v5976 = vsel %vm2276, %v5974, %v5975
    %v5977 = vrot.slane %v5968, 2
    %v5978 = vsel %vm2276, %v5975, %v5977
    %v5979 = vrot.slane %v5969, 2
    %v5980 = vsel %vm2276, %v5977, %v5979
    %5981 = vrot.lane.b32.xlu0 %v5976, 126
    %v5982 = vpop.permute.xlu0 %5981
    %5983 = vrot.lane.b32.xlu0 %v5978, 126
    %v5984 = vpop.permute.xlu0 %5983
    %5985 = vrot.lane.b32.xlu0 %v5980, 126
    %v5986 = vpop.permute.xlu0 %5985
    %v5990 = vadd.f32 %v5584, %v5982
    %v5991 = vadd.f32 %v5585, %v5984
    %v5992 = vadd.f32 %v5586, %v5986
    %s5993 = sld [smem:[#allocation2 + $0x90]]
    %v5994 = vstv %s5993
    %v5995 = vmul.f32 %v5994, %v413
    %v5996 = vmul.f32 %v5994, %v418
    %v5997 = vmul.f32 %v5994, %v423
    %v5998 = vmul.f32 %v5994, %v428
    %v6003 = vrot.slane %v5995, 2
    %v6004 = vrot.slane %v5996, 2
    %v6005 = vsel %vm2276, %v6003, %v6004
    %v6006 = vrot.slane %v5997, 2
    %v6007 = vsel %vm2276, %v6004, %v6006
    %v6008 = vrot.slane %v5998, 2
    %v6009 = vsel %vm2276, %v6006, %v6008
    %6010 = vrot.lane.b32.xlu0 %v6005, 126
    %v6011 = vpop.permute.xlu0 %6010
    %6012 = vrot.lane.b32.xlu0 %v6007, 126
    %v6013 = vpop.permute.xlu0 %6012
    %6014 = vrot.lane.b32.xlu0 %v6009, 126
    %v6015 = vpop.permute.xlu0 %6014
    %v6019 = vadd.f32 %v5613, %v6011
    %v6020 = vadd.f32 %v5614, %v6013
    %v6021 = vadd.f32 %v5615, %v6015
    %s6022 = sld [smem:[#allocation2 + $0x99]]
    %v6023 = vstv %s6022
    %v6024 = vmul.f32 %v6023, %v413
    %v6025 = vmul.f32 %v6023, %v418
    %v6026 = vmul.f32 %v6023, %v423
    %v6027 = vmul.f32 %v6023, %v428
    %v6032 = vrot.slane %v6024, 2
    %v6033 = vrot.slane %v6025, 2
    %v6034 = vsel %vm2276, %v6032, %v6033
    %v6035 = vrot.slane %v6026, 2
    %v6036 = vsel %vm2276, %v6033, %v6035
    %v6037 = vrot.slane %v6027, 2
    %v6038 = vsel %vm2276, %v6035, %v6037
    %6039 = vrot.lane.b32.xlu0 %v6034, 126
    %v6040 = vpop.permute.xlu0 %6039
    %6041 = vrot.lane.b32.xlu0 %v6036, 126
    %v6042 = vpop.permute.xlu0 %6041
    %6043 = vrot.lane.b32.xlu0 %v6038, 126
    %v6044 = vpop.permute.xlu0 %6043
    %v6048 = vadd.f32 %v5642, %v6040
    %v6049 = vadd.f32 %v5643, %v6042
    %v6050 = vadd.f32 %v5644, %v6044
    %s6051 = sld [smem:[#allocation2 + $0xa2]]
    %v6052 = vstv %s6051
    %v6053 = vmul.f32 %v6052, %v413
    %v6054 = vmul.f32 %v6052, %v418
    %v6055 = vmul.f32 %v6052, %v423
    %v6056 = vmul.f32 %v6052, %v428
    %v6061 = vrot.slane %v6053, 2
    %v6062 = vrot.slane %v6054, 2
    %v6063 = vsel %vm2276, %v6061, %v6062
    %v6064 = vrot.slane %v6055, 2
    %v6065 = vsel %vm2276, %v6062, %v6064
    %v6066 = vrot.slane %v6056, 2
    %v6067 = vsel %vm2276, %v6064, %v6066
    %6068 = vrot.lane.b32.xlu0 %v6063, 126
    %v6069 = vpop.permute.xlu0 %6068
    %6070 = vrot.lane.b32.xlu0 %v6065, 126
    %v6071 = vpop.permute.xlu0 %6070
    %6072 = vrot.lane.b32.xlu0 %v6067, 126
    %v6073 = vpop.permute.xlu0 %6072
    %v6077 = vadd.f32 %v5671, %v6069
    %v6078 = vadd.f32 %v5672, %v6071
    %v6079 = vadd.f32 %v5673, %v6073
    %s6080 = sld [smem:[#allocation2 + $0xab]]
    %v6081 = vstv %s6080
    %v6082 = vmul.f32 %v6081, %v413
    %v6083 = vmul.f32 %v6081, %v418
    %v6084 = vmul.f32 %v6081, %v423
    %v6085 = vmul.f32 %v6081, %v428
    %v6090 = vrot.slane %v6082, 2
    %v6091 = vrot.slane %v6083, 2
    %v6092 = vsel %vm2276, %v6090, %v6091
    %v6093 = vrot.slane %v6084, 2
    %v6094 = vsel %vm2276, %v6091, %v6093
    %v6095 = vrot.slane %v6085, 2
    %v6096 = vsel %vm2276, %v6093, %v6095
    %6097 = vrot.lane.b32.xlu0 %v6092, 126
    %v6098 = vpop.permute.xlu0 %6097
    %6099 = vrot.lane.b32.xlu0 %v6094, 126
    %v6100 = vpop.permute.xlu0 %6099
    %6101 = vrot.lane.b32.xlu0 %v6096, 126
    %v6102 = vpop.permute.xlu0 %6101
    %v6106 = vadd.f32 %v5700, %v6098
    %v6107 = vadd.f32 %v5701, %v6100
    %v6108 = vadd.f32 %v5702, %v6102
    %s6109 = sld [smem:[#allocation2 + $0xb4]]
    %v6110 = vstv %s6109
    %v6111 = vmul.f32 %v6110, %v413
    %v6112 = vmul.f32 %v6110, %v418
    %v6113 = vmul.f32 %v6110, %v423
    %v6114 = vmul.f32 %v6110, %v428
    %v6119 = vrot.slane %v6111, 2
    %v6120 = vrot.slane %v6112, 2
    %v6121 = vsel %vm2276, %v6119, %v6120
    %v6122 = vrot.slane %v6113, 2
    %v6123 = vsel %vm2276, %v6120, %v6122
    %v6124 = vrot.slane %v6114, 2
    %v6125 = vsel %vm2276, %v6122, %v6124
    %6126 = vrot.lane.b32.xlu0 %v6121, 126
    %v6127 = vpop.permute.xlu0 %6126
    %6128 = vrot.lane.b32.xlu0 %v6123, 126
    %v6129 = vpop.permute.xlu0 %6128
    %6130 = vrot.lane.b32.xlu0 %v6125, 126
    %v6131 = vpop.permute.xlu0 %6130
    %v6135 = vadd.f32 %v5729, %v6127
    %v6136 = vadd.f32 %v5730, %v6129
    %v6137 = vadd.f32 %v5731, %v6131
    %s6138 = sld [smem:[#allocation2 + $0xbd]]
    %v6139 = vstv %s6138
    %v6140 = vmul.f32 %v6139, %v413
    %v6141 = vmul.f32 %v6139, %v418
    %v6142 = vmul.f32 %v6139, %v423
    %v6143 = vmul.f32 %v6139, %v428
    %v6148 = vrot.slane %v6140, 2
    %v6149 = vrot.slane %v6141, 2
    %v6150 = vsel %vm2276, %v6148, %v6149
    %v6151 = vrot.slane %v6142, 2
    %v6152 = vsel %vm2276, %v6149, %v6151
    %v6153 = vrot.slane %v6143, 2
    %v6154 = vsel %vm2276, %v6151, %v6153
    %6155 = vrot.lane.b32.xlu0 %v6150, 126
    %v6156 = vpop.permute.xlu0 %6155
    %6157 = vrot.lane.b32.xlu0 %v6152, 126
    %v6158 = vpop.permute.xlu0 %6157
    %6159 = vrot.lane.b32.xlu0 %v6154, 126
    %v6160 = vpop.permute.xlu0 %6159
    %v6164 = vadd.f32 %v5758, %v6156
    %v6165 = vadd.f32 %v5759, %v6158
    %v6166 = vadd.f32 %v5760, %v6160
    %s6167 = sld [smem:[#allocation2 + $0xc6]]
    %v6168 = vstv %s6167
    %v6169 = vmul.f32 %v6168, %v413
    %v6170 = vmul.f32 %v6168, %v418
    %v6171 = vmul.f32 %v6168, %v423
    %v6172 = vmul.f32 %v6168, %v428
    %v6177 = vrot.slane %v6169, 2
    %v6178 = vrot.slane %v6170, 2
    %v6179 = vsel %vm2276, %v6177, %v6178
    %v6180 = vrot.slane %v6171, 2
    %v6181 = vsel %vm2276, %v6178, %v6180
    %v6182 = vrot.slane %v6172, 2
    %v6183 = vsel %vm2276, %v6180, %v6182
    %6184 = vrot.lane.b32.xlu0 %v6179, 126
    %v6185 = vpop.permute.xlu0 %6184
    %6186 = vrot.lane.b32.xlu0 %v6181, 126
    %v6187 = vpop.permute.xlu0 %6186
    %6188 = vrot.lane.b32.xlu0 %v6183, 126
    %v6189 = vpop.permute.xlu0 %6188
    %v6193 = vadd.f32 %v5787, %v6185
    %v6194 = vadd.f32 %v5788, %v6187
    %v6195 = vadd.f32 %v5789, %v6189
    %s6196 = sld [smem:[#allocation2 + $0xcf]]
    %v6197 = vstv %s6196
    %v6198 = vmul.f32 %v6197, %v413
    %v6199 = vmul.f32 %v6197, %v418
    %v6200 = vmul.f32 %v6197, %v423
    %v6201 = vmul.f32 %v6197, %v428
    %v6206 = vrot.slane %v6198, 2
    %v6207 = vrot.slane %v6199, 2
    %v6208 = vsel %vm2276, %v6206, %v6207
    %v6209 = vrot.slane %v6200, 2
    %v6210 = vsel %vm2276, %v6207, %v6209
    %v6211 = vrot.slane %v6201, 2
    %v6212 = vsel %vm2276, %v6209, %v6211
    %6213 = vrot.lane.b32.xlu0 %v6208, 126
    %v6214 = vpop.permute.xlu0 %6213
    %6215 = vrot.lane.b32.xlu0 %v6210, 126
    %v6216 = vpop.permute.xlu0 %6215
    %6217 = vrot.lane.b32.xlu0 %v6212, 126
    %v6218 = vpop.permute.xlu0 %6217
    %v6222 = vadd.f32 %v5816, %v6214
    %v6223 = vadd.f32 %v5817, %v6216
    %v6224 = vadd.f32 %v5818, %v6218
    %s6225 = sld [smem:[#allocation2 + $0xd8]]
    %v6226 = vstv %s6225
    %v6227 = vmul.f32 %v6226, %v413
    %v6228 = vmul.f32 %v6226, %v418
    %v6229 = vmul.f32 %v6226, %v423
    %v6230 = vmul.f32 %v6226, %v428
    %v6235 = vrot.slane %v6227, 2
    %v6236 = vrot.slane %v6228, 2
    %v6237 = vsel %vm2276, %v6235, %v6236
    %v6238 = vrot.slane %v6229, 2
    %v6239 = vsel %vm2276, %v6236, %v6238
    %v6240 = vrot.slane %v6230, 2
    %v6241 = vsel %vm2276, %v6238, %v6240
    %6242 = vrot.lane.b32.xlu0 %v6237, 126
    %v6243 = vpop.permute.xlu0 %6242
    %6244 = vrot.lane.b32.xlu0 %v6239, 126
    %v6245 = vpop.permute.xlu0 %6244
    %6246 = vrot.lane.b32.xlu0 %v6241, 126
    %v6247 = vpop.permute.xlu0 %6246
    %v6251 = vadd.f32 %v5845, %v6243
    %v6252 = vadd.f32 %v5846, %v6245
    %v6253 = vadd.f32 %v5847, %v6247
    %s6254 = sld [smem:[#allocation2 + $0xe1]]
    %v6255 = vstv %s6254
    %v6256 = vmul.f32 %v6255, %v413
    %v6257 = vmul.f32 %v6255, %v418
    %v6258 = vmul.f32 %v6255, %v423
    %v6259 = vmul.f32 %v6255, %v428
    %v6264 = vrot.slane %v6256, 2
    %v6265 = vrot.slane %v6257, 2
    %v6266 = vsel %vm2276, %v6264, %v6265
    %v6267 = vrot.slane %v6258, 2
    %v6268 = vsel %vm2276, %v6265, %v6267
    %v6269 = vrot.slane %v6259, 2
    %v6270 = vsel %vm2276, %v6267, %v6269
    %6271 = vrot.lane.b32.xlu0 %v6266, 126
    %v6272 = vpop.permute.xlu0 %6271
    %6273 = vrot.lane.b32.xlu0 %v6268, 126
    %v6274 = vpop.permute.xlu0 %6273
    %6275 = vrot.lane.b32.xlu0 %v6270, 126
    %v6276 = vpop.permute.xlu0 %6275
    %v6280 = vadd.f32 %v5874, %v6272
    %v6281 = vadd.f32 %v5875, %v6274
    %v6282 = vadd.f32 %v5876, %v6276
    %s6283 = sld [smem:[#allocation2 + $0xea]]
    %v6284 = vstv %s6283
    %v6285 = vmul.f32 %v6284, %v413
    %v6286 = vmul.f32 %v6284, %v418
    %v6287 = vmul.f32 %v6284, %v423
    %v6288 = vmul.f32 %v6284, %v428
    %v6293 = vrot.slane %v6285, 2
    %v6294 = vrot.slane %v6286, 2
    %v6295 = vsel %vm2276, %v6293, %v6294
    %v6296 = vrot.slane %v6287, 2
    %v6297 = vsel %vm2276, %v6294, %v6296
    %v6298 = vrot.slane %v6288, 2
    %v6299 = vsel %vm2276, %v6296, %v6298
    %6300 = vrot.lane.b32.xlu0 %v6295, 126
    %v6301 = vpop.permute.xlu0 %6300
    %6302 = vrot.lane.b32.xlu0 %v6297, 126
    %v6303 = vpop.permute.xlu0 %6302
    %6304 = vrot.lane.b32.xlu0 %v6299, 126
    %v6305 = vpop.permute.xlu0 %6304
    %v6309 = vadd.f32 %v5903, %v6301
    %v6310 = vadd.f32 %v5904, %v6303
    %v6311 = vadd.f32 %v5905, %v6305
    %s6312 = sld [smem:[#allocation2 + $0xf3]]
    %v6313 = vstv %s6312
    %v6314 = vmul.f32 %v6313, %v413
    %v6315 = vmul.f32 %v6313, %v418
    %v6316 = vmul.f32 %v6313, %v423
    %v6317 = vmul.f32 %v6313, %v428
    %v6322 = vrot.slane %v6314, 2
    %v6323 = vrot.slane %v6315, 2
    %v6324 = vsel %vm2276, %v6322, %v6323
    %v6325 = vrot.slane %v6316, 2
    %v6326 = vsel %vm2276, %v6323, %v6325
    %v6327 = vrot.slane %v6317, 2
    %v6328 = vsel %vm2276, %v6325, %v6327
    %6329 = vrot.lane.b32.xlu0 %v6324, 126
    %v6330 = vpop.permute.xlu0 %6329
    %6331 = vrot.lane.b32.xlu0 %v6326, 126
    %v6332 = vpop.permute.xlu0 %6331
    %6333 = vrot.lane.b32.xlu0 %v6328, 126
    %v6334 = vpop.permute.xlu0 %6333
    %v6338 = vadd.f32 %v5932, %v6330
    %v6339 = vadd.f32 %v5933, %v6332
    %v6340 = vadd.f32 %v5934, %v6334
    %v6341 = vtanh.pop %v5961
    %v6342 = vtanh.pop %v5962
    %v6343 = vtanh.pop %v5963
    %vm6344 = vcmask 195584
    %6345 = vst.msk [vmem:[#allocation7] sm:$0xff] %vm6344, %v6341
    %6346 = vst.msk [vmem:[#allocation7 + $0x8] sm:$0xff] %vm6344, %v6342
    %6347 = vst.msk [vmem:[#allocation7 + $0x10] sm:$0xff] %vm6344, %v6343
    %v6348 = vtanh.pop %v5990
    %v6349 = vtanh.pop %v5991
    %v6350 = vtanh.pop %v5992
    %s6351 = scalar_lea.vmem [#allocation7], 24
    %6352 = vst.msk [vmem:[%s6351] sm:$0xff] %vm6344, %v6348
    %6353 = vst.msk [vmem:[%s6351 + $0x8] sm:$0xff] %vm6344, %v6349
    %6354 = vst.msk [vmem:[%s6351 + $0x10] sm:$0xff] %vm6344, %v6350
    %v6355 = vtanh.pop %v6019
    %v6356 = vtanh.pop %v6020
    %v6357 = vtanh.pop %v6021
    %s6358 = scalar_lea.vmem [#allocation7], 48
    %6359 = vst.msk [vmem:[%s6358] sm:$0xff] %vm6344, %v6355
    %6360 = vst.msk [vmem:[%s6358 + $0x8] sm:$0xff] %vm6344, %v6356
    %6361 = vst.msk [vmem:[%s6358 + $0x10] sm:$0xff] %vm6344, %v6357
    %v6362 = vtanh.pop %v6048
    %v6363 = vtanh.pop %v6049
    %v6364 = vtanh.pop %v6050
    %s6365 = scalar_lea.vmem [#allocation7], 72
    %6366 = vst.msk [vmem:[%s6365] sm:$0xff] %vm6344, %v6362
    %6367 = vst.msk [vmem:[%s6365 + $0x8] sm:$0xff] %vm6344, %v6363
    %6368 = vst.msk [vmem:[%s6365 + $0x10] sm:$0xff] %vm6344, %v6364
    %v6369 = vtanh.pop %v6077
    %v6370 = vtanh.pop %v6078
    %v6371 = vtanh.pop %v6079
    %s6372 = scalar_lea.vmem [#allocation7], 96
    %6373 = vst.msk [vmem:[%s6372] sm:$0xff] %vm6344, %v6369
    %6374 = vst.msk [vmem:[%s6372 + $0x8] sm:$0xff] %vm6344, %v6370
    %6375 = vst.msk [vmem:[%s6372 + $0x10] sm:$0xff] %vm6344, %v6371
    %v6376 = vtanh.pop %v6106
    %v6377 = vtanh.pop %v6107
    %v6378 = vtanh.pop %v6108
    %s6379 = scalar_lea.vmem [#allocation7], 120
    %6380 = vst.msk [vmem:[%s6379] sm:$0xff] %vm6344, %v6376
    %6381 = vst.msk [vmem:[%s6379 + $0x8] sm:$0xff] %vm6344, %v6377
    %6382 = vst.msk [vmem:[%s6379 + $0x10] sm:$0xff] %vm6344, %v6378
    %v6383 = vtanh.pop %v6135
    %v6384 = vtanh.pop %v6136
    %v6385 = vtanh.pop %v6137
    %s6386 = scalar_lea.vmem [#allocation7], 144
    %6387 = vst.msk [vmem:[%s6386] sm:$0xff] %vm6344, %v6383
    %6388 = vst.msk [vmem:[%s6386 + $0x8] sm:$0xff] %vm6344, %v6384
    %6389 = vst.msk [vmem:[%s6386 + $0x10] sm:$0xff] %vm6344, %v6385
    %v6390 = vtanh.pop %v6164
    %v6391 = vtanh.pop %v6165
    %v6392 = vtanh.pop %v6166
    %s6393 = scalar_lea.vmem [#allocation7], 168
    %6394 = vst.msk [vmem:[%s6393] sm:$0xff] %vm6344, %v6390
    %6395 = vst.msk [vmem:[%s6393 + $0x8] sm:$0xff] %vm6344, %v6391
    %6396 = vst.msk [vmem:[%s6393 + $0x10] sm:$0xff] %vm6344, %v6392
    %v6397 = vtanh.pop %v6193
    %v6398 = vtanh.pop %v6194
    %v6399 = vtanh.pop %v6195
    %s6400 = scalar_lea.vmem [#allocation7], 192
    %6401 = vst.msk [vmem:[%s6400] sm:$0xff] %vm6344, %v6397
    %6402 = vst.msk [vmem:[%s6400 + $0x8] sm:$0xff] %vm6344, %v6398
    %6403 = vst.msk [vmem:[%s6400 + $0x10] sm:$0xff] %vm6344, %v6399
    %v6404 = vtanh.pop %v6222
    %v6405 = vtanh.pop %v6223
    %v6406 = vtanh.pop %v6224
    %s6407 = scalar_lea.vmem [#allocation7], 216
    %6408 = vst.msk [vmem:[%s6407] sm:$0xff] %vm6344, %v6404
    %6409 = vst.msk [vmem:[%s6407 + $0x8] sm:$0xff] %vm6344, %v6405
    %6410 = vst.msk [vmem:[%s6407 + $0x10] sm:$0xff] %vm6344, %v6406
    %v6411 = vtanh.pop %v6251
    %v6412 = vtanh.pop %v6252
    %v6413 = vtanh.pop %v6253
    %s6414 = scalar_lea.vmem [#allocation7], 240
    %6415 = vst.msk [vmem:[%s6414] sm:$0xff] %vm6344, %v6411
    %6416 = vst.msk [vmem:[%s6414 + $0x8] sm:$0xff] %vm6344, %v6412
    %6417 = vst.msk [vmem:[%s6414 + $0x10] sm:$0xff] %vm6344, %v6413
    %v6418 = vtanh.pop %v6280
    %v6419 = vtanh.pop %v6281
    %v6420 = vtanh.pop %v6282
    %s6421 = scalar_lea.vmem [#allocation7], 264
    %6422 = vst.msk [vmem:[%s6421] sm:$0xff] %vm6344, %v6418
    %6423 = vst.msk [vmem:[%s6421 + $0x8] sm:$0xff] %vm6344, %v6419
    %6424 = vst.msk [vmem:[%s6421 + $0x10] sm:$0xff] %vm6344, %v6420
    %v6425 = vtanh.pop %v6309
    %v6426 = vtanh.pop %v6310
    %v6427 = vtanh.pop %v6311
    %s6428 = scalar_lea.vmem [#allocation7], 288
    %6429 = vst.msk [vmem:[%s6428] sm:$0xff] %vm6344, %v6425
    %6430 = vst.msk [vmem:[%s6428 + $0x8] sm:$0xff] %vm6344, %v6426
    %6431 = vst.msk [vmem:[%s6428 + $0x10] sm:$0xff] %vm6344, %v6427
    %v6432 = vtanh.pop %v6338
    %v6433 = vtanh.pop %v6339
    %v6434 = vtanh.pop %v6340
    %s6435 = scalar_lea.vmem [#allocation7], 312
    %6436 = vst.msk [vmem:[%s6435] sm:$0xff] %vm6344, %v6432
    %6437 = vst.msk [vmem:[%s6435 + $0x8] sm:$0xff] %vm6344, %v6433
    %6438 = vst.msk [vmem:[%s6435 + $0x10] sm:$0xff] %vm6344, %v6434
    // Predicated region
    $region22: #{conv_transpose_tanh.1} parent=1 // pred_check
      _
    $region23: #{conv_transpose_tanh.1} parent=1 // pred_check_branch
      %6440 = sbr.rel (0) target = $region25
    $region24: #{conv_transpose_tanh.1} parent=1 // pred_region
      %s6442 = ssub.s32 5376, 5376
      %6443 = vsyncadd [#allocation3], %s6442
      %s6444 = sshll.u32 [#allocation7], 4
      %s6445 = int_to_ptr.vmem [resolvable:$true] %s6444
      %6450 = dma.vmem_to_hbm [thread:$0]  %s6445, 5376, %s3, [#allocation3], 128, 128, 8
    $region25: #{conv_transpose_tanh.1} parent=1 // pred_fallthru
      _
    // Predicated region
    $region26: #{conv_transpose_tanh.1} parent=1 // pred_check
      _
    $region27: #{conv_transpose_tanh.1} parent=1 // pred_check_branch
      %6452 = sbr.rel (0) target = $region29
    $region28: #{conv_transpose_tanh.1} parent=1 // pred_region
      %6453 = dma.done [#allocation3], 5376
    $region29: #{conv_transpose_tanh.1} parent=1 // pred_fallthru
      _
    %6454 = vsyncpa [#allocation3], 1
    %6455 = vsyncpa [#allocation4], 1
    %6456 = vsyncpa [#allocation6], 1

</llo_original>
